<compile_context>
chip_gen: v5e
topology: v5e:2x2
jax: 0.10.0
libtpu: 0.0.40
codegen_flags: <defaults>
</compile_context>

<pallas_src>
import functools

import jax
import jax.numpy as jnp
from jax.experimental import pallas as pl
from jax.experimental.pallas import tpu as pltpu


_FALLBACK_BYTES = 32 * 1024            # below this, launch overhead >> work
_TARGET_TILE_BYTES = 4 * 1024 * 1024   # per input buffer (x2 for double-buffering)
_MAX_TILE_BYTES = 8 * 1024 * 1024      # hard cap; above this fall back to XLA


def _se_gap_kernel(x_ref, o_ref, acc_ref, *, T, Tt, inv_t, single_t_step):
    """x_ref: (Bb, Cb, Tt); o_ref: (Bb, Cb); acc_ref: (Bb, Cb) f32 scratch."""
    k = pl.program_id(2)

    x = x_ref[...]
    if x.dtype != jnp.float32:          # trace-time: cast only for non-f32 inputs
        x = x.astype(jnp.float32)

    if T % Tt != 0:                     # trace-time: mask only if a partial tile exists
        j = jax.lax.broadcasted_iota(jnp.int32, x.shape, 2)
        x = jnp.where(k * Tt + j < T, x, 0.0)

    partial = jnp.sum(x, axis=-1)

    if single_t_step:
        # Whole T axis in one tile: write the mean directly, no scratch round-trip.
        o_ref[...] = (partial * inv_t).astype(o_ref.dtype)
        return

    @pl.when(k == 0)
    def _init():
        acc_ref[...] = jnp.zeros_like(acc_ref)

    acc_ref[...] += partial

    @pl.when(k == pl.num_programs(2) - 1)
    def _finalize():
        o_ref[...] = (acc_ref[...] * inv_t).astype(o_ref.dtype)


def _choose_tiles(B, C, T, itemsize):
    """Pick (Bb, Cb, Tt) block sizes that are legal and fit the VMEM budget."""
    target = _TARGET_TILE_BYTES

    # Channel tile: a 128-multiple divisor of C (lane-dense output, legal 2-D
    # out block) or the full C.  Splitting C adds parallel grid steps so both
    # TensorCores get work even when B is tiny.
    if C % 128 == 0 and C // 128 >= 2:
        Cb = 128
        while (Cb * 2 <= C and C % (Cb * 2) == 0 and C // (Cb * 2) >= 2
               and 8 * (Cb * 2) * min(T, 1024) * itemsize <= target):
            Cb *= 2
    else:
        Cb = C

    # Batch tile: a multiple of 8 (out-block sublane legality) or the full B,
    # grown while the tile stays in budget to amortize per-grid-step overhead.
    if B % 8 == 0 and B > 8:
        Bb = 8
        while (Bb * 2 <= B and B % (Bb * 2) == 0
               and (Bb * 2) * Cb * min(T, 1024) * itemsize <= target):
            Bb *= 2
    else:
        Bb = B

    # Time tile: a multiple of 128 (lane-dense reduction) or the full axis.
    row_bytes = Bb * Cb * itemsize
    if T <= 128 or T * row_bytes <= target:
        Tt = T
    else:
        Tt = (target // row_bytes) // 128 * 128
        Tt = max(128, min(Tt, (T // 128) * 128))
    return Bb, Cb, Tt


def se_block_forward(x):
    """Global average pool over time. x: (B, C, T) -> (B, C)."""
    B, C, T = x.shape
    itemsize = jnp.dtype(x.dtype).itemsize

    if B * C * T * itemsize <= _FALLBACK_BYTES:
        # Whole input is ~a vreg or two; a Pallas launch costs more than the work.
        return jnp.mean(x.astype(jnp.float32), axis=-1).astype(x.dtype)

    Bb, Cb, Tt = _choose_tiles(B, C, T, itemsize)
    if Bb * Cb * Tt * itemsize > _MAX_TILE_BYTES:
        # Shape has no legal tiling that fits VMEM (e.g. huge prime B*C);
        # let XLA handle it rather than risk a VMEM OOM.
        return jnp.mean(x.astype(jnp.float32), axis=-1).astype(x.dtype)

    n_t = pl.cdiv(T, Tt)
    grid = (B // Bb, C // Cb, n_t)

    kernel = functools.partial(
        _se_gap_kernel, T=T, Tt=Tt, inv_t=float(1.0 / T), single_t_step=(n_t == 1))

    return pl.pallas_call(
        kernel,
        out_shape=jax.ShapeDtypeStruct((B, C), x.dtype),
        grid_spec=pltpu.PrefetchScalarGridSpec(
            num_scalar_prefetch=0,
            grid=grid,
            in_specs=[pl.BlockSpec((Bb, Cb, Tt), lambda b, c, k: (b, c, k))],
            out_specs=pl.BlockSpec((Bb, Cb), lambda b, c, k: (b, c)),
            scratch_shapes=[pltpu.VMEM((Bb, Cb), jnp.float32)],
        ),
        compiler_params=pltpu.CompilerParams(
            dimension_semantics=("parallel", "parallel", "arbitrary"),
            vmem_limit_bytes=32 * 1024 * 1024,
        ),
    )(x)


def init_se_block_params(key, inchannel, ratio=16):
    """fc weights from __init__ (unused by forward(), kept for shape parity)."""
    hidden = inchannel // ratio
    k1, k2 = jax.random.split(key)
    w1 = jax.random.normal(k1, (hidden, inchannel), jnp.float32) * 0.02
    w2 = jax.random.normal(k2, (inchannel, hidden), jnp.float32) * 0.02
    return {"fc1_w": w1, "fc2_w": w2}


if __name__ == "__main__":
    key = jax.random.PRNGKey(0)
    k1, k2, k3, kp = jax.random.split(key, 4)

    # Parameters exist per __init__ but are not used in forward().
    params = init_se_block_params(kp, 32, ratio=16)

    # 1) Module-default-sized input (inchannel=32): tiny -> fallback path.
    x_small = jax.random.normal(k1, (2, 32, 16), jnp.float32)
    y_small = jax.block_until_ready(se_block_forward(x_small))
    assert y_small.shape == (2, 32)
    assert jnp.allclose(y_small, jnp.mean(x_small, axis=-1), atol=1e-5, rtol=1e-5)

    # 2) Pallas path: 2 parallel C-steps, multi-step T reduction with a partial
    #    (masked) last tile and the resident f32 accumulator.
    x_f32 = jax.random.normal(k2, (4, 256, 2112), jnp.float32)
    y_f32 = jax.block_until_ready(se_block_forward(x_f32))
    assert y_f32.shape == (4, 256)
    assert jnp.allclose(y_f32, jnp.mean(x_f32, axis=-1), atol=1e-5, rtol=1e-5)

    # 3) Pallas path, bf16 input with f32 accumulation (single T step -> direct write).
    x_bf16 = jax.random.normal(k3, (4, 256, 1024), jnp.float32).astype(jnp.bfloat16)
    y_bf16 = jax.block_until_ready(se_block_forward(x_bf16))
    ref_bf16 = jnp.mean(x_bf16.astype(jnp.float32), axis=-1).astype(jnp.bfloat16)
    assert y_bf16.shape == (4, 256)
    assert jnp.allclose(y_bf16.astype(jnp.float32), ref_bf16.astype(jnp.float32),
                        atol=1e-2, rtol=1e-2)

    print("KERNEL_OK")
</pallas_src>

<mosaic_0001>
module attributes {stable_mosaic.version = 11 : i64} {
  func.func @_se_gap_kernel(%arg0: i32, %arg1: i32, %arg2: i32, %arg3: memref<4x128x2048xf32, #tpu.memory_space<vmem>>, %arg4: memref<4x128xf32, #tpu.memory_space<vmem>>, %arg5: memref<4x128xf32, #tpu.memory_space<vmem>>) attributes {dimension_semantics = [#tpu.dimension_semantics<parallel>, #tpu.dimension_semantics<parallel>, #tpu.dimension_semantics<arbitrary>], iteration_bounds = array<i64: 1, 2, 2>, scalar_prefetch = 0 : i64, scratch_operands = 1 : i64, tpu.core_type = #tpu.core_type<tc>, window_params = [{transform_indices = @transform_0, window_bounds = array<i64: 4, 128, 2048>}, {transform_indices = @transform_1, window_bounds = array<i64: 4, 128>}]} {
    %c0 = arith.constant 0 : index
    %c0_0 = arith.constant 0 : index
    %c0_1 = arith.constant 0 : index
    %0 = vector.load %arg3[%c0, %c0_0, %c0_1] : memref<4x128x2048xf32, #tpu.memory_space<vmem>>, vector<4x128x2048xf32>
    %1 = tpu.iota {dimensions = array<i32: 2>} : vector<4x128x2048xi32>
    %c2048_i32 = arith.constant 2048 : i32
    %2 = arith.muli %arg2, %c2048_i32 : i32
    %3 = vector.broadcast %2 : i32 to vector<4x128x2048xi32>
    %4 = arith.addi %3, %1 : vector<4x128x2048xi32>
    %c2112_i32 = arith.constant 2112 : i32
    %5 = vector.broadcast %c2112_i32 : i32 to vector<4x128x2048xi32>
    %6 = arith.cmpi slt, %4, %5 : vector<4x128x2048xi32>
    %cst = arith.constant 0.000000e+00 : f32
    %7 = vector.broadcast %cst : f32 to vector<4x128x2048xf32>
    %8 = arith.select %6, %0, %7 : vector<4x128x2048xi1>, vector<4x128x2048xf32>
    %cst_2 = arith.constant dense<0.000000e+00> : vector<4x128xf32>
    %9 = vector.multi_reduction <add>, %8, %cst_2 [2] : vector<4x128x2048xf32> to vector<4x128xf32>
    %c0_i32 = arith.constant 0 : i32
    %10 = arith.cmpi eq, %arg2, %c0_i32 : i32
    %11 = arith.extui %10 : i1 to i32
    %c0_i32_3 = arith.constant 0 : i32
    %12 = arith.cmpi ne, %11, %c0_i32_3 : i32
    scf.if %12 {
      %cst_9 = arith.constant 0.000000e+00 : f32
      %19 = vector.broadcast %cst_9 : f32 to vector<4x128xf32>
      %c0_10 = arith.constant 0 : index
      %c0_11 = arith.constant 0 : index
      %20 = vector.load %arg5[%c0_10, %c0_11] : memref<4x128xf32, #tpu.memory_space<vmem>>, vector<4x128xf32>
      tpu.vector_store %arg5[%c0_10, %c0_11], %19 {strides = array<i32>} : memref<4x128xf32, #tpu.memory_space<vmem>>, vector<4x128xf32>,
    } else {
    }
    %c0_4 = arith.constant 0 : index
    %c0_5 = arith.constant 0 : index
    %13 = vector.load %arg5[%c0_4, %c0_5] : memref<4x128xf32, #tpu.memory_space<vmem>>, vector<4x128xf32>
    %14 = arith.addf %13, %9 : vector<4x128xf32>
    %c0_6 = arith.constant 0 : index
    %c0_7 = arith.constant 0 : index
    %15 = vector.load %arg5[%c0_6, %c0_7] : memref<4x128xf32, #tpu.memory_space<vmem>>, vector<4x128xf32>
    tpu.vector_store %arg5[%c0_6, %c0_7], %14 {strides = array<i32>} : memref<4x128xf32, #tpu.memory_space<vmem>>, vector<4x128xf32>,
    %c1_i32 = arith.constant 1 : i32
    %16 = arith.cmpi eq, %arg2, %c1_i32 : i32
    %17 = arith.extui %16 : i1 to i32
    %c0_i32_8 = arith.constant 0 : i32
    %18 = arith.cmpi ne, %17, %c0_i32_8 : i32
    scf.if %18 {
      %c0_9 = arith.constant 0 : index
      %c0_10 = arith.constant 0 : index
      %19 = vector.load %arg5[%c0_9, %c0_10] : memref<4x128xf32, #tpu.memory_space<vmem>>, vector<4x128xf32>
      %cst_11 = arith.constant 4.73484863E-4 : f32
      %20 = vector.broadcast %cst_11 : f32 to vector<4x128xf32>
      %21 = arith.mulf %19, %20 : vector<4x128xf32>
      %c0_12 = arith.constant 0 : index
      %c0_13 = arith.constant 0 : index
      %22 = vector.load %arg4[%c0_12, %c0_13] : memref<4x128xf32, #tpu.memory_space<vmem>>, vector<4x128xf32>
      tpu.vector_store %arg4[%c0_12, %c0_13], %21 {strides = array<i32>} : memref<4x128xf32, #tpu.memory_space<vmem>>, vector<4x128xf32>,
    } else {
    }
    return
  }
  func.func @transform_0(%arg0: i32, %arg1: i32, %arg2: i32) -> (i32, i32, i32) {
    %c0_i32 = arith.constant 0 : i32
    return %arg0, %arg1, %arg2 : i32, i32, i32
  }
  func.func @transform_1(%arg0: i32, %arg1: i32, %arg2: i32) -> (i32, i32) {
    %c0_i32 = arith.constant 0 : i32
    return %arg0, %arg1 : i32, i32
  }
}

</mosaic_0001>

<llo_original>
// kernel: tpu_custom_call.1
$region0: #{tpu_custom_call.1}
  #allocation0 [shape = 'u32[]', space=smem, size = 0x4, offset = 0x4, fixed_abs, tag = 'smem constant byte address 0x4 - core index']
  #allocation1 [shape = 'u32[72,128]{1,0:T(1,128)}', space=vmem, size = 0x9000, scoped, tag = 'internal scratch']
  #allocation2 [shape = 'f32[4,128]{1,0:T(4,128)}', space=vmem, size = 0x800, scoped, tag = 'scratch operand']
  %s0 = inlined_call_operand.vmem [shape: f32[4,256,2112], index: 0, kind: input, shape index: {}]
  %s1 = inlined_call_operand.hbm [shape: f32[4,256], index: 1, kind: output, shape index: {}]
  %s2 = sld [smem:[#allocation0]]
  $region97: #{tpu_custom_call.1} parent=0
    _
  %s4 = ssub.s32 1, %s2
  %s5 = scalar_select 0, %s4, %s2
  $region1: #{tpu_custom_call.1} parent=0
    #allocation3 [shape = 'u8[8388608]{0}', space=vmem, size = 0x800000, scoped, tag = 'input window, operand 0']
    #allocation4 [shape = 'u8[4096]{0}', space=vmem, size = 0x1000, scoped, tag = 'output window, operand 0']
    #allocation5 [shape = 's32[2]{0}', space=sflag, size = 0x8, scoped, tag = 'scoped memory for tpu_custom_call.1']
    %6 = vsyncpa [#allocation5], 0
    %s7 = scalar_lea.sflag [#allocation5], 1
    %8 = vsyncpa %s7, 0
    loop: start=0, step=1, limit=6
    $region2: #{tpu_custom_call.1} parent=1 // loop_pre_header
      _
    $region3: #{tpu_custom_call.1} parent=1 // loop_header
      %s10 = sphi 0, %s14
      %p11 = scmp.ge.s32.totalorder %s10, 6
      %s17 = sphi 0, %s36
      %s18 = sphi 0, %s32
      %s19 = sphi 0, %s28
      %s20 = sphi 0, %s17
      %s21 = sphi 0, %s18
      %s22 = sphi 0, %s19
      %s23 = sphi 0, %s20
      %s24 = sphi 0, %s21
      %s25 = sphi 0, %s22
      %s43 = sphi 0, %s45
      %s46 = sphi 0, %s43
      %s47 = sphi 0, %s46
      %s63 = sphi 0, %s47
      %s71 = sphi 0, %s73
      %s74 = sphi 0, %s71
      %s75 = sphi 0, %s74
      %s91 = sphi 0, %s75
    $region4: #{tpu_custom_call.1} parent=1 // loop_header_branch
      %13 = sbr.rel (%p11) target = $region8
    $region5: #{tpu_custom_call.1} parent=1 // loop_body
      %s15 = ssub.s32 %s10, 1
      %s16 = ssub.s32 %s10, 2
      %s26 = sadd.s32 1, %s19
      %p27 = scmp.ge.s32.totalorder %s26, 2
      %s28 = scalar_select %p27, 0, %s26
      %s29 = sadd.s32 1, %s18
      %s30 = scalar_select %p27, %s29, %s18
      %p31 = scmp.ge.s32.totalorder %s30, 2
      %s32 = scalar_select %p31, 0, %s30
      %s33 = sadd.s32 1, %s17
      %s34 = scalar_select %p31, %s33, %s17
      %p35 = scmp.ge.s32.totalorder %s34, 1
      %s36 = scalar_select %p35, 0, %s34
      %s37 = ssub.s32 %s17, %s36
      %s38 = ssub.s32 %s18, %s32
      %s39 = sor.u32 %s37, %s38
      %s40 = ssub.s32 %s19, %s28
      %s41 = sor.u32 %s39, %s40
      %p42 = scmp.eq.s32.totalorder %s41, 0
      %s44 = sadd.s32 %s43, 1
      %s45 = scalar_select %p42, %s43, %s44
      %p48 = pneg %p42
      %p49 = scmp.eq.s32.totalorder %s10, 3
      %p50 = por %p48, %p49
      %p51 = scmp.ne.s32.totalorder %s43, %s46
      %p52 = scmp.eq.s32.totalorder %s10, 0
      %p53 = por %p51, %p52
      %p54 = scmp.ne.s32.totalorder %s43, %s46
      %p55 = scmp.eq.s32.totalorder %s15, 3
      %p56 = por %p54, %p55
      %p57 = scmp.ne.s32.totalorder %s46, %s47
      %p58 = scmp.eq.s32.totalorder %s15, 0
      %p59 = por %p57, %p58
      %p60 = scmp.ne.s32.totalorder %s46, %s47
      %p61 = scmp.eq.s32.totalorder %s16, 3
      %p62 = por %p60, %p61
      %p64 = scmp.ne.s32.totalorder %s47, %s63
      %p65 = scmp.eq.s32.totalorder %s16, 0
      %p66 = por %p64, %p65
      %s67 = ssub.s32 %s17, %s36
      %s68 = ssub.s32 %s18, %s32
      %s69 = sor.u32 %s67, %s68
      %p70 = scmp.eq.s32.totalorder %s69, 0
      %s72 = sadd.s32 %s71, 1
      %s73 = scalar_select %p70, %s71, %s72
      %p76 = pneg %p70
      %p77 = scmp.eq.s32.totalorder %s10, 3
      %p78 = por %p76, %p77
      %p79 = scmp.ne.s32.totalorder %s71, %s74
      %p80 = scmp.eq.s32.totalorder %s10, 0
      %p81 = por %p79, %p80
      %p82 = scmp.ne.s32.totalorder %s71, %s74
      %p83 = scmp.eq.s32.totalorder %s15, 3
      %p84 = por %p82, %p83
      %p85 = scmp.ne.s32.totalorder %s74, %s75
      %p86 = scmp.eq.s32.totalorder %s15, 0
      %p87 = por %p85, %p86
      %p88 = scmp.ne.s32.totalorder %s74, %s75
      %p89 = scmp.eq.s32.totalorder %s16, 3
      %p90 = por %p88, %p89
      %p92 = scmp.ne.s32.totalorder %s75, %s91
      %p93 = scmp.eq.s32.totalorder %s16, 0
      %p94 = por %p92, %p93
      %p95 = scmp.le.s32.totalorder 1, %s10
      %p96 = scmp.lt.s32.totalorder %s10, 5
      %p97 = pnand %p95, %p96
      %p98 = pneg %p97
      // Predicated region
      $region9: #{tpu_custom_call.1} parent=5 // pred_check
        _
      $region10: #{tpu_custom_call.1} parent=5 // pred_check_branch
        %100 = sbr.rel (%p97) target = $region12
      $region11: #{tpu_custom_call.1} parent=5 // pred_region
        %s101 = ssub.s32 %s10, 1
      $region12: #{tpu_custom_call.1} parent=5 // pred_fallthru
        _
      %p102 = scmp.lt.s32.totalorder %s10, 4
      // Predicated region
      $region13: #{tpu_custom_call.1} parent=5 // pred_check
        %p103 = pneg %p102
      $region14: #{tpu_custom_call.1} parent=5 // pred_check_branch
        %105 = sbr.rel (%p103) target = $region16
      $region15: #{tpu_custom_call.1} parent=5 // pred_region
        // Predicated region
        $region17: #{tpu_custom_call.1} parent=15 // pred_check
          %p106 = pneg %p53
        $region18: #{tpu_custom_call.1} parent=15 // pred_check_branch
          %108 = sbr.rel (%p106) target = $region20
        $region19: #{tpu_custom_call.1} parent=15 // pred_region
          %s109 = sand.u32 %s43, 1
          %s110 = sand.u32 %s43, 1
          %s111 = smul.addr %s110, 8192
          %s112 = scalar_lea.vmem [#allocation3], %s111
          %s113 = smul.u32 4, %s17
          %s114 = smul.u32 16, %s18
          %s115 = smul.u32 16, %s19
          %s116 = ssub.s32 17, %s115
          %p117 = scmp.lt.s32.totalorder %s116, 16
          %s118 = scalar_select %p117, %s116, 16
          %s119 = smul.u32 512, %s118
          %p120 = scmp.ne.s32.totalorder 0, %s119
          %s121 = smul.addr %s114, 17
          %s122 = sadd.s32 %s115, %s121
          %s123 = smul.addr %s113, 544
          %s124 = sadd.s32 %s122, %s123
          %s125 = smul.addr %s124, 8
          %s126 = scalar_lea.vmem %s0, %s125
          %s127 = smul.u32 %s118, 8
          // Predicated region
          $region21: #{tpu_custom_call.1} parent=19 // pred_check
            %p128 = pneg %p120
          $region22: #{tpu_custom_call.1} parent=19 // pred_check_branch
            %130 = sbr.rel (%p128) target = $region24
          $region23: #{tpu_custom_call.1} parent=19 // pred_region
            %p131 = scmp.lt.u32.totalorder %s127, 8
            %p132 = pneg %p131
            // Predicated region
            $region25: #{tpu_custom_call.1} parent=23 // pred_check
              _
            $region26: #{tpu_custom_call.1} parent=23 // pred_check_branch
              %134 = sbr.rel (%p131) target = $region28
            $region27: #{tpu_custom_call.1} parent=23 // pred_region
              %s276 = sand.u32 %s127, 7
              %p277 = scmp.eq.s32.totalorder %s276, 0
              // Predicated region
              $region40: #{tpu_custom_call.1} parent=27 // pred_check
                %p278 = pneg %p277
              $region41: #{tpu_custom_call.1} parent=27 // pred_check_branch
                %280 = sbr.rel (%p278) target = $region43
              $region42: #{tpu_custom_call.1} parent=27 // pred_region
                %s281 = sshrl.u32 %s127, 3
                // While loop
                $region44: #{tpu_custom_call.1} parent=42 // loop_pre_header
                  _
                $region45: #{tpu_custom_call.1} parent=42 // loop_header
                  %s283 = sphi 0, %s285
                  %p284 = scmp.ge.s32.totalorder %s283, %s281
                  %s288 = sphi 0, %s421
                  %s289 = sphi %s126, %s424
                  %s290 = sphi %s112, %s425
                $region46: #{tpu_custom_call.1} parent=42 // loop_header_branch
                  %287 = sbr.rel (%p284) target = $region50
                $region47: #{tpu_custom_call.1} parent=42 // loop_body
                  %v291 = vld [vmem:[%s289] sm:$0xff]
                  %292 = vst [vmem:[%s290] sm:$0xff] %v291
                  %v293 = vld [vmem:[%s289 + $0x88] sm:$0xff]
                  %294 = vst [vmem:[%s290 + $0x80] sm:$0xff] %v293
                  %v295 = vld [vmem:[%s289 + $0x110] sm:$0xff]
                  %296 = vst [vmem:[%s290 + $0x100] sm:$0xff] %v295
                  %v297 = vld [vmem:[%s289 + $0x198] sm:$0xff]
                  %298 = vst [vmem:[%s290 + $0x180] sm:$0xff] %v297
                  %v299 = vld [vmem:[%s289 + $0x220] sm:$0xff]
                  %300 = vst [vmem:[%s290 + $0x200] sm:$0xff] %v299
                  %v301 = vld [vmem:[%s289 + $0x2a8] sm:$0xff]
                  %302 = vst [vmem:[%s290 + $0x280] sm:$0xff] %v301
                  %v303 = vld [vmem:[%s289 + $0x330] sm:$0xff]
                  %304 = vst [vmem:[%s290 + $0x300] sm:$0xff] %v303
                  %v305 = vld [vmem:[%s289 + $0x3b8] sm:$0xff]
                  %306 = vst [vmem:[%s290 + $0x380] sm:$0xff] %v305
                  %v307 = vld [vmem:[%s289 + $0x440] sm:$0xff]
                  %308 = vst [vmem:[%s290 + $0x400] sm:$0xff] %v307
                  %v309 = vld [vmem:[%s289 + $0x4c8] sm:$0xff]
                  %310 = vst [vmem:[%s290 + $0x480] sm:$0xff] %v309
                  %v311 = vld [vmem:[%s289 + $0x550] sm:$0xff]
                  %312 = vst [vmem:[%s290 + $0x500] sm:$0xff] %v311
                  %v313 = vld [vmem:[%s289 + $0x5d8] sm:$0xff]
                  %314 = vst [vmem:[%s290 + $0x580] sm:$0xff] %v313
                  %v315 = vld [vmem:[%s289 + $0x660] sm:$0xff]
                  %316 = vst [vmem:[%s290 + $0x600] sm:$0xff] %v315
                  %v317 = vld [vmem:[%s289 + $0x6e8] sm:$0xff]
                  %318 = vst [vmem:[%s290 + $0x680] sm:$0xff] %v317
                  %v319 = vld [vmem:[%s289 + $0x770] sm:$0xff]
                  %320 = vst [vmem:[%s290 + $0x700] sm:$0xff] %v319
                  %v321 = vld [vmem:[%s289 + $0x7f8] sm:$0xff]
                  %322 = vst [vmem:[%s290 + $0x780] sm:$0xff] %v321
                  %v323 = vld [vmem:[%s289 + $0x1100] sm:$0xff]
                  %324 = vst [vmem:[%s290 + $0x800] sm:$0xff] %v323
                  %v325 = vld [vmem:[%s289 + $0x1188] sm:$0xff]
                  %326 = vst [vmem:[%s290 + $0x880] sm:$0xff] %v325
                  %v327 = vld [vmem:[%s289 + $0x1210] sm:$0xff]
                  %328 = vst [vmem:[%s290 + $0x900] sm:$0xff] %v327
                  %v329 = vld [vmem:[%s289 + $0x1298] sm:$0xff]
                  %330 = vst [vmem:[%s290 + $0x980] sm:$0xff] %v329
                  %v331 = vld [vmem:[%s289 + $0x1320] sm:$0xff]
                  %332 = vst [vmem:[%s290 + $0xa00] sm:$0xff] %v331
                  %v333 = vld [vmem:[%s289 + $0x13a8] sm:$0xff]
                  %334 = vst [vmem:[%s290 + $0xa80] sm:$0xff] %v333
                  %v335 = vld [vmem:[%s289 + $0x1430] sm:$0xff]
                  %336 = vst [vmem:[%s290 + $0xb00] sm:$0xff] %v335
                  %v337 = vld [vmem:[%s289 + $0x14b8] sm:$0xff]
                  %338 = vst [vmem:[%s290 + $0xb80] sm:$0xff] %v337
                  %v339 = vld [vmem:[%s289 + $0x1540] sm:$0xff]
                  %340 = vst [vmem:[%s290 + $0xc00] sm:$0xff] %v339
                  %v341 = vld [vmem:[%s289 + $0x15c8] sm:$0xff]
                  %342 = vst [vmem:[%s290 + $0xc80] sm:$0xff] %v341
                  %v343 = vld [vmem:[%s289 + $0x1650] sm:$0xff]
                  %344 = vst [vmem:[%s290 + $0xd00] sm:$0xff] %v343
                  %v345 = vld [vmem:[%s289 + $0x16d8] sm:$0xff]
                  %346 = vst [vmem:[%s290 + $0xd80] sm:$0xff] %v345
                  %v347 = vld [vmem:[%s289 + $0x1760] sm:$0xff]
                  %348 = vst [vmem:[%s290 + $0xe00] sm:$0xff] %v347
                  %v349 = vld [vmem:[%s289 + $0x17e8] sm:$0xff]
                  %350 = vst [vmem:[%s290 + $0xe80] sm:$0xff] %v349
                  %v351 = vld [vmem:[%s289 + $0x1870] sm:$0xff]
                  %352 = vst [vmem:[%s290 + $0xf00] sm:$0xff] %v351
                  %v353 = vld [vmem:[%s289 + $0x18f8] sm:$0xff]
                  %354 = vst [vmem:[%s290 + $0xf80] sm:$0xff] %v353
                  %v355 = vld [vmem:[%s289 + $0x2200] sm:$0xff]
                  %356 = vst [vmem:[%s290 + $0x1000] sm:$0xff] %v355
                  %v357 = vld [vmem:[%s289 + $0x2288] sm:$0xff]
                  %358 = vst [vmem:[%s290 + $0x1080] sm:$0xff] %v357
                  %v359 = vld [vmem:[%s289 + $0x2310] sm:$0xff]
                  %360 = vst [vmem:[%s290 + $0x1100] sm:$0xff] %v359
                  %v361 = vld [vmem:[%s289 + $0x2398] sm:$0xff]
                  %362 = vst [vmem:[%s290 + $0x1180] sm:$0xff] %v361
                  %v363 = vld [vmem:[%s289 + $0x2420] sm:$0xff]
                  %364 = vst [vmem:[%s290 + $0x1200] sm:$0xff] %v363
                  %v365 = vld [vmem:[%s289 + $0x24a8] sm:$0xff]
                  %366 = vst [vmem:[%s290 + $0x1280] sm:$0xff] %v365
                  %v367 = vld [vmem:[%s289 + $0x2530] sm:$0xff]
                  %368 = vst [vmem:[%s290 + $0x1300] sm:$0xff] %v367
                  %v369 = vld [vmem:[%s289 + $0x25b8] sm:$0xff]
                  %370 = vst [vmem:[%s290 + $0x1380] sm:$0xff] %v369
                  %v371 = vld [vmem:[%s289 + $0x2640] sm:$0xff]
                  %372 = vst [vmem:[%s290 + $0x1400] sm:$0xff] %v371
                  %v373 = vld [vmem:[%s289 + $0x26c8] sm:$0xff]
                  %374 = vst [vmem:[%s290 + $0x1480] sm:$0xff] %v373
                  %v375 = vld [vmem:[%s289 + $0x2750] sm:$0xff]
                  %376 = vst [vmem:[%s290 + $0x1500] sm:$0xff] %v375
                  %v377 = vld [vmem:[%s289 + $0x27d8] sm:$0xff]
                  %378 = vst [vmem:[%s290 + $0x1580] sm:$0xff] %v377
                  %v379 = vld [vmem:[%s289 + $0x2860] sm:$0xff]
                  %380 = vst [vmem:[%s290 + $0x1600] sm:$0xff] %v379
                  %v381 = vld [vmem:[%s289 + $0x28e8] sm:$0xff]
                  %382 = vst [vmem:[%s290 + $0x1680] sm:$0xff] %v381
                  %v383 = vld [vmem:[%s289 + $0x2970] sm:$0xff]
                  %384 = vst [vmem:[%s290 + $0x1700] sm:$0xff] %v383
                  %v385 = vld [vmem:[%s289 + $0x29f8] sm:$0xff]
                  %386 = vst [vmem:[%s290 + $0x1780] sm:$0xff] %v385
                  %v387 = vld [vmem:[%s289 + $0x3300] sm:$0xff]
                  %388 = vst [vmem:[%s290 + $0x1800] sm:$0xff] %v387
                  %v389 = vld [vmem:[%s289 + $0x3388] sm:$0xff]
                  %390 = vst [vmem:[%s290 + $0x1880] sm:$0xff] %v389
                  %v391 = vld [vmem:[%s289 + $0x3410] sm:$0xff]
                  %392 = vst [vmem:[%s290 + $0x1900] sm:$0xff] %v391
                  %v393 = vld [vmem:[%s289 + $0x3498] sm:$0xff]
                  %394 = vst [vmem:[%s290 + $0x1980] sm:$0xff] %v393
                  %v395 = vld [vmem:[%s289 + $0x3520] sm:$0xff]
                  %396 = vst [vmem:[%s290 + $0x1a00] sm:$0xff] %v395
                  %v397 = vld [vmem:[%s289 + $0x35a8] sm:$0xff]
                  %398 = vst [vmem:[%s290 + $0x1a80] sm:$0xff] %v397
                  %v399 = vld [vmem:[%s289 + $0x3630] sm:$0xff]
                  %400 = vst [vmem:[%s290 + $0x1b00] sm:$0xff] %v399
                  %v401 = vld [vmem:[%s289 + $0x36b8] sm:$0xff]
                  %402 = vst [vmem:[%s290 + $0x1b80] sm:$0xff] %v401
                  %v403 = vld [vmem:[%s289 + $0x3740] sm:$0xff]
                  %404 = vst [vmem:[%s290 + $0x1c00] sm:$0xff] %v403
                  %v405 = vld [vmem:[%s289 + $0x37c8] sm:$0xff]
                  %406 = vst [vmem:[%s290 + $0x1c80] sm:$0xff] %v405
                  %v407 = vld [vmem:[%s289 + $0x3850] sm:$0xff]
                  %408 = vst [vmem:[%s290 + $0x1d00] sm:$0xff] %v407
                  %v409 = vld [vmem:[%s289 + $0x38d8] sm:$0xff]
                  %410 = vst [vmem:[%s290 + $0x1d80] sm:$0xff] %v409
                  %v411 = vld [vmem:[%s289 + $0x3960] sm:$0xff]
                  %412 = vst [vmem:[%s290 + $0x1e00] sm:$0xff] %v411
                  %v413 = vld [vmem:[%s289 + $0x39e8] sm:$0xff]
                  %414 = vst [vmem:[%s290 + $0x1e80] sm:$0xff] %v413
                  %v415 = vld [vmem:[%s289 + $0x3a70] sm:$0xff]
                  %416 = vst [vmem:[%s290 + $0x1f00] sm:$0xff] %v415
                  %v417 = vld [vmem:[%s289 + $0x3af8] sm:$0xff]
                  %418 = vst [vmem:[%s290 + $0x1f80] sm:$0xff] %v417
                  %s419 = sadd.s32 1, %s288
                  %p420 = scmp.ge.s32.totalorder %s419, %s281
                  %s421 = scalar_select %p420, 0, %s419
                  %s422 = smul.u32 %s421, 8
                  %s423 = smul.u32 %s421, 8
                  %s424 = scalar_lea.vmem %s126, %s422
                  %s425 = scalar_lea.vmem %s112, %s423 [#allocation3]
                $region48: #{tpu_custom_call.1} parent=42 // loop_footer
                  %s285 = sadd.s32 %s283, 1
                $region49: #{tpu_custom_call.1} parent=42 // loop_footer_branch
                  %282 = sbr.rel target = $region45
                $region50: #{tpu_custom_call.1} parent=42 // loop_exit
                  _
              $region43: #{tpu_custom_call.1} parent=27 // pred_fallthru
                _
              %p426 = pneg %p277
              // Predicated region
              $region51: #{tpu_custom_call.1} parent=27 // pred_check
                _
              $region52: #{tpu_custom_call.1} parent=27 // pred_check_branch
                %428 = sbr.rel (%p277) target = $region54
              $region53: #{tpu_custom_call.1} parent=27 // pred_region
                %s429 = sand.u32 %s127, 7
                %s430 = ssub.s32 %s127, %s429
                %s431 = scalar_lea.vmem %s126, %s430
                %s432 = ssub.s32 %s127, %s429
                %s433 = scalar_lea.vmem %s112, %s432 [#allocation3]
                %s434 = sshrl.u32 %s127, 3
                // While loop
                $region55: #{tpu_custom_call.1} parent=53 // loop_pre_header
                  _
                $region56: #{tpu_custom_call.1} parent=53 // loop_header
                  %s436 = sphi 0, %s438
                  %p437 = scmp.ge.s32.totalorder %s436, %s434
                  %s441 = sphi 0, %s574
                  %s442 = sphi %s126, %s577
                  %s443 = sphi %s112, %s578
                $region57: #{tpu_custom_call.1} parent=53 // loop_header_branch
                  %440 = sbr.rel (%p437) target = $region61
                $region58: #{tpu_custom_call.1} parent=53 // loop_body
                  %v444 = vld [vmem:[%s442] sm:$0xff]
                  %445 = vst [vmem:[%s443] sm:$0xff] %v444
                  %v446 = vld [vmem:[%s442 + $0x88] sm:$0xff]
                  %447 = vst [vmem:[%s443 + $0x80] sm:$0xff] %v446
                  %v448 = vld [vmem:[%s442 + $0x110] sm:$0xff]
                  %449 = vst [vmem:[%s443 + $0x100] sm:$0xff] %v448
                  %v450 = vld [vmem:[%s442 + $0x198] sm:$0xff]
                  %451 = vst [vmem:[%s443 + $0x180] sm:$0xff] %v450
                  %v452 = vld [vmem:[%s442 + $0x220] sm:$0xff]
                  %453 = vst [vmem:[%s443 + $0x200] sm:$0xff] %v452
                  %v454 = vld [vmem:[%s442 + $0x2a8] sm:$0xff]
                  %455 = vst [vmem:[%s443 + $0x280] sm:$0xff] %v454
                  %v456 = vld [vmem:[%s442 + $0x330] sm:$0xff]
                  %457 = vst [vmem:[%s443 + $0x300] sm:$0xff] %v456
                  %v458 = vld [vmem:[%s442 + $0x3b8] sm:$0xff]
                  %459 = vst [vmem:[%s443 + $0x380] sm:$0xff] %v458
                  %v460 = vld [vmem:[%s442 + $0x440] sm:$0xff]
                  %461 = vst [vmem:[%s443 + $0x400] sm:$0xff] %v460
                  %v462 = vld [vmem:[%s442 + $0x4c8] sm:$0xff]
                  %463 = vst [vmem:[%s443 + $0x480] sm:$0xff] %v462
                  %v464 = vld [vmem:[%s442 + $0x550] sm:$0xff]
                  %465 = vst [vmem:[%s443 + $0x500] sm:$0xff] %v464
                  %v466 = vld [vmem:[%s442 + $0x5d8] sm:$0xff]
                  %467 = vst [vmem:[%s443 + $0x580] sm:$0xff] %v466
                  %v468 = vld [vmem:[%s442 + $0x660] sm:$0xff]
                  %469 = vst [vmem:[%s443 + $0x600] sm:$0xff] %v468
                  %v470 = vld [vmem:[%s442 + $0x6e8] sm:$0xff]
                  %471 = vst [vmem:[%s443 + $0x680] sm:$0xff] %v470
                  %v472 = vld [vmem:[%s442 + $0x770] sm:$0xff]
                  %473 = vst [vmem:[%s443 + $0x700] sm:$0xff] %v472
                  %v474 = vld [vmem:[%s442 + $0x7f8] sm:$0xff]
                  %475 = vst [vmem:[%s443 + $0x780] sm:$0xff] %v474
                  %v476 = vld [vmem:[%s442 + $0x1100] sm:$0xff]
                  %477 = vst [vmem:[%s443 + $0x800] sm:$0xff] %v476
                  %v478 = vld [vmem:[%s442 + $0x1188] sm:$0xff]
                  %479 = vst [vmem:[%s443 + $0x880] sm:$0xff] %v478
                  %v480 = vld [vmem:[%s442 + $0x1210] sm:$0xff]
                  %481 = vst [vmem:[%s443 + $0x900] sm:$0xff] %v480
                  %v482 = vld [vmem:[%s442 + $0x1298] sm:$0xff]
                  %483 = vst [vmem:[%s443 + $0x980] sm:$0xff] %v482
                  %v484 = vld [vmem:[%s442 + $0x1320] sm:$0xff]
                  %485 = vst [vmem:[%s443 + $0xa00] sm:$0xff] %v484
                  %v486 = vld [vmem:[%s442 + $0x13a8] sm:$0xff]
                  %487 = vst [vmem:[%s443 + $0xa80] sm:$0xff] %v486
                  %v488 = vld [vmem:[%s442 + $0x1430] sm:$0xff]
                  %489 = vst [vmem:[%s443 + $0xb00] sm:$0xff] %v488
                  %v490 = vld [vmem:[%s442 + $0x14b8] sm:$0xff]
                  %491 = vst [vmem:[%s443 + $0xb80] sm:$0xff] %v490
                  %v492 = vld [vmem:[%s442 + $0x1540] sm:$0xff]
                  %493 = vst [vmem:[%s443 + $0xc00] sm:$0xff] %v492
                  %v494 = vld [vmem:[%s442 + $0x15c8] sm:$0xff]
                  %495 = vst [vmem:[%s443 + $0xc80] sm:$0xff] %v494
                  %v496 = vld [vmem:[%s442 + $0x1650] sm:$0xff]
                  %497 = vst [vmem:[%s443 + $0xd00] sm:$0xff] %v496
                  %v498 = vld [vmem:[%s442 + $0x16d8] sm:$0xff]
                  %499 = vst [vmem:[%s443 + $0xd80] sm:$0xff] %v498
                  %v500 = vld [vmem:[%s442 + $0x1760] sm:$0xff]
                  %501 = vst [vmem:[%s443 + $0xe00] sm:$0xff] %v500
                  %v502 = vld [vmem:[%s442 + $0x17e8] sm:$0xff]
                  %503 = vst [vmem:[%s443 + $0xe80] sm:$0xff] %v502
                  %v504 = vld [vmem:[%s442 + $0x1870] sm:$0xff]
                  %505 = vst [vmem:[%s443 + $0xf00] sm:$0xff] %v504
                  %v506 = vld [vmem:[%s442 + $0x18f8] sm:$0xff]
                  %507 = vst [vmem:[%s443 + $0xf80] sm:$0xff] %v506
                  %v508 = vld [vmem:[%s442 + $0x2200] sm:$0xff]
                  %509 = vst [vmem:[%s443 + $0x1000] sm:$0xff] %v508
                  %v510 = vld [vmem:[%s442 + $0x2288] sm:$0xff]
                  %511 = vst [vmem:[%s443 + $0x1080] sm:$0xff] %v510
                  %v512 = vld [vmem:[%s442 + $0x2310] sm:$0xff]
                  %513 = vst [vmem:[%s443 + $0x1100] sm:$0xff] %v512
                  %v514 = vld [vmem:[%s442 + $0x2398] sm:$0xff]
                  %515 = vst [vmem:[%s443 + $0x1180] sm:$0xff] %v514
                  %v516 = vld [vmem:[%s442 + $0x2420] sm:$0xff]
                  %517 = vst [vmem:[%s443 + $0x1200] sm:$0xff] %v516
                  %v518 = vld [vmem:[%s442 + $0x24a8] sm:$0xff]
                  %519 = vst [vmem:[%s443 + $0x1280] sm:$0xff] %v518
                  %v520 = vld [vmem:[%s442 + $0x2530] sm:$0xff]
                  %521 = vst [vmem:[%s443 + $0x1300] sm:$0xff] %v520
                  %v522 = vld [vmem:[%s442 + $0x25b8] sm:$0xff]
                  %523 = vst [vmem:[%s443 + $0x1380] sm:$0xff] %v522
                  %v524 = vld [vmem:[%s442 + $0x2640] sm:$0xff]
                  %525 = vst [vmem:[%s443 + $0x1400] sm:$0xff] %v524
                  %v526 = vld [vmem:[%s442 + $0x26c8] sm:$0xff]
                  %527 = vst [vmem:[%s443 + $0x1480] sm:$0xff] %v526
                  %v528 = vld [vmem:[%s442 + $0x2750] sm:$0xff]
                  %529 = vst [vmem:[%s443 + $0x1500] sm:$0xff] %v528
                  %v530 = vld [vmem:[%s442 + $0x27d8] sm:$0xff]
                  %531 = vst [vmem:[%s443 + $0x1580] sm:$0xff] %v530
                  %v532 = vld [vmem:[%s442 + $0x2860] sm:$0xff]
                  %533 = vst [vmem:[%s443 + $0x1600] sm:$0xff] %v532
                  %v534 = vld [vmem:[%s442 + $0x28e8] sm:$0xff]
                  %535 = vst [vmem:[%s443 + $0x1680] sm:$0xff] %v534
                  %v536 = vld [vmem:[%s442 + $0x2970] sm:$0xff]
                  %537 = vst [vmem:[%s443 + $0x1700] sm:$0xff] %v536
                  %v538 = vld [vmem:[%s442 + $0x29f8] sm:$0xff]
                  %539 = vst [vmem:[%s443 + $0x1780] sm:$0xff] %v538
                  %v540 = vld [vmem:[%s442 + $0x3300] sm:$0xff]
                  %541 = vst [vmem:[%s443 + $0x1800] sm:$0xff] %v540
                  %v542 = vld [vmem:[%s442 + $0x3388] sm:$0xff]
                  %543 = vst [vmem:[%s443 + $0x1880] sm:$0xff] %v542
                  %v544 = vld [vmem:[%s442 + $0x3410] sm:$0xff]
                  %545 = vst [vmem:[%s443 + $0x1900] sm:$0xff] %v544
                  %v546 = vld [vmem:[%s442 + $0x3498] sm:$0xff]
                  %547 = vst [vmem:[%s443 + $0x1980] sm:$0xff] %v546
                  %v548 = vld [vmem:[%s442 + $0x3520] sm:$0xff]
                  %549 = vst [vmem:[%s443 + $0x1a00] sm:$0xff] %v548
                  %v550 = vld [vmem:[%s442 + $0x35a8] sm:$0xff]
                  %551 = vst [vmem:[%s443 + $0x1a80] sm:$0xff] %v550
                  %v552 = vld [vmem:[%s442 + $0x3630] sm:$0xff]
                  %553 = vst [vmem:[%s443 + $0x1b00] sm:$0xff] %v552
                  %v554 = vld [vmem:[%s442 + $0x36b8] sm:$0xff]
                  %555 = vst [vmem:[%s443 + $0x1b80] sm:$0xff] %v554
                  %v556 = vld [vmem:[%s442 + $0x3740] sm:$0xff]
                  %557 = vst [vmem:[%s443 + $0x1c00] sm:$0xff] %v556
                  %v558 = vld [vmem:[%s442 + $0x37c8] sm:$0xff]
                  %559 = vst [vmem:[%s443 + $0x1c80] sm:$0xff] %v558
                  %v560 = vld [vmem:[%s442 + $0x3850] sm:$0xff]
                  %561 = vst [vmem:[%s443 + $0x1d00] sm:$0xff] %v560
                  %v562 = vld [vmem:[%s442 + $0x38d8] sm:$0xff]
                  %563 = vst [vmem:[%s443 + $0x1d80] sm:$0xff] %v562
                  %v564 = vld [vmem:[%s442 + $0x3960] sm:$0xff]
                  %565 = vst [vmem:[%s443 + $0x1e00] sm:$0xff] %v564
                  %v566 = vld [vmem:[%s442 + $0x39e8] sm:$0xff]
                  %567 = vst [vmem:[%s443 + $0x1e80] sm:$0xff] %v566
                  %v568 = vld [vmem:[%s442 + $0x3a70] sm:$0xff]
                  %569 = vst [vmem:[%s443 + $0x1f00] sm:$0xff] %v568
                  %v570 = vld [vmem:[%s442 + $0x3af8] sm:$0xff]
                  %571 = vst [vmem:[%s443 + $0x1f80] sm:$0xff] %v570
                  %s572 = sadd.s32 1, %s441
                  %p573 = scmp.ge.s32.totalorder %s572, %s434
                  %s574 = scalar_select %p573, 0, %s572
                  %s575 = smul.u32 %s574, 8
                  %s576 = smul.u32 %s574, 8
                  %s577 = scalar_lea.vmem %s126, %s575
                  %s578 = scalar_lea.vmem %s112, %s576 [#allocation3]
                $region59: #{tpu_custom_call.1} parent=53 // loop_footer
                  %s438 = sadd.s32 %s436, 1
                $region60: #{tpu_custom_call.1} parent=53 // loop_footer_branch
                  %435 = sbr.rel target = $region56
                $region61: #{tpu_custom_call.1} parent=53 // loop_exit
                  _
                %s579 = sshll.u32 1, %s429
                %s580 = ssub.s32 %s579, 1
                loop: start=0, step=1, limit=1
                $region62: #{tpu_custom_call.1} parent=53 // loop_pre_header
                  _
                $region63: #{tpu_custom_call.1} parent=53 // loop_header
                  %s582 = sphi 0, %s586
                  %p583 = scmp.ge.s32.totalorder %s582, 1
                  %s587 = sphi %s431, %s431
                  %s588 = sphi %s433, %s433
                $region64: #{tpu_custom_call.1} parent=53 // loop_header_branch
                  %585 = sbr.rel (%p583) target = $region68
                $region65: #{tpu_custom_call.1} parent=53 // loop_body
                  %v589 = vld [vmem:[%s587] sm:%s580]
                  %590 = vst [vmem:[%s588] sm:%s580] %v589
                  %v591 = vld [vmem:[%s587 + $0x88] sm:%s580]
                  %592 = vst [vmem:[%s588 + $0x80] sm:%s580] %v591
                  %v593 = vld [vmem:[%s587 + $0x110] sm:%s580]
                  %594 = vst [vmem:[%s588 + $0x100] sm:%s580] %v593
                  %v595 = vld [vmem:[%s587 + $0x198] sm:%s580]
                  %596 = vst [vmem:[%s588 + $0x180] sm:%s580] %v595
                  %v597 = vld [vmem:[%s587 + $0x220] sm:%s580]
                  %598 = vst [vmem:[%s588 + $0x200] sm:%s580] %v597
                  %v599 = vld [vmem:[%s587 + $0x2a8] sm:%s580]
                  %600 = vst [vmem:[%s588 + $0x280] sm:%s580] %v599
                  %v601 = vld [vmem:[%s587 + $0x330] sm:%s580]
                  %602 = vst [vmem:[%s588 + $0x300] sm:%s580] %v601
                  %v603 = vld [vmem:[%s587 + $0x3b8] sm:%s580]
                  %604 = vst [vmem:[%s588 + $0x380] sm:%s580] %v603
                  %v605 = vld [vmem:[%s587 + $0x440] sm:%s580]
                  %606 = vst [vmem:[%s588 + $0x400] sm:%s580] %v605
                  %v607 = vld [vmem:[%s587 + $0x4c8] sm:%s580]
                  %608 = vst [vmem:[%s588 + $0x480] sm:%s580] %v607
                  %v609 = vld [vmem:[%s587 + $0x550] sm:%s580]
                  %610 = vst [vmem:[%s588 + $0x500] sm:%s580] %v609
                  %v611 = vld [vmem:[%s587 + $0x5d8] sm:%s580]
                  %612 = vst [vmem:[%s588 + $0x580] sm:%s580] %v611
                  %v613 = vld [vmem:[%s587 + $0x660] sm:%s580]
                  %614 = vst [vmem:[%s588 + $0x600] sm:%s580] %v613
                  %v615 = vld [vmem:[%s587 + $0x6e8] sm:%s580]
                  %616 = vst [vmem:[%s588 + $0x680] sm:%s580] %v615
                  %v617 = vld [vmem:[%s587 + $0x770] sm:%s580]
                  %618 = vst [vmem:[%s588 + $0x700] sm:%s580] %v617
                  %v619 = vld [vmem:[%s587 + $0x7f8] sm:%s580]
                  %620 = vst [vmem:[%s588 + $0x780] sm:%s580] %v619
                  %v621 = vld [vmem:[%s587 + $0x1100] sm:%s580]
                  %622 = vst [vmem:[%s588 + $0x800] sm:%s580] %v621
                  %v623 = vld [vmem:[%s587 + $0x1188] sm:%s580]
                  %624 = vst [vmem:[%s588 + $0x880] sm:%s580] %v623
                  %v625 = vld [vmem:[%s587 + $0x1210] sm:%s580]
                  %626 = vst [vmem:[%s588 + $0x900] sm:%s580] %v625
                  %v627 = vld [vmem:[%s587 + $0x1298] sm:%s580]
                  %628 = vst [vmem:[%s588 + $0x980] sm:%s580] %v627
                  %v629 = vld [vmem:[%s587 + $0x1320] sm:%s580]
                  %630 = vst [vmem:[%s588 + $0xa00] sm:%s580] %v629
                  %v631 = vld [vmem:[%s587 + $0x13a8] sm:%s580]
                  %632 = vst [vmem:[%s588 + $0xa80] sm:%s580] %v631
                  %v633 = vld [vmem:[%s587 + $0x1430] sm:%s580]
                  %634 = vst [vmem:[%s588 + $0xb00] sm:%s580] %v633
                  %v635 = vld [vmem:[%s587 + $0x14b8] sm:%s580]
                  %636 = vst [vmem:[%s588 + $0xb80] sm:%s580] %v635
                  %v637 = vld [vmem:[%s587 + $0x1540] sm:%s580]
                  %638 = vst [vmem:[%s588 + $0xc00] sm:%s580] %v637
                  %v639 = vld [vmem:[%s587 + $0x15c8] sm:%s580]
                  %640 = vst [vmem:[%s588 + $0xc80] sm:%s580] %v639
                  %v641 = vld [vmem:[%s587 + $0x1650] sm:%s580]
                  %642 = vst [vmem:[%s588 + $0xd00] sm:%s580] %v641
                  %v643 = vld [vmem:[%s587 + $0x16d8] sm:%s580]
                  %644 = vst [vmem:[%s588 + $0xd80] sm:%s580] %v643
                  %v645 = vld [vmem:[%s587 + $0x1760] sm:%s580]
                  %646 = vst [vmem:[%s588 + $0xe00] sm:%s580] %v645
                  %v647 = vld [vmem:[%s587 + $0x17e8] sm:%s580]
                  %648 = vst [vmem:[%s588 + $0xe80] sm:%s580] %v647
                  %v649 = vld [vmem:[%s587 + $0x1870] sm:%s580]
                  %650 = vst [vmem:[%s588 + $0xf00] sm:%s580] %v649
                  %v651 = vld [vmem:[%s587 + $0x18f8] sm:%s580]
                  %652 = vst [vmem:[%s588 + $0xf80] sm:%s580] %v651
                  %v653 = vld [vmem:[%s587 + $0x2200] sm:%s580]
                  %654 = vst [vmem:[%s588 + $0x1000] sm:%s580] %v653
                  %v655 = vld [vmem:[%s587 + $0x2288] sm:%s580]
                  %656 = vst [vmem:[%s588 + $0x1080] sm:%s580] %v655
                  %v657 = vld [vmem:[%s587 + $0x2310] sm:%s580]
                  %658 = vst [vmem:[%s588 + $0x1100] sm:%s580] %v657
                  %v659 = vld [vmem:[%s587 + $0x2398] sm:%s580]
                  %660 = vst [vmem:[%s588 + $0x1180] sm:%s580] %v659
                  %v661 = vld [vmem:[%s587 + $0x2420] sm:%s580]
                  %662 = vst [vmem:[%s588 + $0x1200] sm:%s580] %v661
                  %v663 = vld [vmem:[%s587 + $0x24a8] sm:%s580]
                  %664 = vst [vmem:[%s588 + $0x1280] sm:%s580] %v663
                  %v665 = vld [vmem:[%s587 + $0x2530] sm:%s580]
                  %666 = vst [vmem:[%s588 + $0x1300] sm:%s580] %v665
                  %v667 = vld [vmem:[%s587 + $0x25b8] sm:%s580]
                  %668 = vst [vmem:[%s588 + $0x1380] sm:%s580] %v667
                  %v669 = vld [vmem:[%s587 + $0x2640] sm:%s580]
                  %670 = vst [vmem:[%s588 + $0x1400] sm:%s580] %v669
                  %v671 = vld [vmem:[%s587 + $0x26c8] sm:%s580]
                  %672 = vst [vmem:[%s588 + $0x1480] sm:%s580] %v671
                  %v673 = vld [vmem:[%s587 + $0x2750] sm:%s580]
                  %674 = vst [vmem:[%s588 + $0x1500] sm:%s580] %v673
                  %v675 = vld [vmem:[%s587 + $0x27d8] sm:%s580]
                  %676 = vst [vmem:[%s588 + $0x1580] sm:%s580] %v675
                  %v677 = vld [vmem:[%s587 + $0x2860] sm:%s580]
                  %678 = vst [vmem:[%s588 + $0x1600] sm:%s580] %v677
                  %v679 = vld [vmem:[%s587 + $0x28e8] sm:%s580]
                  %680 = vst [vmem:[%s588 + $0x1680] sm:%s580] %v679
                  %v681 = vld [vmem:[%s587 + $0x2970] sm:%s580]
                  %682 = vst [vmem:[%s588 + $0x1700] sm:%s580] %v681
                  %v683 = vld [vmem:[%s587 + $0x29f8] sm:%s580]
                  %684 = vst [vmem:[%s588 + $0x1780] sm:%s580] %v683
                  %v685 = vld [vmem:[%s587 + $0x3300] sm:%s580]
                  %686 = vst [vmem:[%s588 + $0x1800] sm:%s580] %v685
                  %v687 = vld [vmem:[%s587 + $0x3388] sm:%s580]
                  %688 = vst [vmem:[%s588 + $0x1880] sm:%s580] %v687
                  %v689 = vld [vmem:[%s587 + $0x3410] sm:%s580]
                  %690 = vst [vmem:[%s588 + $0x1900] sm:%s580] %v689
                  %v691 = vld [vmem:[%s587 + $0x3498] sm:%s580]
                  %692 = vst [vmem:[%s588 + $0x1980] sm:%s580] %v691
                  %v693 = vld [vmem:[%s587 + $0x3520] sm:%s580]
                  %694 = vst [vmem:[%s588 + $0x1a00] sm:%s580] %v693
                  %v695 = vld [vmem:[%s587 + $0x35a8] sm:%s580]
                  %696 = vst [vmem:[%s588 + $0x1a80] sm:%s580] %v695
                  %v697 = vld [vmem:[%s587 + $0x3630] sm:%s580]
                  %698 = vst [vmem:[%s588 + $0x1b00] sm:%s580] %v697
                  %v699 = vld [vmem:[%s587 + $0x36b8] sm:%s580]
                  %700 = vst [vmem:[%s588 + $0x1b80] sm:%s580] %v699
                  %v701 = vld [vmem:[%s587 + $0x3740] sm:%s580]
                  %702 = vst [vmem:[%s588 + $0x1c00] sm:%s580] %v701
                  %v703 = vld [vmem:[%s587 + $0x37c8] sm:%s580]
                  %704 = vst [vmem:[%s588 + $0x1c80] sm:%s580] %v703
                  %v705 = vld [vmem:[%s587 + $0x3850] sm:%s580]
                  %706 = vst [vmem:[%s588 + $0x1d00] sm:%s580] %v705
                  %v707 = vld [vmem:[%s587 + $0x38d8] sm:%s580]
                  %708 = vst [vmem:[%s588 + $0x1d80] sm:%s580] %v707
                  %v709 = vld [vmem:[%s587 + $0x3960] sm:%s580]
                  %710 = vst [vmem:[%s588 + $0x1e00] sm:%s580] %v709
                  %v711 = vld [vmem:[%s587 + $0x39e8] sm:%s580]
                  %712 = vst [vmem:[%s588 + $0x1e80] sm:%s580] %v711
                  %v713 = vld [vmem:[%s587 + $0x3a70] sm:%s580]
                  %714 = vst [vmem:[%s588 + $0x1f00] sm:%s580] %v713
                  %v715 = vld [vmem:[%s587 + $0x3af8] sm:%s580]
                  %716 = vst [vmem:[%s588 + $0x1f80] sm:%s580] %v715
                $region66: #{tpu_custom_call.1} parent=53 // loop_footer
                  %s586 = sadd.s32 1, %s582
                $region67: #{tpu_custom_call.1} parent=53 // loop_footer_branch
                  %581 = sbr.rel target = $region63
                $region68: #{tpu_custom_call.1} parent=53 // loop_exit
                  _
              $region54: #{tpu_custom_call.1} parent=27 // pred_fallthru
                _
            $region28: #{tpu_custom_call.1} parent=23 // pred_fallthru
              _
            // Predicated region
            $region29: #{tpu_custom_call.1} parent=23 // pred_check
              %p135 = pneg %p131
            $region30: #{tpu_custom_call.1} parent=23 // pred_check_branch
              %137 = sbr.rel (%p135) target = $region32
            $region31: #{tpu_custom_call.1} parent=23 // pred_region
              %s138 = sshll.u32 1, %s127
              %s139 = ssub.s32 %s138, 1
              loop: start=0, step=1, limit=1
              $region33: #{tpu_custom_call.1} parent=31 // loop_pre_header
                _
              $region34: #{tpu_custom_call.1} parent=31 // loop_header
                %s141 = sphi 0, %s145
                %p142 = scmp.ge.s32.totalorder %s141, 1
                %s146 = sphi %s126, %s126
                %s147 = sphi %s112, %s112
              $region35: #{tpu_custom_call.1} parent=31 // loop_header_branch
                %144 = sbr.rel (%p142) target = $region39
              $region36: #{tpu_custom_call.1} parent=31 // loop_body
                %v148 = vld [vmem:[%s146] sm:%s139]
                %149 = vst [vmem:[%s147] sm:%s139] %v148
                %v150 = vld [vmem:[%s146 + $0x88] sm:%s139]
                %151 = vst [vmem:[%s147 + $0x80] sm:%s139] %v150
                %v152 = vld [vmem:[%s146 + $0x110] sm:%s139]
                %153 = vst [vmem:[%s147 + $0x100] sm:%s139] %v152
                %v154 = vld [vmem:[%s146 + $0x198] sm:%s139]
                %155 = vst [vmem:[%s147 + $0x180] sm:%s139] %v154
                %v156 = vld [vmem:[%s146 + $0x220] sm:%s139]
                %157 = vst [vmem:[%s147 + $0x200] sm:%s139] %v156
                %v158 = vld [vmem:[%s146 + $0x2a8] sm:%s139]
                %159 = vst [vmem:[%s147 + $0x280] sm:%s139] %v158
                %v160 = vld [vmem:[%s146 + $0x330] sm:%s139]
                %161 = vst [vmem:[%s147 + $0x300] sm:%s139] %v160
                %v162 = vld [vmem:[%s146 + $0x3b8] sm:%s139]
                %163 = vst [vmem:[%s147 + $0x380] sm:%s139] %v162
                %v164 = vld [vmem:[%s146 + $0x440] sm:%s139]
                %165 = vst [vmem:[%s147 + $0x400] sm:%s139] %v164
                %v166 = vld [vmem:[%s146 + $0x4c8] sm:%s139]
                %167 = vst [vmem:[%s147 + $0x480] sm:%s139] %v166
                %v168 = vld [vmem:[%s146 + $0x550] sm:%s139]
                %169 = vst [vmem:[%s147 + $0x500] sm:%s139] %v168
                %v170 = vld [vmem:[%s146 + $0x5d8] sm:%s139]
                %171 = vst [vmem:[%s147 + $0x580] sm:%s139] %v170
                %v172 = vld [vmem:[%s146 + $0x660] sm:%s139]
                %173 = vst [vmem:[%s147 + $0x600] sm:%s139] %v172
                %v174 = vld [vmem:[%s146 + $0x6e8] sm:%s139]
                %175 = vst [vmem:[%s147 + $0x680] sm:%s139] %v174
                %v176 = vld [vmem:[%s146 + $0x770] sm:%s139]
                %177 = vst [vmem:[%s147 + $0x700] sm:%s139] %v176
                %v178 = vld [vmem:[%s146 + $0x7f8] sm:%s139]
                %179 = vst [vmem:[%s147 + $0x780] sm:%s139] %v178
                %v180 = vld [vmem:[%s146 + $0x1100] sm:%s139]
                %181 = vst [vmem:[%s147 + $0x800] sm:%s139] %v180
                %v182 = vld [vmem:[%s146 + $0x1188] sm:%s139]
                %183 = vst [vmem:[%s147 + $0x880] sm:%s139] %v182
                %v184 = vld [vmem:[%s146 + $0x1210] sm:%s139]
                %185 = vst [vmem:[%s147 + $0x900] sm:%s139] %v184
                %v186 = vld [vmem:[%s146 + $0x1298] sm:%s139]
                %187 = vst [vmem:[%s147 + $0x980] sm:%s139] %v186
                %v188 = vld [vmem:[%s146 + $0x1320] sm:%s139]
                %189 = vst [vmem:[%s147 + $0xa00] sm:%s139] %v188
                %v190 = vld [vmem:[%s146 + $0x13a8] sm:%s139]
                %191 = vst [vmem:[%s147 + $0xa80] sm:%s139] %v190
                %v192 = vld [vmem:[%s146 + $0x1430] sm:%s139]
                %193 = vst [vmem:[%s147 + $0xb00] sm:%s139] %v192
                %v194 = vld [vmem:[%s146 + $0x14b8] sm:%s139]
                %195 = vst [vmem:[%s147 + $0xb80] sm:%s139] %v194
                %v196 = vld [vmem:[%s146 + $0x1540] sm:%s139]
                %197 = vst [vmem:[%s147 + $0xc00] sm:%s139] %v196
                %v198 = vld [vmem:[%s146 + $0x15c8] sm:%s139]
                %199 = vst [vmem:[%s147 + $0xc80] sm:%s139] %v198
                %v200 = vld [vmem:[%s146 + $0x1650] sm:%s139]
                %201 = vst [vmem:[%s147 + $0xd00] sm:%s139] %v200
                %v202 = vld [vmem:[%s146 + $0x16d8] sm:%s139]
                %203 = vst [vmem:[%s147 + $0xd80] sm:%s139] %v202
                %v204 = vld [vmem:[%s146 + $0x1760] sm:%s139]
                %205 = vst [vmem:[%s147 + $0xe00] sm:%s139] %v204
                %v206 = vld [vmem:[%s146 + $0x17e8] sm:%s139]
                %207 = vst [vmem:[%s147 + $0xe80] sm:%s139] %v206
                %v208 = vld [vmem:[%s146 + $0x1870] sm:%s139]
                %209 = vst [vmem:[%s147 + $0xf00] sm:%s139] %v208
                %v210 = vld [vmem:[%s146 + $0x18f8] sm:%s139]
                %211 = vst [vmem:[%s147 + $0xf80] sm:%s139] %v210
                %v212 = vld [vmem:[%s146 + $0x2200] sm:%s139]
                %213 = vst [vmem:[%s147 + $0x1000] sm:%s139] %v212
                %v214 = vld [vmem:[%s146 + $0x2288] sm:%s139]
                %215 = vst [vmem:[%s147 + $0x1080] sm:%s139] %v214
                %v216 = vld [vmem:[%s146 + $0x2310] sm:%s139]
                %217 = vst [vmem:[%s147 + $0x1100] sm:%s139] %v216
                %v218 = vld [vmem:[%s146 + $0x2398] sm:%s139]
                %219 = vst [vmem:[%s147 + $0x1180] sm:%s139] %v218
                %v220 = vld [vmem:[%s146 + $0x2420] sm:%s139]
                %221 = vst [vmem:[%s147 + $0x1200] sm:%s139] %v220
                %v222 = vld [vmem:[%s146 + $0x24a8] sm:%s139]
                %223 = vst [vmem:[%s147 + $0x1280] sm:%s139] %v222
                %v224 = vld [vmem:[%s146 + $0x2530] sm:%s139]
                %225 = vst [vmem:[%s147 + $0x1300] sm:%s139] %v224
                %v226 = vld [vmem:[%s146 + $0x25b8] sm:%s139]
                %227 = vst [vmem:[%s147 + $0x1380] sm:%s139] %v226
                %v228 = vld [vmem:[%s146 + $0x2640] sm:%s139]
                %229 = vst [vmem:[%s147 + $0x1400] sm:%s139] %v228
                %v230 = vld [vmem:[%s146 + $0x26c8] sm:%s139]
                %231 = vst [vmem:[%s147 + $0x1480] sm:%s139] %v230
                %v232 = vld [vmem:[%s146 + $0x2750] sm:%s139]
                %233 = vst [vmem:[%s147 + $0x1500] sm:%s139] %v232
                %v234 = vld [vmem:[%s146 + $0x27d8] sm:%s139]
                %235 = vst [vmem:[%s147 + $0x1580] sm:%s139] %v234
                %v236 = vld [vmem:[%s146 + $0x2860] sm:%s139]
                %237 = vst [vmem:[%s147 + $0x1600] sm:%s139] %v236
                %v238 = vld [vmem:[%s146 + $0x28e8] sm:%s139]
                %239 = vst [vmem:[%s147 + $0x1680] sm:%s139] %v238
                %v240 = vld [vmem:[%s146 + $0x2970] sm:%s139]
                %241 = vst [vmem:[%s147 + $0x1700] sm:%s139] %v240
                %v242 = vld [vmem:[%s146 + $0x29f8] sm:%s139]
                %243 = vst [vmem:[%s147 + $0x1780] sm:%s139] %v242
                %v244 = vld [vmem:[%s146 + $0x3300] sm:%s139]
                %245 = vst [vmem:[%s147 + $0x1800] sm:%s139] %v244
                %v246 = vld [vmem:[%s146 + $0x3388] sm:%s139]
                %247 = vst [vmem:[%s147 + $0x1880] sm:%s139] %v246
                %v248 = vld [vmem:[%s146 + $0x3410] sm:%s139]
                %249 = vst [vmem:[%s147 + $0x1900] sm:%s139] %v248
                %v250 = vld [vmem:[%s146 + $0x3498] sm:%s139]
                %251 = vst [vmem:[%s147 + $0x1980] sm:%s139] %v250
                %v252 = vld [vmem:[%s146 + $0x3520] sm:%s139]
                %253 = vst [vmem:[%s147 + $0x1a00] sm:%s139] %v252
                %v254 = vld [vmem:[%s146 + $0x35a8] sm:%s139]
                %255 = vst [vmem:[%s147 + $0x1a80] sm:%s139] %v254
                %v256 = vld [vmem:[%s146 + $0x3630] sm:%s139]
                %257 = vst [vmem:[%s147 + $0x1b00] sm:%s139] %v256
                %v258 = vld [vmem:[%s146 + $0x36b8] sm:%s139]
                %259 = vst [vmem:[%s147 + $0x1b80] sm:%s139] %v258
                %v260 = vld [vmem:[%s146 + $0x3740] sm:%s139]
                %261 = vst [vmem:[%s147 + $0x1c00] sm:%s139] %v260
                %v262 = vld [vmem:[%s146 + $0x37c8] sm:%s139]
                %263 = vst [vmem:[%s147 + $0x1c80] sm:%s139] %v262
                %v264 = vld [vmem:[%s146 + $0x3850] sm:%s139]
                %265 = vst [vmem:[%s147 + $0x1d00] sm:%s139] %v264
                %v266 = vld [vmem:[%s146 + $0x38d8] sm:%s139]
                %267 = vst [vmem:[%s147 + $0x1d80] sm:%s139] %v266
                %v268 = vld [vmem:[%s146 + $0x3960] sm:%s139]
                %269 = vst [vmem:[%s147 + $0x1e00] sm:%s139] %v268
                %v270 = vld [vmem:[%s146 + $0x39e8] sm:%s139]
                %271 = vst [vmem:[%s147 + $0x1e80] sm:%s139] %v270
                %v272 = vld [vmem:[%s146 + $0x3a70] sm:%s139]
                %273 = vst [vmem:[%s147 + $0x1f00] sm:%s139] %v272
                %v274 = vld [vmem:[%s146 + $0x3af8] sm:%s139]
                %275 = vst [vmem:[%s147 + $0x1f80] sm:%s139] %v274
              $region37: #{tpu_custom_call.1} parent=31 // loop_footer
                %s145 = sadd.s32 1, %s141
              $region38: #{tpu_custom_call.1} parent=31 // loop_footer_branch
                %140 = sbr.rel target = $region34
              $region39: #{tpu_custom_call.1} parent=31 // loop_exit
                _
            $region32: #{tpu_custom_call.1} parent=23 // pred_fallthru
              _
          $region24: #{tpu_custom_call.1} parent=19 // pred_fallthru
            _
          %717 = vnop
        $region20: #{tpu_custom_call.1} parent=15 // pred_fallthru
          _
      $region16: #{tpu_custom_call.1} parent=5 // pred_fallthru
        _
      %p718 = scmp.le.s32.totalorder 1, %s10
      %p719 = scmp.lt.s32.totalorder %s10, 5
      %p720 = pnand %p718, %p719
      %p721 = pneg %p720
      // Predicated region
      $region69: #{tpu_custom_call.1} parent=5 // pred_check
        _
      $region70: #{tpu_custom_call.1} parent=5 // pred_check_branch
        %723 = sbr.rel (%p720) target = $region72
      $region71: #{tpu_custom_call.1} parent=5 // pred_region
        %s724 = ssub.s32 %s10, 1
        %s725 = sand.u32 %s46, 1
        %s726 = sand.u32 %s46, 1
        %s727 = smul.addr %s726, 8192
        %s728 = scalar_lea.vmem [#allocation3], %s727
        // Predicated region
        $region73: #{tpu_custom_call.1} parent=71 // pred_check
          %p729 = pneg %p59
        $region74: #{tpu_custom_call.1} parent=71 // pred_check_branch
          %731 = sbr.rel (%p729) target = $region76
        $region75: #{tpu_custom_call.1} parent=71 // pred_region
          _
        $region76: #{tpu_custom_call.1} parent=71 // pred_fallthru
          _
        %s732 = sand.u32 %s46, 1
        %s733 = sand.u32 %s46, 1
        %s734 = smul.addr %s733, 8192
        %s735 = scalar_lea.vmem [#allocation3], %s734
        %p736 = pneg %p59
        %p737 = pneg %p56
        %p738 = pneg %p87
        %p739 = pneg %p84
        %s740 = sand.u32 %s74, 1
        %s741 = scalar_lea.sflag [#allocation5], %s740
        %s742 = sand.u32 %s74, 1
        %s743 = smul.addr %s742, 4
        %s744 = scalar_lea.vmem [#allocation4], %s743
        %s745 = smul.u32 4, %s20
        %s746 = smul.u32 16, %s21
        %s747 = smul.u32 16, %s22
        %s748 = ssub.s32 17, %s747
        %p749 = scmp.lt.s32.totalorder %s748, 16
        %s750 = scalar_select %p749, %s748, 16
        %s751 = smul.u32 512, %s750
        %v752 = vld [vmem:[%s728] sm:$0xff]
        %v753 = vld [vmem:[%s728 + $0x8] sm:$0xff]
        %v754 = vld [vmem:[%s728 + $0x10] sm:$0xff]
        %v755 = vld [vmem:[%s728 + $0x18] sm:$0xff]
        %v756 = vld [vmem:[%s728 + $0x20] sm:$0xff]
        %v757 = vld [vmem:[%s728 + $0x28] sm:$0xff]
        %v758 = vld [vmem:[%s728 + $0x30] sm:$0xff]
        %v759 = vld [vmem:[%s728 + $0x38] sm:$0xff]
        %v760 = vld [vmem:[%s728 + $0x40] sm:$0xff]
        %v761 = vld [vmem:[%s728 + $0x48] sm:$0xff]
        %v762 = vld [vmem:[%s728 + $0x50] sm:$0xff]
        %v763 = vld [vmem:[%s728 + $0x58] sm:$0xff]
        %v764 = vld [vmem:[%s728 + $0x60] sm:$0xff]
        %v765 = vld [vmem:[%s728 + $0x68] sm:$0xff]
        %v766 = vld [vmem:[%s728 + $0x70] sm:$0xff]
        %v767 = vld [vmem:[%s728 + $0x78] sm:$0xff]
        %v768 = vld [vmem:[%s728 + $0x80] sm:$0xff]
        %v769 = vld [vmem:[%s728 + $0x88] sm:$0xff]
        %v770 = vld [vmem:[%s728 + $0x90] sm:$0xff]
        %v771 = vld [vmem:[%s728 + $0x98] sm:$0xff]
        %v772 = vld [vmem:[%s728 + $0xa0] sm:$0xff]
        %v773 = vld [vmem:[%s728 + $0xa8] sm:$0xff]
        %v774 = vld [vmem:[%s728 + $0xb0] sm:$0xff]
        %v775 = vld [vmem:[%s728 + $0xb8] sm:$0xff]
        %v776 = vld [vmem:[%s728 + $0xc0] sm:$0xff]
        %v777 = vld [vmem:[%s728 + $0xc8] sm:$0xff]
        %v778 = vld [vmem:[%s728 + $0xd0] sm:$0xff]
        %v779 = vld [vmem:[%s728 + $0xd8] sm:$0xff]
        %v780 = vld [vmem:[%s728 + $0xe0] sm:$0xff]
        %v781 = vld [vmem:[%s728 + $0xe8] sm:$0xff]
        %v782 = vld [vmem:[%s728 + $0xf0] sm:$0xff]
        %v783 = vld [vmem:[%s728 + $0xf8] sm:$0xff]
        %v784 = vld [vmem:[%s728 + $0x100] sm:$0xff]
        %v785 = vld [vmem:[%s728 + $0x108] sm:$0xff]
        %v786 = vld [vmem:[%s728 + $0x110] sm:$0xff]
        %v787 = vld [vmem:[%s728 + $0x118] sm:$0xff]
        %v788 = vld [vmem:[%s728 + $0x120] sm:$0xff]
        %v789 = vld [vmem:[%s728 + $0x128] sm:$0xff]
        %v790 = vld [vmem:[%s728 + $0x130] sm:$0xff]
        %v791 = vld [vmem:[%s728 + $0x138] sm:$0xff]
        %v792 = vld [vmem:[%s728 + $0x140] sm:$0xff]
        %v793 = vld [vmem:[%s728 + $0x148] sm:$0xff]
        %v794 = vld [vmem:[%s728 + $0x150] sm:$0xff]
        %v795 = vld [vmem:[%s728 + $0x158] sm:$0xff]
        %v796 = vld [vmem:[%s728 + $0x160] sm:$0xff]
        %v797 = vld [vmem:[%s728 + $0x168] sm:$0xff]
        %v798 = vld [vmem:[%s728 + $0x170] sm:$0xff]
        %v799 = vld [vmem:[%s728 + $0x178] sm:$0xff]
        %v800 = vld [vmem:[%s728 + $0x180] sm:$0xff]
        %v801 = vld [vmem:[%s728 + $0x188] sm:$0xff]
        %v802 = vld [vmem:[%s728 + $0x190] sm:$0xff]
        %v803 = vld [vmem:[%s728 + $0x198] sm:$0xff]
        %v804 = vld [vmem:[%s728 + $0x1a0] sm:$0xff]
        %v805 = vld [vmem:[%s728 + $0x1a8] sm:$0xff]
        %v806 = vld [vmem:[%s728 + $0x1b0] sm:$0xff]
        %v807 = vld [vmem:[%s728 + $0x1b8] sm:$0xff]
        %v808 = vld [vmem:[%s728 + $0x1c0] sm:$0xff]
        %v809 = vld [vmem:[%s728 + $0x1c8] sm:$0xff]
        %v810 = vld [vmem:[%s728 + $0x1d0] sm:$0xff]
        %v811 = vld [vmem:[%s728 + $0x1d8] sm:$0xff]
        %v812 = vld [vmem:[%s728 + $0x1e0] sm:$0xff]
        %v813 = vld [vmem:[%s728 + $0x1e8] sm:$0xff]
        %v814 = vld [vmem:[%s728 + $0x1f0] sm:$0xff]
        %v815 = vld [vmem:[%s728 + $0x1f8] sm:$0xff]
        %v816 = vld [vmem:[%s728 + $0x200] sm:$0xff]
        %v817 = vld [vmem:[%s728 + $0x208] sm:$0xff]
        %v818 = vld [vmem:[%s728 + $0x210] sm:$0xff]
        %v819 = vld [vmem:[%s728 + $0x218] sm:$0xff]
        %v820 = vld [vmem:[%s728 + $0x220] sm:$0xff]
        %v821 = vld [vmem:[%s728 + $0x228] sm:$0xff]
        %v822 = vld [vmem:[%s728 + $0x230] sm:$0xff]
        %v823 = vld [vmem:[%s728 + $0x238] sm:$0xff]
        %v824 = vld [vmem:[%s728 + $0x240] sm:$0xff]
        %v825 = vld [vmem:[%s728 + $0x248] sm:$0xff]
        %v826 = vld [vmem:[%s728 + $0x250] sm:$0xff]
        %v827 = vld [vmem:[%s728 + $0x258] sm:$0xff]
        %v828 = vld [vmem:[%s728 + $0x260] sm:$0xff]
        %v829 = vld [vmem:[%s728 + $0x268] sm:$0xff]
        %v830 = vld [vmem:[%s728 + $0x270] sm:$0xff]
        %v831 = vld [vmem:[%s728 + $0x278] sm:$0xff]
        %v832 = vld [vmem:[%s728 + $0x280] sm:$0xff]
        %v833 = vld [vmem:[%s728 + $0x288] sm:$0xff]
        %v834 = vld [vmem:[%s728 + $0x290] sm:$0xff]
        %v835 = vld [vmem:[%s728 + $0x298] sm:$0xff]
        %v836 = vld [vmem:[%s728 + $0x2a0] sm:$0xff]
        %v837 = vld [vmem:[%s728 + $0x2a8] sm:$0xff]
        %v838 = vld [vmem:[%s728 + $0x2b0] sm:$0xff]
        %v839 = vld [vmem:[%s728 + $0x2b8] sm:$0xff]
        %v840 = vld [vmem:[%s728 + $0x2c0] sm:$0xff]
        %v841 = vld [vmem:[%s728 + $0x2c8] sm:$0xff]
        %v842 = vld [vmem:[%s728 + $0x2d0] sm:$0xff]
        %v843 = vld [vmem:[%s728 + $0x2d8] sm:$0xff]
        %v844 = vld [vmem:[%s728 + $0x2e0] sm:$0xff]
        %v845 = vld [vmem:[%s728 + $0x2e8] sm:$0xff]
        %v846 = vld [vmem:[%s728 + $0x2f0] sm:$0xff]
        %v847 = vld [vmem:[%s728 + $0x2f8] sm:$0xff]
        %v848 = vld [vmem:[%s728 + $0x300] sm:$0xff]
        %v849 = vld [vmem:[%s728 + $0x308] sm:$0xff]
        %v850 = vld [vmem:[%s728 + $0x310] sm:$0xff]
        %v851 = vld [vmem:[%s728 + $0x318] sm:$0xff]
        %v852 = vld [vmem:[%s728 + $0x320] sm:$0xff]
        %v853 = vld [vmem:[%s728 + $0x328] sm:$0xff]
        %v854 = vld [vmem:[%s728 + $0x330] sm:$0xff]
        %v855 = vld [vmem:[%s728 + $0x338] sm:$0xff]
        %v856 = vld [vmem:[%s728 + $0x340] sm:$0xff]
        %v857 = vld [vmem:[%s728 + $0x348] sm:$0xff]
        %v858 = vld [vmem:[%s728 + $0x350] sm:$0xff]
        %v859 = vld [vmem:[%s728 + $0x358] sm:$0xff]
        %v860 = vld [vmem:[%s728 + $0x360] sm:$0xff]
        %v861 = vld [vmem:[%s728 + $0x368] sm:$0xff]
        %v862 = vld [vmem:[%s728 + $0x370] sm:$0xff]
        %v863 = vld [vmem:[%s728 + $0x378] sm:$0xff]
        %v864 = vld [vmem:[%s728 + $0x380] sm:$0xff]
        %v865 = vld [vmem:[%s728 + $0x388] sm:$0xff]
        %v866 = vld [vmem:[%s728 + $0x390] sm:$0xff]
        %v867 = vld [vmem:[%s728 + $0x398] sm:$0xff]
        %v868 = vld [vmem:[%s728 + $0x3a0] sm:$0xff]
        %v869 = vld [vmem:[%s728 + $0x3a8] sm:$0xff]
        %v870 = vld [vmem:[%s728 + $0x3b0] sm:$0xff]
        %v871 = vld [vmem:[%s728 + $0x3b8] sm:$0xff]
        %v872 = vld [vmem:[%s728 + $0x3c0] sm:$0xff]
        %v873 = vld [vmem:[%s728 + $0x3c8] sm:$0xff]
        %v874 = vld [vmem:[%s728 + $0x3d0] sm:$0xff]
        %v875 = vld [vmem:[%s728 + $0x3d8] sm:$0xff]
        %v876 = vld [vmem:[%s728 + $0x3e0] sm:$0xff]
        %v877 = vld [vmem:[%s728 + $0x3e8] sm:$0xff]
        %v878 = vld [vmem:[%s728 + $0x3f0] sm:$0xff]
        %v879 = vld [vmem:[%s728 + $0x3f8] sm:$0xff]
        %v880 = vld [vmem:[%s728 + $0x400] sm:$0xff]
        %v881 = vld [vmem:[%s728 + $0x408] sm:$0xff]
        %v882 = vld [vmem:[%s728 + $0x410] sm:$0xff]
        %v883 = vld [vmem:[%s728 + $0x418] sm:$0xff]
        %v884 = vld [vmem:[%s728 + $0x420] sm:$0xff]
        %v885 = vld [vmem:[%s728 + $0x428] sm:$0xff]
        %v886 = vld [vmem:[%s728 + $0x430] sm:$0xff]
        %v887 = vld [vmem:[%s728 + $0x438] sm:$0xff]
        %v888 = vld [vmem:[%s728 + $0x440] sm:$0xff]
        %v889 = vld [vmem:[%s728 + $0x448] sm:$0xff]
        %v890 = vld [vmem:[%s728 + $0x450] sm:$0xff]
        %v891 = vld [vmem:[%s728 + $0x458] sm:$0xff]
        %v892 = vld [vmem:[%s728 + $0x460] sm:$0xff]
        %v893 = vld [vmem:[%s728 + $0x468] sm:$0xff]
        %v894 = vld [vmem:[%s728 + $0x470] sm:$0xff]
        %v895 = vld [vmem:[%s728 + $0x478] sm:$0xff]
        %v896 = vld [vmem:[%s728 + $0x480] sm:$0xff]
        %v897 = vld [vmem:[%s728 + $0x488] sm:$0xff]
        %v898 = vld [vmem:[%s728 + $0x490] sm:$0xff]
        %v899 = vld [vmem:[%s728 + $0x498] sm:$0xff]
        %v900 = vld [vmem:[%s728 + $0x4a0] sm:$0xff]
        %v901 = vld [vmem:[%s728 + $0x4a8] sm:$0xff]
        %v902 = vld [vmem:[%s728 + $0x4b0] sm:$0xff]
        %v903 = vld [vmem:[%s728 + $0x4b8] sm:$0xff]
        %v904 = vld [vmem:[%s728 + $0x4c0] sm:$0xff]
        %v905 = vld [vmem:[%s728 + $0x4c8] sm:$0xff]
        %v906 = vld [vmem:[%s728 + $0x4d0] sm:$0xff]
        %v907 = vld [vmem:[%s728 + $0x4d8] sm:$0xff]
        %v908 = vld [vmem:[%s728 + $0x4e0] sm:$0xff]
        %v909 = vld [vmem:[%s728 + $0x4e8] sm:$0xff]
        %v910 = vld [vmem:[%s728 + $0x4f0] sm:$0xff]
        %v911 = vld [vmem:[%s728 + $0x4f8] sm:$0xff]
        %v912 = vld [vmem:[%s728 + $0x500] sm:$0xff]
        %v913 = vld [vmem:[%s728 + $0x508] sm:$0xff]
        %v914 = vld [vmem:[%s728 + $0x510] sm:$0xff]
        %v915 = vld [vmem:[%s728 + $0x518] sm:$0xff]
        %v916 = vld [vmem:[%s728 + $0x520] sm:$0xff]
        %v917 = vld [vmem:[%s728 + $0x528] sm:$0xff]
        %v918 = vld [vmem:[%s728 + $0x530] sm:$0xff]
        %v919 = vld [vmem:[%s728 + $0x538] sm:$0xff]
        %v920 = vld [vmem:[%s728 + $0x540] sm:$0xff]
        %v921 = vld [vmem:[%s728 + $0x548] sm:$0xff]
        %v922 = vld [vmem:[%s728 + $0x550] sm:$0xff]
        %v923 = vld [vmem:[%s728 + $0x558] sm:$0xff]
        %v924 = vld [vmem:[%s728 + $0x560] sm:$0xff]
        %v925 = vld [vmem:[%s728 + $0x568] sm:$0xff]
        %v926 = vld [vmem:[%s728 + $0x570] sm:$0xff]
        %v927 = vld [vmem:[%s728 + $0x578] sm:$0xff]
        %v928 = vld [vmem:[%s728 + $0x580] sm:$0xff]
        %v929 = vld [vmem:[%s728 + $0x588] sm:$0xff]
        %v930 = vld [vmem:[%s728 + $0x590] sm:$0xff]
        %v931 = vld [vmem:[%s728 + $0x598] sm:$0xff]
        %v932 = vld [vmem:[%s728 + $0x5a0] sm:$0xff]
        %v933 = vld [vmem:[%s728 + $0x5a8] sm:$0xff]
        %v934 = vld [vmem:[%s728 + $0x5b0] sm:$0xff]
        %v935 = vld [vmem:[%s728 + $0x5b8] sm:$0xff]
        %v936 = vld [vmem:[%s728 + $0x5c0] sm:$0xff]
        %v937 = vld [vmem:[%s728 + $0x5c8] sm:$0xff]
        %v938 = vld [vmem:[%s728 + $0x5d0] sm:$0xff]
        %v939 = vld [vmem:[%s728 + $0x5d8] sm:$0xff]
        %v940 = vld [vmem:[%s728 + $0x5e0] sm:$0xff]
        %v941 = vld [vmem:[%s728 + $0x5e8] sm:$0xff]
        %v942 = vld [vmem:[%s728 + $0x5f0] sm:$0xff]
        %v943 = vld [vmem:[%s728 + $0x5f8] sm:$0xff]
        %v944 = vld [vmem:[%s728 + $0x600] sm:$0xff]
        %v945 = vld [vmem:[%s728 + $0x608] sm:$0xff]
        %v946 = vld [vmem:[%s728 + $0x610] sm:$0xff]
        %v947 = vld [vmem:[%s728 + $0x618] sm:$0xff]
        %v948 = vld [vmem:[%s728 + $0x620] sm:$0xff]
        %v949 = vld [vmem:[%s728 + $0x628] sm:$0xff]
        %v950 = vld [vmem:[%s728 + $0x630] sm:$0xff]
        %v951 = vld [vmem:[%s728 + $0x638] sm:$0xff]
        %v952 = vld [vmem:[%s728 + $0x640] sm:$0xff]
        %v953 = vld [vmem:[%s728 + $0x648] sm:$0xff]
        %v954 = vld [vmem:[%s728 + $0x650] sm:$0xff]
        %v955 = vld [vmem:[%s728 + $0x658] sm:$0xff]
        %v956 = vld [vmem:[%s728 + $0x660] sm:$0xff]
        %v957 = vld [vmem:[%s728 + $0x668] sm:$0xff]
        %v958 = vld [vmem:[%s728 + $0x670] sm:$0xff]
        %v959 = vld [vmem:[%s728 + $0x678] sm:$0xff]
        %v960 = vld [vmem:[%s728 + $0x680] sm:$0xff]
        %v961 = vld [vmem:[%s728 + $0x688] sm:$0xff]
        %v962 = vld [vmem:[%s728 + $0x690] sm:$0xff]
        %v963 = vld [vmem:[%s728 + $0x698] sm:$0xff]
        %v964 = vld [vmem:[%s728 + $0x6a0] sm:$0xff]
        %v965 = vld [vmem:[%s728 + $0x6a8] sm:$0xff]
        %v966 = vld [vmem:[%s728 + $0x6b0] sm:$0xff]
        %v967 = vld [vmem:[%s728 + $0x6b8] sm:$0xff]
        %v968 = vld [vmem:[%s728 + $0x6c0] sm:$0xff]
        %v969 = vld [vmem:[%s728 + $0x6c8] sm:$0xff]
        %v970 = vld [vmem:[%s728 + $0x6d0] sm:$0xff]
        %v971 = vld [vmem:[%s728 + $0x6d8] sm:$0xff]
        %v972 = vld [vmem:[%s728 + $0x6e0] sm:$0xff]
        %v973 = vld [vmem:[%s728 + $0x6e8] sm:$0xff]
        %v974 = vld [vmem:[%s728 + $0x6f0] sm:$0xff]
        %v975 = vld [vmem:[%s728 + $0x6f8] sm:$0xff]
        %v976 = vld [vmem:[%s728 + $0x700] sm:$0xff]
        %v977 = vld [vmem:[%s728 + $0x708] sm:$0xff]
        %v978 = vld [vmem:[%s728 + $0x710] sm:$0xff]
        %v979 = vld [vmem:[%s728 + $0x718] sm:$0xff]
        %v980 = vld [vmem:[%s728 + $0x720] sm:$0xff]
        %v981 = vld [vmem:[%s728 + $0x728] sm:$0xff]
        %v982 = vld [vmem:[%s728 + $0x730] sm:$0xff]
        %v983 = vld [vmem:[%s728 + $0x738] sm:$0xff]
        %v984 = vld [vmem:[%s728 + $0x740] sm:$0xff]
        %v985 = vld [vmem:[%s728 + $0x748] sm:$0xff]
        %v986 = vld [vmem:[%s728 + $0x750] sm:$0xff]
        %v987 = vld [vmem:[%s728 + $0x758] sm:$0xff]
        %v988 = vld [vmem:[%s728 + $0x760] sm:$0xff]
        %v989 = vld [vmem:[%s728 + $0x768] sm:$0xff]
        %v990 = vld [vmem:[%s728 + $0x770] sm:$0xff]
        %v991 = vld [vmem:[%s728 + $0x778] sm:$0xff]
        %v992 = vld [vmem:[%s728 + $0x780] sm:$0xff]
        %v993 = vld [vmem:[%s728 + $0x788] sm:$0xff]
        %v994 = vld [vmem:[%s728 + $0x790] sm:$0xff]
        %v995 = vld [vmem:[%s728 + $0x798] sm:$0xff]
        %v996 = vld [vmem:[%s728 + $0x7a0] sm:$0xff]
        %v997 = vld [vmem:[%s728 + $0x7a8] sm:$0xff]
        %v998 = vld [vmem:[%s728 + $0x7b0] sm:$0xff]
        %v999 = vld [vmem:[%s728 + $0x7b8] sm:$0xff]
        %v1000 = vld [vmem:[%s728 + $0x7c0] sm:$0xff]
        %v1001 = vld [vmem:[%s728 + $0x7c8] sm:$0xff]
        %v1002 = vld [vmem:[%s728 + $0x7d0] sm:$0xff]
        %v1003 = vld [vmem:[%s728 + $0x7d8] sm:$0xff]
        %v1004 = vld [vmem:[%s728 + $0x7e0] sm:$0xff]
        %v1005 = vld [vmem:[%s728 + $0x7e8] sm:$0xff]
        %v1006 = vld [vmem:[%s728 + $0x7f0] sm:$0xff]
        %v1007 = vld [vmem:[%s728 + $0x7f8] sm:$0xff]
        %v1008 = vld [vmem:[%s728 + $0x800] sm:$0xff]
        %v1009 = vld [vmem:[%s728 + $0x808] sm:$0xff]
        %v1010 = vld [vmem:[%s728 + $0x810] sm:$0xff]
        %v1011 = vld [vmem:[%s728 + $0x818] sm:$0xff]
        %v1012 = vld [vmem:[%s728 + $0x820] sm:$0xff]
        %v1013 = vld [vmem:[%s728 + $0x828] sm:$0xff]
        %v1014 = vld [vmem:[%s728 + $0x830] sm:$0xff]
        %v1015 = vld [vmem:[%s728 + $0x838] sm:$0xff]
        %v1016 = vld [vmem:[%s728 + $0x840] sm:$0xff]
        %v1017 = vld [vmem:[%s728 + $0x848] sm:$0xff]
        %v1018 = vld [vmem:[%s728 + $0x850] sm:$0xff]
        %v1019 = vld [vmem:[%s728 + $0x858] sm:$0xff]
        %v1020 = vld [vmem:[%s728 + $0x860] sm:$0xff]
        %v1021 = vld [vmem:[%s728 + $0x868] sm:$0xff]
        %v1022 = vld [vmem:[%s728 + $0x870] sm:$0xff]
        %v1023 = vld [vmem:[%s728 + $0x878] sm:$0xff]
        %v1024 = vld [vmem:[%s728 + $0x880] sm:$0xff]
        %v1025 = vld [vmem:[%s728 + $0x888] sm:$0xff]
        %v1026 = vld [vmem:[%s728 + $0x890] sm:$0xff]
        %v1027 = vld [vmem:[%s728 + $0x898] sm:$0xff]
        %v1028 = vld [vmem:[%s728 + $0x8a0] sm:$0xff]
        %v1029 = vld [vmem:[%s728 + $0x8a8] sm:$0xff]
        %v1030 = vld [vmem:[%s728 + $0x8b0] sm:$0xff]
        %v1031 = vld [vmem:[%s728 + $0x8b8] sm:$0xff]
        %v1032 = vld [vmem:[%s728 + $0x8c0] sm:$0xff]
        %v1033 = vld [vmem:[%s728 + $0x8c8] sm:$0xff]
        %v1034 = vld [vmem:[%s728 + $0x8d0] sm:$0xff]
        %v1035 = vld [vmem:[%s728 + $0x8d8] sm:$0xff]
        %v1036 = vld [vmem:[%s728 + $0x8e0] sm:$0xff]
        %v1037 = vld [vmem:[%s728 + $0x8e8] sm:$0xff]
        %v1038 = vld [vmem:[%s728 + $0x8f0] sm:$0xff]
        %v1039 = vld [vmem:[%s728 + $0x8f8] sm:$0xff]
        %v1040 = vld [vmem:[%s728 + $0x900] sm:$0xff]
        %v1041 = vld [vmem:[%s728 + $0x908] sm:$0xff]
        %v1042 = vld [vmem:[%s728 + $0x910] sm:$0xff]
        %v1043 = vld [vmem:[%s728 + $0x918] sm:$0xff]
        %v1044 = vld [vmem:[%s728 + $0x920] sm:$0xff]
        %v1045 = vld [vmem:[%s728 + $0x928] sm:$0xff]
        %v1046 = vld [vmem:[%s728 + $0x930] sm:$0xff]
        %v1047 = vld [vmem:[%s728 + $0x938] sm:$0xff]
        %v1048 = vld [vmem:[%s728 + $0x940] sm:$0xff]
        %v1049 = vld [vmem:[%s728 + $0x948] sm:$0xff]
        %v1050 = vld [vmem:[%s728 + $0x950] sm:$0xff]
        %v1051 = vld [vmem:[%s728 + $0x958] sm:$0xff]
        %v1052 = vld [vmem:[%s728 + $0x960] sm:$0xff]
        %v1053 = vld [vmem:[%s728 + $0x968] sm:$0xff]
        %v1054 = vld [vmem:[%s728 + $0x970] sm:$0xff]
        %v1055 = vld [vmem:[%s728 + $0x978] sm:$0xff]
        %v1056 = vld [vmem:[%s728 + $0x980] sm:$0xff]
        %v1057 = vld [vmem:[%s728 + $0x988] sm:$0xff]
        %v1058 = vld [vmem:[%s728 + $0x990] sm:$0xff]
        %v1059 = vld [vmem:[%s728 + $0x998] sm:$0xff]
        %v1060 = vld [vmem:[%s728 + $0x9a0] sm:$0xff]
        %v1061 = vld [vmem:[%s728 + $0x9a8] sm:$0xff]
        %v1062 = vld [vmem:[%s728 + $0x9b0] sm:$0xff]
        %v1063 = vld [vmem:[%s728 + $0x9b8] sm:$0xff]
        %v1064 = vld [vmem:[%s728 + $0x9c0] sm:$0xff]
        %v1065 = vld [vmem:[%s728 + $0x9c8] sm:$0xff]
        %v1066 = vld [vmem:[%s728 + $0x9d0] sm:$0xff]
        %v1067 = vld [vmem:[%s728 + $0x9d8] sm:$0xff]
        %v1068 = vld [vmem:[%s728 + $0x9e0] sm:$0xff]
        %v1069 = vld [vmem:[%s728 + $0x9e8] sm:$0xff]
        %v1070 = vld [vmem:[%s728 + $0x9f0] sm:$0xff]
        %v1071 = vld [vmem:[%s728 + $0x9f8] sm:$0xff]
        %v1072 = vld [vmem:[%s728 + $0xa00] sm:$0xff]
        %v1073 = vld [vmem:[%s728 + $0xa08] sm:$0xff]
        %v1074 = vld [vmem:[%s728 + $0xa10] sm:$0xff]
        %v1075 = vld [vmem:[%s728 + $0xa18] sm:$0xff]
        %v1076 = vld [vmem:[%s728 + $0xa20] sm:$0xff]
        %v1077 = vld [vmem:[%s728 + $0xa28] sm:$0xff]
        %v1078 = vld [vmem:[%s728 + $0xa30] sm:$0xff]
        %v1079 = vld [vmem:[%s728 + $0xa38] sm:$0xff]
        %v1080 = vld [vmem:[%s728 + $0xa40] sm:$0xff]
        %v1081 = vld [vmem:[%s728 + $0xa48] sm:$0xff]
        %v1082 = vld [vmem:[%s728 + $0xa50] sm:$0xff]
        %v1083 = vld [vmem:[%s728 + $0xa58] sm:$0xff]
        %v1084 = vld [vmem:[%s728 + $0xa60] sm:$0xff]
        %v1085 = vld [vmem:[%s728 + $0xa68] sm:$0xff]
        %v1086 = vld [vmem:[%s728 + $0xa70] sm:$0xff]
        %v1087 = vld [vmem:[%s728 + $0xa78] sm:$0xff]
        %v1088 = vld [vmem:[%s728 + $0xa80] sm:$0xff]
        %v1089 = vld [vmem:[%s728 + $0xa88] sm:$0xff]
        %v1090 = vld [vmem:[%s728 + $0xa90] sm:$0xff]
        %v1091 = vld [vmem:[%s728 + $0xa98] sm:$0xff]
        %v1092 = vld [vmem:[%s728 + $0xaa0] sm:$0xff]
        %v1093 = vld [vmem:[%s728 + $0xaa8] sm:$0xff]
        %v1094 = vld [vmem:[%s728 + $0xab0] sm:$0xff]
        %v1095 = vld [vmem:[%s728 + $0xab8] sm:$0xff]
        %v1096 = vld [vmem:[%s728 + $0xac0] sm:$0xff]
        %v1097 = vld [vmem:[%s728 + $0xac8] sm:$0xff]
        %v1098 = vld [vmem:[%s728 + $0xad0] sm:$0xff]
        %v1099 = vld [vmem:[%s728 + $0xad8] sm:$0xff]
        %v1100 = vld [vmem:[%s728 + $0xae0] sm:$0xff]
        %v1101 = vld [vmem:[%s728 + $0xae8] sm:$0xff]
        %v1102 = vld [vmem:[%s728 + $0xaf0] sm:$0xff]
        %v1103 = vld [vmem:[%s728 + $0xaf8] sm:$0xff]
        %v1104 = vld [vmem:[%s728 + $0xb00] sm:$0xff]
        %v1105 = vld [vmem:[%s728 + $0xb08] sm:$0xff]
        %v1106 = vld [vmem:[%s728 + $0xb10] sm:$0xff]
        %v1107 = vld [vmem:[%s728 + $0xb18] sm:$0xff]
        %v1108 = vld [vmem:[%s728 + $0xb20] sm:$0xff]
        %v1109 = vld [vmem:[%s728 + $0xb28] sm:$0xff]
        %v1110 = vld [vmem:[%s728 + $0xb30] sm:$0xff]
        %v1111 = vld [vmem:[%s728 + $0xb38] sm:$0xff]
        %v1112 = vld [vmem:[%s728 + $0xb40] sm:$0xff]
        %v1113 = vld [vmem:[%s728 + $0xb48] sm:$0xff]
        %v1114 = vld [vmem:[%s728 + $0xb50] sm:$0xff]
        %v1115 = vld [vmem:[%s728 + $0xb58] sm:$0xff]
        %v1116 = vld [vmem:[%s728 + $0xb60] sm:$0xff]
        %v1117 = vld [vmem:[%s728 + $0xb68] sm:$0xff]
        %v1118 = vld [vmem:[%s728 + $0xb70] sm:$0xff]
        %v1119 = vld [vmem:[%s728 + $0xb78] sm:$0xff]
        %v1120 = vld [vmem:[%s728 + $0xb80] sm:$0xff]
        %v1121 = vld [vmem:[%s728 + $0xb88] sm:$0xff]
        %v1122 = vld [vmem:[%s728 + $0xb90] sm:$0xff]
        %v1123 = vld [vmem:[%s728 + $0xb98] sm:$0xff]
        %v1124 = vld [vmem:[%s728 + $0xba0] sm:$0xff]
        %v1125 = vld [vmem:[%s728 + $0xba8] sm:$0xff]
        %v1126 = vld [vmem:[%s728 + $0xbb0] sm:$0xff]
        %v1127 = vld [vmem:[%s728 + $0xbb8] sm:$0xff]
        %v1128 = vld [vmem:[%s728 + $0xbc0] sm:$0xff]
        %v1129 = vld [vmem:[%s728 + $0xbc8] sm:$0xff]
        %v1130 = vld [vmem:[%s728 + $0xbd0] sm:$0xff]
        %v1131 = vld [vmem:[%s728 + $0xbd8] sm:$0xff]
        %v1132 = vld [vmem:[%s728 + $0xbe0] sm:$0xff]
        %v1133 = vld [vmem:[%s728 + $0xbe8] sm:$0xff]
        %v1134 = vld [vmem:[%s728 + $0xbf0] sm:$0xff]
        %v1135 = vld [vmem:[%s728 + $0xbf8] sm:$0xff]
        %v1136 = vld [vmem:[%s728 + $0xc00] sm:$0xff]
        %v1137 = vld [vmem:[%s728 + $0xc08] sm:$0xff]
        %v1138 = vld [vmem:[%s728 + $0xc10] sm:$0xff]
        %v1139 = vld [vmem:[%s728 + $0xc18] sm:$0xff]
        %v1140 = vld [vmem:[%s728 + $0xc20] sm:$0xff]
        %v1141 = vld [vmem:[%s728 + $0xc28] sm:$0xff]
        %v1142 = vld [vmem:[%s728 + $0xc30] sm:$0xff]
        %v1143 = vld [vmem:[%s728 + $0xc38] sm:$0xff]
        %v1144 = vld [vmem:[%s728 + $0xc40] sm:$0xff]
        %v1145 = vld [vmem:[%s728 + $0xc48] sm:$0xff]
        %v1146 = vld [vmem:[%s728 + $0xc50] sm:$0xff]
        %v1147 = vld [vmem:[%s728 + $0xc58] sm:$0xff]
        %v1148 = vld [vmem:[%s728 + $0xc60] sm:$0xff]
        %v1149 = vld [vmem:[%s728 + $0xc68] sm:$0xff]
        %v1150 = vld [vmem:[%s728 + $0xc70] sm:$0xff]
        %v1151 = vld [vmem:[%s728 + $0xc78] sm:$0xff]
        %v1152 = vld [vmem:[%s728 + $0xc80] sm:$0xff]
        %v1153 = vld [vmem:[%s728 + $0xc88] sm:$0xff]
        %v1154 = vld [vmem:[%s728 + $0xc90] sm:$0xff]
        %v1155 = vld [vmem:[%s728 + $0xc98] sm:$0xff]
        %v1156 = vld [vmem:[%s728 + $0xca0] sm:$0xff]
        %v1157 = vld [vmem:[%s728 + $0xca8] sm:$0xff]
        %v1158 = vld [vmem:[%s728 + $0xcb0] sm:$0xff]
        %v1159 = vld [vmem:[%s728 + $0xcb8] sm:$0xff]
        %v1160 = vld [vmem:[%s728 + $0xcc0] sm:$0xff]
        %v1161 = vld [vmem:[%s728 + $0xcc8] sm:$0xff]
        %v1162 = vld [vmem:[%s728 + $0xcd0] sm:$0xff]
        %v1163 = vld [vmem:[%s728 + $0xcd8] sm:$0xff]
        %v1164 = vld [vmem:[%s728 + $0xce0] sm:$0xff]
        %v1165 = vld [vmem:[%s728 + $0xce8] sm:$0xff]
        %v1166 = vld [vmem:[%s728 + $0xcf0] sm:$0xff]
        %v1167 = vld [vmem:[%s728 + $0xcf8] sm:$0xff]
        %v1168 = vld [vmem:[%s728 + $0xd00] sm:$0xff]
        %v1169 = vld [vmem:[%s728 + $0xd08] sm:$0xff]
        %v1170 = vld [vmem:[%s728 + $0xd10] sm:$0xff]
        %v1171 = vld [vmem:[%s728 + $0xd18] sm:$0xff]
        %v1172 = vld [vmem:[%s728 + $0xd20] sm:$0xff]
        %v1173 = vld [vmem:[%s728 + $0xd28] sm:$0xff]
        %v1174 = vld [vmem:[%s728 + $0xd30] sm:$0xff]
        %v1175 = vld [vmem:[%s728 + $0xd38] sm:$0xff]
        %v1176 = vld [vmem:[%s728 + $0xd40] sm:$0xff]
        %v1177 = vld [vmem:[%s728 + $0xd48] sm:$0xff]
        %v1178 = vld [vmem:[%s728 + $0xd50] sm:$0xff]
        %v1179 = vld [vmem:[%s728 + $0xd58] sm:$0xff]
        %v1180 = vld [vmem:[%s728 + $0xd60] sm:$0xff]
        %v1181 = vld [vmem:[%s728 + $0xd68] sm:$0xff]
        %v1182 = vld [vmem:[%s728 + $0xd70] sm:$0xff]
        %v1183 = vld [vmem:[%s728 + $0xd78] sm:$0xff]
        %v1184 = vld [vmem:[%s728 + $0xd80] sm:$0xff]
        %v1185 = vld [vmem:[%s728 + $0xd88] sm:$0xff]
        %v1186 = vld [vmem:[%s728 + $0xd90] sm:$0xff]
        %v1187 = vld [vmem:[%s728 + $0xd98] sm:$0xff]
        %v1188 = vld [vmem:[%s728 + $0xda0] sm:$0xff]
        %v1189 = vld [vmem:[%s728 + $0xda8] sm:$0xff]
        %v1190 = vld [vmem:[%s728 + $0xdb0] sm:$0xff]
        %v1191 = vld [vmem:[%s728 + $0xdb8] sm:$0xff]
        %v1192 = vld [vmem:[%s728 + $0xdc0] sm:$0xff]
        %v1193 = vld [vmem:[%s728 + $0xdc8] sm:$0xff]
        %v1194 = vld [vmem:[%s728 + $0xdd0] sm:$0xff]
        %v1195 = vld [vmem:[%s728 + $0xdd8] sm:$0xff]
        %v1196 = vld [vmem:[%s728 + $0xde0] sm:$0xff]
        %v1197 = vld [vmem:[%s728 + $0xde8] sm:$0xff]
        %v1198 = vld [vmem:[%s728 + $0xdf0] sm:$0xff]
        %v1199 = vld [vmem:[%s728 + $0xdf8] sm:$0xff]
        %v1200 = vld [vmem:[%s728 + $0xe00] sm:$0xff]
        %v1201 = vld [vmem:[%s728 + $0xe08] sm:$0xff]
        %v1202 = vld [vmem:[%s728 + $0xe10] sm:$0xff]
        %v1203 = vld [vmem:[%s728 + $0xe18] sm:$0xff]
        %v1204 = vld [vmem:[%s728 + $0xe20] sm:$0xff]
        %v1205 = vld [vmem:[%s728 + $0xe28] sm:$0xff]
        %v1206 = vld [vmem:[%s728 + $0xe30] sm:$0xff]
        %v1207 = vld [vmem:[%s728 + $0xe38] sm:$0xff]
        %v1208 = vld [vmem:[%s728 + $0xe40] sm:$0xff]
        %v1209 = vld [vmem:[%s728 + $0xe48] sm:$0xff]
        %v1210 = vld [vmem:[%s728 + $0xe50] sm:$0xff]
        %v1211 = vld [vmem:[%s728 + $0xe58] sm:$0xff]
        %v1212 = vld [vmem:[%s728 + $0xe60] sm:$0xff]
        %v1213 = vld [vmem:[%s728 + $0xe68] sm:$0xff]
        %v1214 = vld [vmem:[%s728 + $0xe70] sm:$0xff]
        %v1215 = vld [vmem:[%s728 + $0xe78] sm:$0xff]
        %v1216 = vld [vmem:[%s728 + $0xe80] sm:$0xff]
        %v1217 = vld [vmem:[%s728 + $0xe88] sm:$0xff]
        %v1218 = vld [vmem:[%s728 + $0xe90] sm:$0xff]
        %v1219 = vld [vmem:[%s728 + $0xe98] sm:$0xff]
        %v1220 = vld [vmem:[%s728 + $0xea0] sm:$0xff]
        %v1221 = vld [vmem:[%s728 + $0xea8] sm:$0xff]
        %v1222 = vld [vmem:[%s728 + $0xeb0] sm:$0xff]
        %v1223 = vld [vmem:[%s728 + $0xeb8] sm:$0xff]
        %v1224 = vld [vmem:[%s728 + $0xec0] sm:$0xff]
        %v1225 = vld [vmem:[%s728 + $0xec8] sm:$0xff]
        %v1226 = vld [vmem:[%s728 + $0xed0] sm:$0xff]
        %v1227 = vld [vmem:[%s728 + $0xed8] sm:$0xff]
        %v1228 = vld [vmem:[%s728 + $0xee0] sm:$0xff]
        %v1229 = vld [vmem:[%s728 + $0xee8] sm:$0xff]
        %v1230 = vld [vmem:[%s728 + $0xef0] sm:$0xff]
        %v1231 = vld [vmem:[%s728 + $0xef8] sm:$0xff]
        %v1232 = vld [vmem:[%s728 + $0xf00] sm:$0xff]
        %v1233 = vld [vmem:[%s728 + $0xf08] sm:$0xff]
        %v1234 = vld [vmem:[%s728 + $0xf10] sm:$0xff]
        %v1235 = vld [vmem:[%s728 + $0xf18] sm:$0xff]
        %v1236 = vld [vmem:[%s728 + $0xf20] sm:$0xff]
        %v1237 = vld [vmem:[%s728 + $0xf28] sm:$0xff]
        %v1238 = vld [vmem:[%s728 + $0xf30] sm:$0xff]
        %v1239 = vld [vmem:[%s728 + $0xf38] sm:$0xff]
        %v1240 = vld [vmem:[%s728 + $0xf40] sm:$0xff]
        %v1241 = vld [vmem:[%s728 + $0xf48] sm:$0xff]
        %v1242 = vld [vmem:[%s728 + $0xf50] sm:$0xff]
        %v1243 = vld [vmem:[%s728 + $0xf58] sm:$0xff]
        %v1244 = vld [vmem:[%s728 + $0xf60] sm:$0xff]
        %v1245 = vld [vmem:[%s728 + $0xf68] sm:$0xff]
        %v1246 = vld [vmem:[%s728 + $0xf70] sm:$0xff]
        %v1247 = vld [vmem:[%s728 + $0xf78] sm:$0xff]
        %v1248 = vld [vmem:[%s728 + $0xf80] sm:$0xff]
        %v1249 = vld [vmem:[%s728 + $0xf88] sm:$0xff]
        %v1250 = vld [vmem:[%s728 + $0xf90] sm:$0xff]
        %v1251 = vld [vmem:[%s728 + $0xf98] sm:$0xff]
        %v1252 = vld [vmem:[%s728 + $0xfa0] sm:$0xff]
        %v1253 = vld [vmem:[%s728 + $0xfa8] sm:$0xff]
        %v1254 = vld [vmem:[%s728 + $0xfb0] sm:$0xff]
        %v1255 = vld [vmem:[%s728 + $0xfb8] sm:$0xff]
        %v1256 = vld [vmem:[%s728 + $0xfc0] sm:$0xff]
        %v1257 = vld [vmem:[%s728 + $0xfc8] sm:$0xff]
        %v1258 = vld [vmem:[%s728 + $0xfd0] sm:$0xff]
        %v1259 = vld [vmem:[%s728 + $0xfd8] sm:$0xff]
        %v1260 = vld [vmem:[%s728 + $0xfe0] sm:$0xff]
        %v1261 = vld [vmem:[%s728 + $0xfe8] sm:$0xff]
        %v1262 = vld [vmem:[%s728 + $0xff0] sm:$0xff]
        %v1263 = vld [vmem:[%s728 + $0xff8] sm:$0xff]
        %v1264 = vld [vmem:[%s728 + $0x1000] sm:$0xff]
        %v1265 = vld [vmem:[%s728 + $0x1008] sm:$0xff]
        %v1266 = vld [vmem:[%s728 + $0x1010] sm:$0xff]
        %v1267 = vld [vmem:[%s728 + $0x1018] sm:$0xff]
        %v1268 = vld [vmem:[%s728 + $0x1020] sm:$0xff]
        %v1269 = vld [vmem:[%s728 + $0x1028] sm:$0xff]
        %v1270 = vld [vmem:[%s728 + $0x1030] sm:$0xff]
        %v1271 = vld [vmem:[%s728 + $0x1038] sm:$0xff]
        %v1272 = vld [vmem:[%s728 + $0x1040] sm:$0xff]
        %v1273 = vld [vmem:[%s728 + $0x1048] sm:$0xff]
        %v1274 = vld [vmem:[%s728 + $0x1050] sm:$0xff]
        %v1275 = vld [vmem:[%s728 + $0x1058] sm:$0xff]
        %v1276 = vld [vmem:[%s728 + $0x1060] sm:$0xff]
        %v1277 = vld [vmem:[%s728 + $0x1068] sm:$0xff]
        %v1278 = vld [vmem:[%s728 + $0x1070] sm:$0xff]
        %v1279 = vld [vmem:[%s728 + $0x1078] sm:$0xff]
        %v1280 = vld [vmem:[%s728 + $0x1080] sm:$0xff]
        %v1281 = vld [vmem:[%s728 + $0x1088] sm:$0xff]
        %v1282 = vld [vmem:[%s728 + $0x1090] sm:$0xff]
        %v1283 = vld [vmem:[%s728 + $0x1098] sm:$0xff]
        %v1284 = vld [vmem:[%s728 + $0x10a0] sm:$0xff]
        %v1285 = vld [vmem:[%s728 + $0x10a8] sm:$0xff]
        %v1286 = vld [vmem:[%s728 + $0x10b0] sm:$0xff]
        %v1287 = vld [vmem:[%s728 + $0x10b8] sm:$0xff]
        %v1288 = vld [vmem:[%s728 + $0x10c0] sm:$0xff]
        %v1289 = vld [vmem:[%s728 + $0x10c8] sm:$0xff]
        %v1290 = vld [vmem:[%s728 + $0x10d0] sm:$0xff]
        %v1291 = vld [vmem:[%s728 + $0x10d8] sm:$0xff]
        %v1292 = vld [vmem:[%s728 + $0x10e0] sm:$0xff]
        %v1293 = vld [vmem:[%s728 + $0x10e8] sm:$0xff]
        %v1294 = vld [vmem:[%s728 + $0x10f0] sm:$0xff]
        %v1295 = vld [vmem:[%s728 + $0x10f8] sm:$0xff]
        %v1296 = vld [vmem:[%s728 + $0x1100] sm:$0xff]
        %v1297 = vld [vmem:[%s728 + $0x1108] sm:$0xff]
        %v1298 = vld [vmem:[%s728 + $0x1110] sm:$0xff]
        %v1299 = vld [vmem:[%s728 + $0x1118] sm:$0xff]
        %v1300 = vld [vmem:[%s728 + $0x1120] sm:$0xff]
        %v1301 = vld [vmem:[%s728 + $0x1128] sm:$0xff]
        %v1302 = vld [vmem:[%s728 + $0x1130] sm:$0xff]
        %v1303 = vld [vmem:[%s728 + $0x1138] sm:$0xff]
        %v1304 = vld [vmem:[%s728 + $0x1140] sm:$0xff]
        %v1305 = vld [vmem:[%s728 + $0x1148] sm:$0xff]
        %v1306 = vld [vmem:[%s728 + $0x1150] sm:$0xff]
        %v1307 = vld [vmem:[%s728 + $0x1158] sm:$0xff]
        %v1308 = vld [vmem:[%s728 + $0x1160] sm:$0xff]
        %v1309 = vld [vmem:[%s728 + $0x1168] sm:$0xff]
        %v1310 = vld [vmem:[%s728 + $0x1170] sm:$0xff]
        %v1311 = vld [vmem:[%s728 + $0x1178] sm:$0xff]
        %v1312 = vld [vmem:[%s728 + $0x1180] sm:$0xff]
        %v1313 = vld [vmem:[%s728 + $0x1188] sm:$0xff]
        %v1314 = vld [vmem:[%s728 + $0x1190] sm:$0xff]
        %v1315 = vld [vmem:[%s728 + $0x1198] sm:$0xff]
        %v1316 = vld [vmem:[%s728 + $0x11a0] sm:$0xff]
        %v1317 = vld [vmem:[%s728 + $0x11a8] sm:$0xff]
        %v1318 = vld [vmem:[%s728 + $0x11b0] sm:$0xff]
        %v1319 = vld [vmem:[%s728 + $0x11b8] sm:$0xff]
        %v1320 = vld [vmem:[%s728 + $0x11c0] sm:$0xff]
        %v1321 = vld [vmem:[%s728 + $0x11c8] sm:$0xff]
        %v1322 = vld [vmem:[%s728 + $0x11d0] sm:$0xff]
        %v1323 = vld [vmem:[%s728 + $0x11d8] sm:$0xff]
        %v1324 = vld [vmem:[%s728 + $0x11e0] sm:$0xff]
        %v1325 = vld [vmem:[%s728 + $0x11e8] sm:$0xff]
        %v1326 = vld [vmem:[%s728 + $0x11f0] sm:$0xff]
        %v1327 = vld [vmem:[%s728 + $0x11f8] sm:$0xff]
        %v1328 = vld [vmem:[%s728 + $0x1200] sm:$0xff]
        %v1329 = vld [vmem:[%s728 + $0x1208] sm:$0xff]
        %v1330 = vld [vmem:[%s728 + $0x1210] sm:$0xff]
        %v1331 = vld [vmem:[%s728 + $0x1218] sm:$0xff]
        %v1332 = vld [vmem:[%s728 + $0x1220] sm:$0xff]
        %v1333 = vld [vmem:[%s728 + $0x1228] sm:$0xff]
        %v1334 = vld [vmem:[%s728 + $0x1230] sm:$0xff]
        %v1335 = vld [vmem:[%s728 + $0x1238] sm:$0xff]
        %v1336 = vld [vmem:[%s728 + $0x1240] sm:$0xff]
        %v1337 = vld [vmem:[%s728 + $0x1248] sm:$0xff]
        %v1338 = vld [vmem:[%s728 + $0x1250] sm:$0xff]
        %v1339 = vld [vmem:[%s728 + $0x1258] sm:$0xff]
        %v1340 = vld [vmem:[%s728 + $0x1260] sm:$0xff]
        %v1341 = vld [vmem:[%s728 + $0x1268] sm:$0xff]
        %v1342 = vld [vmem:[%s728 + $0x1270] sm:$0xff]
        %v1343 = vld [vmem:[%s728 + $0x1278] sm:$0xff]
        %v1344 = vld [vmem:[%s728 + $0x1280] sm:$0xff]
        %v1345 = vld [vmem:[%s728 + $0x1288] sm:$0xff]
        %v1346 = vld [vmem:[%s728 + $0x1290] sm:$0xff]
        %v1347 = vld [vmem:[%s728 + $0x1298] sm:$0xff]
        %v1348 = vld [vmem:[%s728 + $0x12a0] sm:$0xff]
        %v1349 = vld [vmem:[%s728 + $0x12a8] sm:$0xff]
        %v1350 = vld [vmem:[%s728 + $0x12b0] sm:$0xff]
        %v1351 = vld [vmem:[%s728 + $0x12b8] sm:$0xff]
        %v1352 = vld [vmem:[%s728 + $0x12c0] sm:$0xff]
        %v1353 = vld [vmem:[%s728 + $0x12c8] sm:$0xff]
        %v1354 = vld [vmem:[%s728 + $0x12d0] sm:$0xff]
        %v1355 = vld [vmem:[%s728 + $0x12d8] sm:$0xff]
        %v1356 = vld [vmem:[%s728 + $0x12e0] sm:$0xff]
        %v1357 = vld [vmem:[%s728 + $0x12e8] sm:$0xff]
        %v1358 = vld [vmem:[%s728 + $0x12f0] sm:$0xff]
        %v1359 = vld [vmem:[%s728 + $0x12f8] sm:$0xff]
        %v1360 = vld [vmem:[%s728 + $0x1300] sm:$0xff]
        %v1361 = vld [vmem:[%s728 + $0x1308] sm:$0xff]
        %v1362 = vld [vmem:[%s728 + $0x1310] sm:$0xff]
        %v1363 = vld [vmem:[%s728 + $0x1318] sm:$0xff]
        %v1364 = vld [vmem:[%s728 + $0x1320] sm:$0xff]
        %v1365 = vld [vmem:[%s728 + $0x1328] sm:$0xff]
        %v1366 = vld [vmem:[%s728 + $0x1330] sm:$0xff]
        %v1367 = vld [vmem:[%s728 + $0x1338] sm:$0xff]
        %v1368 = vld [vmem:[%s728 + $0x1340] sm:$0xff]
        %v1369 = vld [vmem:[%s728 + $0x1348] sm:$0xff]
        %v1370 = vld [vmem:[%s728 + $0x1350] sm:$0xff]
        %v1371 = vld [vmem:[%s728 + $0x1358] sm:$0xff]
        %v1372 = vld [vmem:[%s728 + $0x1360] sm:$0xff]
        %v1373 = vld [vmem:[%s728 + $0x1368] sm:$0xff]
        %v1374 = vld [vmem:[%s728 + $0x1370] sm:$0xff]
        %v1375 = vld [vmem:[%s728 + $0x1378] sm:$0xff]
        %v1376 = vld [vmem:[%s728 + $0x1380] sm:$0xff]
        %v1377 = vld [vmem:[%s728 + $0x1388] sm:$0xff]
        %v1378 = vld [vmem:[%s728 + $0x1390] sm:$0xff]
        %v1379 = vld [vmem:[%s728 + $0x1398] sm:$0xff]
        %v1380 = vld [vmem:[%s728 + $0x13a0] sm:$0xff]
        %v1381 = vld [vmem:[%s728 + $0x13a8] sm:$0xff]
        %v1382 = vld [vmem:[%s728 + $0x13b0] sm:$0xff]
        %v1383 = vld [vmem:[%s728 + $0x13b8] sm:$0xff]
        %v1384 = vld [vmem:[%s728 + $0x13c0] sm:$0xff]
        %v1385 = vld [vmem:[%s728 + $0x13c8] sm:$0xff]
        %v1386 = vld [vmem:[%s728 + $0x13d0] sm:$0xff]
        %v1387 = vld [vmem:[%s728 + $0x13d8] sm:$0xff]
        %v1388 = vld [vmem:[%s728 + $0x13e0] sm:$0xff]
        %v1389 = vld [vmem:[%s728 + $0x13e8] sm:$0xff]
        %v1390 = vld [vmem:[%s728 + $0x13f0] sm:$0xff]
        %v1391 = vld [vmem:[%s728 + $0x13f8] sm:$0xff]
        %v1392 = vld [vmem:[%s728 + $0x1400] sm:$0xff]
        %v1393 = vld [vmem:[%s728 + $0x1408] sm:$0xff]
        %v1394 = vld [vmem:[%s728 + $0x1410] sm:$0xff]
        %v1395 = vld [vmem:[%s728 + $0x1418] sm:$0xff]
        %v1396 = vld [vmem:[%s728 + $0x1420] sm:$0xff]
        %v1397 = vld [vmem:[%s728 + $0x1428] sm:$0xff]
        %v1398 = vld [vmem:[%s728 + $0x1430] sm:$0xff]
        %v1399 = vld [vmem:[%s728 + $0x1438] sm:$0xff]
        %v1400 = vld [vmem:[%s728 + $0x1440] sm:$0xff]
        %v1401 = vld [vmem:[%s728 + $0x1448] sm:$0xff]
        %v1402 = vld [vmem:[%s728 + $0x1450] sm:$0xff]
        %v1403 = vld [vmem:[%s728 + $0x1458] sm:$0xff]
        %v1404 = vld [vmem:[%s728 + $0x1460] sm:$0xff]
        %v1405 = vld [vmem:[%s728 + $0x1468] sm:$0xff]
        %v1406 = vld [vmem:[%s728 + $0x1470] sm:$0xff]
        %v1407 = vld [vmem:[%s728 + $0x1478] sm:$0xff]
        %v1408 = vld [vmem:[%s728 + $0x1480] sm:$0xff]
        %v1409 = vld [vmem:[%s728 + $0x1488] sm:$0xff]
        %v1410 = vld [vmem:[%s728 + $0x1490] sm:$0xff]
        %v1411 = vld [vmem:[%s728 + $0x1498] sm:$0xff]
        %v1412 = vld [vmem:[%s728 + $0x14a0] sm:$0xff]
        %v1413 = vld [vmem:[%s728 + $0x14a8] sm:$0xff]
        %v1414 = vld [vmem:[%s728 + $0x14b0] sm:$0xff]
        %v1415 = vld [vmem:[%s728 + $0x14b8] sm:$0xff]
        %v1416 = vld [vmem:[%s728 + $0x14c0] sm:$0xff]
        %v1417 = vld [vmem:[%s728 + $0x14c8] sm:$0xff]
        %v1418 = vld [vmem:[%s728 + $0x14d0] sm:$0xff]
        %v1419 = vld [vmem:[%s728 + $0x14d8] sm:$0xff]
        %v1420 = vld [vmem:[%s728 + $0x14e0] sm:$0xff]
        %v1421 = vld [vmem:[%s728 + $0x14e8] sm:$0xff]
        %v1422 = vld [vmem:[%s728 + $0x14f0] sm:$0xff]
        %v1423 = vld [vmem:[%s728 + $0x14f8] sm:$0xff]
        %v1424 = vld [vmem:[%s728 + $0x1500] sm:$0xff]
        %v1425 = vld [vmem:[%s728 + $0x1508] sm:$0xff]
        %v1426 = vld [vmem:[%s728 + $0x1510] sm:$0xff]
        %v1427 = vld [vmem:[%s728 + $0x1518] sm:$0xff]
        %v1428 = vld [vmem:[%s728 + $0x1520] sm:$0xff]
        %v1429 = vld [vmem:[%s728 + $0x1528] sm:$0xff]
        %v1430 = vld [vmem:[%s728 + $0x1530] sm:$0xff]
        %v1431 = vld [vmem:[%s728 + $0x1538] sm:$0xff]
        %v1432 = vld [vmem:[%s728 + $0x1540] sm:$0xff]
        %v1433 = vld [vmem:[%s728 + $0x1548] sm:$0xff]
        %v1434 = vld [vmem:[%s728 + $0x1550] sm:$0xff]
        %v1435 = vld [vmem:[%s728 + $0x1558] sm:$0xff]
        %v1436 = vld [vmem:[%s728 + $0x1560] sm:$0xff]
        %v1437 = vld [vmem:[%s728 + $0x1568] sm:$0xff]
        %v1438 = vld [vmem:[%s728 + $0x1570] sm:$0xff]
        %v1439 = vld [vmem:[%s728 + $0x1578] sm:$0xff]
        %v1440 = vld [vmem:[%s728 + $0x1580] sm:$0xff]
        %v1441 = vld [vmem:[%s728 + $0x1588] sm:$0xff]
        %v1442 = vld [vmem:[%s728 + $0x1590] sm:$0xff]
        %v1443 = vld [vmem:[%s728 + $0x1598] sm:$0xff]
        %v1444 = vld [vmem:[%s728 + $0x15a0] sm:$0xff]
        %v1445 = vld [vmem:[%s728 + $0x15a8] sm:$0xff]
        %v1446 = vld [vmem:[%s728 + $0x15b0] sm:$0xff]
        %v1447 = vld [vmem:[%s728 + $0x15b8] sm:$0xff]
        %v1448 = vld [vmem:[%s728 + $0x15c0] sm:$0xff]
        %v1449 = vld [vmem:[%s728 + $0x15c8] sm:$0xff]
        %v1450 = vld [vmem:[%s728 + $0x15d0] sm:$0xff]
        %v1451 = vld [vmem:[%s728 + $0x15d8] sm:$0xff]
        %v1452 = vld [vmem:[%s728 + $0x15e0] sm:$0xff]
        %v1453 = vld [vmem:[%s728 + $0x15e8] sm:$0xff]
        %v1454 = vld [vmem:[%s728 + $0x15f0] sm:$0xff]
        %v1455 = vld [vmem:[%s728 + $0x15f8] sm:$0xff]
        %v1456 = vld [vmem:[%s728 + $0x1600] sm:$0xff]
        %v1457 = vld [vmem:[%s728 + $0x1608] sm:$0xff]
        %v1458 = vld [vmem:[%s728 + $0x1610] sm:$0xff]
        %v1459 = vld [vmem:[%s728 + $0x1618] sm:$0xff]
        %v1460 = vld [vmem:[%s728 + $0x1620] sm:$0xff]
        %v1461 = vld [vmem:[%s728 + $0x1628] sm:$0xff]
        %v1462 = vld [vmem:[%s728 + $0x1630] sm:$0xff]
        %v1463 = vld [vmem:[%s728 + $0x1638] sm:$0xff]
        %v1464 = vld [vmem:[%s728 + $0x1640] sm:$0xff]
        %v1465 = vld [vmem:[%s728 + $0x1648] sm:$0xff]
        %v1466 = vld [vmem:[%s728 + $0x1650] sm:$0xff]
        %v1467 = vld [vmem:[%s728 + $0x1658] sm:$0xff]
        %v1468 = vld [vmem:[%s728 + $0x1660] sm:$0xff]
        %v1469 = vld [vmem:[%s728 + $0x1668] sm:$0xff]
        %v1470 = vld [vmem:[%s728 + $0x1670] sm:$0xff]
        %v1471 = vld [vmem:[%s728 + $0x1678] sm:$0xff]
        %v1472 = vld [vmem:[%s728 + $0x1680] sm:$0xff]
        %v1473 = vld [vmem:[%s728 + $0x1688] sm:$0xff]
        %v1474 = vld [vmem:[%s728 + $0x1690] sm:$0xff]
        %v1475 = vld [vmem:[%s728 + $0x1698] sm:$0xff]
        %v1476 = vld [vmem:[%s728 + $0x16a0] sm:$0xff]
        %v1477 = vld [vmem:[%s728 + $0x16a8] sm:$0xff]
        %v1478 = vld [vmem:[%s728 + $0x16b0] sm:$0xff]
        %v1479 = vld [vmem:[%s728 + $0x16b8] sm:$0xff]
        %v1480 = vld [vmem:[%s728 + $0x16c0] sm:$0xff]
        %v1481 = vld [vmem:[%s728 + $0x16c8] sm:$0xff]
        %v1482 = vld [vmem:[%s728 + $0x16d0] sm:$0xff]
        %v1483 = vld [vmem:[%s728 + $0x16d8] sm:$0xff]
        %v1484 = vld [vmem:[%s728 + $0x16e0] sm:$0xff]
        %v1485 = vld [vmem:[%s728 + $0x16e8] sm:$0xff]
        %v1486 = vld [vmem:[%s728 + $0x16f0] sm:$0xff]
        %v1487 = vld [vmem:[%s728 + $0x16f8] sm:$0xff]
        %v1488 = vld [vmem:[%s728 + $0x1700] sm:$0xff]
        %v1489 = vld [vmem:[%s728 + $0x1708] sm:$0xff]
        %v1490 = vld [vmem:[%s728 + $0x1710] sm:$0xff]
        %v1491 = vld [vmem:[%s728 + $0x1718] sm:$0xff]
        %v1492 = vld [vmem:[%s728 + $0x1720] sm:$0xff]
        %v1493 = vld [vmem:[%s728 + $0x1728] sm:$0xff]
        %v1494 = vld [vmem:[%s728 + $0x1730] sm:$0xff]
        %v1495 = vld [vmem:[%s728 + $0x1738] sm:$0xff]
        %v1496 = vld [vmem:[%s728 + $0x1740] sm:$0xff]
        %v1497 = vld [vmem:[%s728 + $0x1748] sm:$0xff]
        %v1498 = vld [vmem:[%s728 + $0x1750] sm:$0xff]
        %v1499 = vld [vmem:[%s728 + $0x1758] sm:$0xff]
        %v1500 = vld [vmem:[%s728 + $0x1760] sm:$0xff]
        %v1501 = vld [vmem:[%s728 + $0x1768] sm:$0xff]
        %v1502 = vld [vmem:[%s728 + $0x1770] sm:$0xff]
        %v1503 = vld [vmem:[%s728 + $0x1778] sm:$0xff]
        %v1504 = vld [vmem:[%s728 + $0x1780] sm:$0xff]
        %v1505 = vld [vmem:[%s728 + $0x1788] sm:$0xff]
        %v1506 = vld [vmem:[%s728 + $0x1790] sm:$0xff]
        %v1507 = vld [vmem:[%s728 + $0x1798] sm:$0xff]
        %v1508 = vld [vmem:[%s728 + $0x17a0] sm:$0xff]
        %v1509 = vld [vmem:[%s728 + $0x17a8] sm:$0xff]
        %v1510 = vld [vmem:[%s728 + $0x17b0] sm:$0xff]
        %v1511 = vld [vmem:[%s728 + $0x17b8] sm:$0xff]
        %v1512 = vld [vmem:[%s728 + $0x17c0] sm:$0xff]
        %v1513 = vld [vmem:[%s728 + $0x17c8] sm:$0xff]
        %v1514 = vld [vmem:[%s728 + $0x17d0] sm:$0xff]
        %v1515 = vld [vmem:[%s728 + $0x17d8] sm:$0xff]
        %v1516 = vld [vmem:[%s728 + $0x17e0] sm:$0xff]
        %v1517 = vld [vmem:[%s728 + $0x17e8] sm:$0xff]
        %v1518 = vld [vmem:[%s728 + $0x17f0] sm:$0xff]
        %v1519 = vld [vmem:[%s728 + $0x17f8] sm:$0xff]
        %v1520 = vld [vmem:[%s728 + $0x1800] sm:$0xff]
        %v1521 = vld [vmem:[%s728 + $0x1808] sm:$0xff]
        %v1522 = vld [vmem:[%s728 + $0x1810] sm:$0xff]
        %v1523 = vld [vmem:[%s728 + $0x1818] sm:$0xff]
        %v1524 = vld [vmem:[%s728 + $0x1820] sm:$0xff]
        %v1525 = vld [vmem:[%s728 + $0x1828] sm:$0xff]
        %v1526 = vld [vmem:[%s728 + $0x1830] sm:$0xff]
        %v1527 = vld [vmem:[%s728 + $0x1838] sm:$0xff]
        %v1528 = vld [vmem:[%s728 + $0x1840] sm:$0xff]
        %v1529 = vld [vmem:[%s728 + $0x1848] sm:$0xff]
        %v1530 = vld [vmem:[%s728 + $0x1850] sm:$0xff]
        %v1531 = vld [vmem:[%s728 + $0x1858] sm:$0xff]
        %v1532 = vld [vmem:[%s728 + $0x1860] sm:$0xff]
        %v1533 = vld [vmem:[%s728 + $0x1868] sm:$0xff]
        %v1534 = vld [vmem:[%s728 + $0x1870] sm:$0xff]
        %v1535 = vld [vmem:[%s728 + $0x1878] sm:$0xff]
        %v1536 = vld [vmem:[%s728 + $0x1880] sm:$0xff]
        %v1537 = vld [vmem:[%s728 + $0x1888] sm:$0xff]
        %v1538 = vld [vmem:[%s728 + $0x1890] sm:$0xff]
        %v1539 = vld [vmem:[%s728 + $0x1898] sm:$0xff]
        %v1540 = vld [vmem:[%s728 + $0x18a0] sm:$0xff]
        %v1541 = vld [vmem:[%s728 + $0x18a8] sm:$0xff]
        %v1542 = vld [vmem:[%s728 + $0x18b0] sm:$0xff]
        %v1543 = vld [vmem:[%s728 + $0x18b8] sm:$0xff]
        %v1544 = vld [vmem:[%s728 + $0x18c0] sm:$0xff]
        %v1545 = vld [vmem:[%s728 + $0x18c8] sm:$0xff]
        %v1546 = vld [vmem:[%s728 + $0x18d0] sm:$0xff]
        %v1547 = vld [vmem:[%s728 + $0x18d8] sm:$0xff]
        %v1548 = vld [vmem:[%s728 + $0x18e0] sm:$0xff]
        %v1549 = vld [vmem:[%s728 + $0x18e8] sm:$0xff]
        %v1550 = vld [vmem:[%s728 + $0x18f0] sm:$0xff]
        %v1551 = vld [vmem:[%s728 + $0x18f8] sm:$0xff]
        %v1552 = vld [vmem:[%s728 + $0x1900] sm:$0xff]
        %v1553 = vld [vmem:[%s728 + $0x1908] sm:$0xff]
        %v1554 = vld [vmem:[%s728 + $0x1910] sm:$0xff]
        %v1555 = vld [vmem:[%s728 + $0x1918] sm:$0xff]
        %v1556 = vld [vmem:[%s728 + $0x1920] sm:$0xff]
        %v1557 = vld [vmem:[%s728 + $0x1928] sm:$0xff]
        %v1558 = vld [vmem:[%s728 + $0x1930] sm:$0xff]
        %v1559 = vld [vmem:[%s728 + $0x1938] sm:$0xff]
        %v1560 = vld [vmem:[%s728 + $0x1940] sm:$0xff]
        %v1561 = vld [vmem:[%s728 + $0x1948] sm:$0xff]
        %v1562 = vld [vmem:[%s728 + $0x1950] sm:$0xff]
        %v1563 = vld [vmem:[%s728 + $0x1958] sm:$0xff]
        %v1564 = vld [vmem:[%s728 + $0x1960] sm:$0xff]
        %v1565 = vld [vmem:[%s728 + $0x1968] sm:$0xff]
        %v1566 = vld [vmem:[%s728 + $0x1970] sm:$0xff]
        %v1567 = vld [vmem:[%s728 + $0x1978] sm:$0xff]
        %v1568 = vld [vmem:[%s728 + $0x1980] sm:$0xff]
        %v1569 = vld [vmem:[%s728 + $0x1988] sm:$0xff]
        %v1570 = vld [vmem:[%s728 + $0x1990] sm:$0xff]
        %v1571 = vld [vmem:[%s728 + $0x1998] sm:$0xff]
        %v1572 = vld [vmem:[%s728 + $0x19a0] sm:$0xff]
        %v1573 = vld [vmem:[%s728 + $0x19a8] sm:$0xff]
        %v1574 = vld [vmem:[%s728 + $0x19b0] sm:$0xff]
        %v1575 = vld [vmem:[%s728 + $0x19b8] sm:$0xff]
        %v1576 = vld [vmem:[%s728 + $0x19c0] sm:$0xff]
        %v1577 = vld [vmem:[%s728 + $0x19c8] sm:$0xff]
        %v1578 = vld [vmem:[%s728 + $0x19d0] sm:$0xff]
        %v1579 = vld [vmem:[%s728 + $0x19d8] sm:$0xff]
        %v1580 = vld [vmem:[%s728 + $0x19e0] sm:$0xff]
        %v1581 = vld [vmem:[%s728 + $0x19e8] sm:$0xff]
        %v1582 = vld [vmem:[%s728 + $0x19f0] sm:$0xff]
        %v1583 = vld [vmem:[%s728 + $0x19f8] sm:$0xff]
        %v1584 = vld [vmem:[%s728 + $0x1a00] sm:$0xff]
        %v1585 = vld [vmem:[%s728 + $0x1a08] sm:$0xff]
        %v1586 = vld [vmem:[%s728 + $0x1a10] sm:$0xff]
        %v1587 = vld [vmem:[%s728 + $0x1a18] sm:$0xff]
        %v1588 = vld [vmem:[%s728 + $0x1a20] sm:$0xff]
        %v1589 = vld [vmem:[%s728 + $0x1a28] sm:$0xff]
        %v1590 = vld [vmem:[%s728 + $0x1a30] sm:$0xff]
        %v1591 = vld [vmem:[%s728 + $0x1a38] sm:$0xff]
        %v1592 = vld [vmem:[%s728 + $0x1a40] sm:$0xff]
        %v1593 = vld [vmem:[%s728 + $0x1a48] sm:$0xff]
        %v1594 = vld [vmem:[%s728 + $0x1a50] sm:$0xff]
        %v1595 = vld [vmem:[%s728 + $0x1a58] sm:$0xff]
        %v1596 = vld [vmem:[%s728 + $0x1a60] sm:$0xff]
        %v1597 = vld [vmem:[%s728 + $0x1a68] sm:$0xff]
        %v1598 = vld [vmem:[%s728 + $0x1a70] sm:$0xff]
        %v1599 = vld [vmem:[%s728 + $0x1a78] sm:$0xff]
        %v1600 = vld [vmem:[%s728 + $0x1a80] sm:$0xff]
        %v1601 = vld [vmem:[%s728 + $0x1a88] sm:$0xff]
        %v1602 = vld [vmem:[%s728 + $0x1a90] sm:$0xff]
        %v1603 = vld [vmem:[%s728 + $0x1a98] sm:$0xff]
        %v1604 = vld [vmem:[%s728 + $0x1aa0] sm:$0xff]
        %v1605 = vld [vmem:[%s728 + $0x1aa8] sm:$0xff]
        %v1606 = vld [vmem:[%s728 + $0x1ab0] sm:$0xff]
        %v1607 = vld [vmem:[%s728 + $0x1ab8] sm:$0xff]
        %v1608 = vld [vmem:[%s728 + $0x1ac0] sm:$0xff]
        %v1609 = vld [vmem:[%s728 + $0x1ac8] sm:$0xff]
        %v1610 = vld [vmem:[%s728 + $0x1ad0] sm:$0xff]
        %v1611 = vld [vmem:[%s728 + $0x1ad8] sm:$0xff]
        %v1612 = vld [vmem:[%s728 + $0x1ae0] sm:$0xff]
        %v1613 = vld [vmem:[%s728 + $0x1ae8] sm:$0xff]
        %v1614 = vld [vmem:[%s728 + $0x1af0] sm:$0xff]
        %v1615 = vld [vmem:[%s728 + $0x1af8] sm:$0xff]
        %v1616 = vld [vmem:[%s728 + $0x1b00] sm:$0xff]
        %v1617 = vld [vmem:[%s728 + $0x1b08] sm:$0xff]
        %v1618 = vld [vmem:[%s728 + $0x1b10] sm:$0xff]
        %v1619 = vld [vmem:[%s728 + $0x1b18] sm:$0xff]
        %v1620 = vld [vmem:[%s728 + $0x1b20] sm:$0xff]
        %v1621 = vld [vmem:[%s728 + $0x1b28] sm:$0xff]
        %v1622 = vld [vmem:[%s728 + $0x1b30] sm:$0xff]
        %v1623 = vld [vmem:[%s728 + $0x1b38] sm:$0xff]
        %v1624 = vld [vmem:[%s728 + $0x1b40] sm:$0xff]
        %v1625 = vld [vmem:[%s728 + $0x1b48] sm:$0xff]
        %v1626 = vld [vmem:[%s728 + $0x1b50] sm:$0xff]
        %v1627 = vld [vmem:[%s728 + $0x1b58] sm:$0xff]
        %v1628 = vld [vmem:[%s728 + $0x1b60] sm:$0xff]
        %v1629 = vld [vmem:[%s728 + $0x1b68] sm:$0xff]
        %v1630 = vld [vmem:[%s728 + $0x1b70] sm:$0xff]
        %v1631 = vld [vmem:[%s728 + $0x1b78] sm:$0xff]
        %v1632 = vld [vmem:[%s728 + $0x1b80] sm:$0xff]
        %v1633 = vld [vmem:[%s728 + $0x1b88] sm:$0xff]
        %v1634 = vld [vmem:[%s728 + $0x1b90] sm:$0xff]
        %v1635 = vld [vmem:[%s728 + $0x1b98] sm:$0xff]
        %v1636 = vld [vmem:[%s728 + $0x1ba0] sm:$0xff]
        %v1637 = vld [vmem:[%s728 + $0x1ba8] sm:$0xff]
        %v1638 = vld [vmem:[%s728 + $0x1bb0] sm:$0xff]
        %v1639 = vld [vmem:[%s728 + $0x1bb8] sm:$0xff]
        %v1640 = vld [vmem:[%s728 + $0x1bc0] sm:$0xff]
        %v1641 = vld [vmem:[%s728 + $0x1bc8] sm:$0xff]
        %v1642 = vld [vmem:[%s728 + $0x1bd0] sm:$0xff]
        %v1643 = vld [vmem:[%s728 + $0x1bd8] sm:$0xff]
        %v1644 = vld [vmem:[%s728 + $0x1be0] sm:$0xff]
        %v1645 = vld [vmem:[%s728 + $0x1be8] sm:$0xff]
        %v1646 = vld [vmem:[%s728 + $0x1bf0] sm:$0xff]
        %v1647 = vld [vmem:[%s728 + $0x1bf8] sm:$0xff]
        %v1648 = vld [vmem:[%s728 + $0x1c00] sm:$0xff]
        %v1649 = vld [vmem:[%s728 + $0x1c08] sm:$0xff]
        %v1650 = vld [vmem:[%s728 + $0x1c10] sm:$0xff]
        %v1651 = vld [vmem:[%s728 + $0x1c18] sm:$0xff]
        %v1652 = vld [vmem:[%s728 + $0x1c20] sm:$0xff]
        %v1653 = vld [vmem:[%s728 + $0x1c28] sm:$0xff]
        %v1654 = vld [vmem:[%s728 + $0x1c30] sm:$0xff]
        %v1655 = vld [vmem:[%s728 + $0x1c38] sm:$0xff]
        %v1656 = vld [vmem:[%s728 + $0x1c40] sm:$0xff]
        %v1657 = vld [vmem:[%s728 + $0x1c48] sm:$0xff]
        %v1658 = vld [vmem:[%s728 + $0x1c50] sm:$0xff]
        %v1659 = vld [vmem:[%s728 + $0x1c58] sm:$0xff]
        %v1660 = vld [vmem:[%s728 + $0x1c60] sm:$0xff]
        %v1661 = vld [vmem:[%s728 + $0x1c68] sm:$0xff]
        %v1662 = vld [vmem:[%s728 + $0x1c70] sm:$0xff]
        %v1663 = vld [vmem:[%s728 + $0x1c78] sm:$0xff]
        %v1664 = vld [vmem:[%s728 + $0x1c80] sm:$0xff]
        %v1665 = vld [vmem:[%s728 + $0x1c88] sm:$0xff]
        %v1666 = vld [vmem:[%s728 + $0x1c90] sm:$0xff]
        %v1667 = vld [vmem:[%s728 + $0x1c98] sm:$0xff]
        %v1668 = vld [vmem:[%s728 + $0x1ca0] sm:$0xff]
        %v1669 = vld [vmem:[%s728 + $0x1ca8] sm:$0xff]
        %v1670 = vld [vmem:[%s728 + $0x1cb0] sm:$0xff]
        %v1671 = vld [vmem:[%s728 + $0x1cb8] sm:$0xff]
        %v1672 = vld [vmem:[%s728 + $0x1cc0] sm:$0xff]
        %v1673 = vld [vmem:[%s728 + $0x1cc8] sm:$0xff]
        %v1674 = vld [vmem:[%s728 + $0x1cd0] sm:$0xff]
        %v1675 = vld [vmem:[%s728 + $0x1cd8] sm:$0xff]
        %v1676 = vld [vmem:[%s728 + $0x1ce0] sm:$0xff]
        %v1677 = vld [vmem:[%s728 + $0x1ce8] sm:$0xff]
        %v1678 = vld [vmem:[%s728 + $0x1cf0] sm:$0xff]
        %v1679 = vld [vmem:[%s728 + $0x1cf8] sm:$0xff]
        %v1680 = vld [vmem:[%s728 + $0x1d00] sm:$0xff]
        %v1681 = vld [vmem:[%s728 + $0x1d08] sm:$0xff]
        %v1682 = vld [vmem:[%s728 + $0x1d10] sm:$0xff]
        %v1683 = vld [vmem:[%s728 + $0x1d18] sm:$0xff]
        %v1684 = vld [vmem:[%s728 + $0x1d20] sm:$0xff]
        %v1685 = vld [vmem:[%s728 + $0x1d28] sm:$0xff]
        %v1686 = vld [vmem:[%s728 + $0x1d30] sm:$0xff]
        %v1687 = vld [vmem:[%s728 + $0x1d38] sm:$0xff]
        %v1688 = vld [vmem:[%s728 + $0x1d40] sm:$0xff]
        %v1689 = vld [vmem:[%s728 + $0x1d48] sm:$0xff]
        %v1690 = vld [vmem:[%s728 + $0x1d50] sm:$0xff]
        %v1691 = vld [vmem:[%s728 + $0x1d58] sm:$0xff]
        %v1692 = vld [vmem:[%s728 + $0x1d60] sm:$0xff]
        %v1693 = vld [vmem:[%s728 + $0x1d68] sm:$0xff]
        %v1694 = vld [vmem:[%s728 + $0x1d70] sm:$0xff]
        %v1695 = vld [vmem:[%s728 + $0x1d78] sm:$0xff]
        %v1696 = vld [vmem:[%s728 + $0x1d80] sm:$0xff]
        %v1697 = vld [vmem:[%s728 + $0x1d88] sm:$0xff]
        %v1698 = vld [vmem:[%s728 + $0x1d90] sm:$0xff]
        %v1699 = vld [vmem:[%s728 + $0x1d98] sm:$0xff]
        %v1700 = vld [vmem:[%s728 + $0x1da0] sm:$0xff]
        %v1701 = vld [vmem:[%s728 + $0x1da8] sm:$0xff]
        %v1702 = vld [vmem:[%s728 + $0x1db0] sm:$0xff]
        %v1703 = vld [vmem:[%s728 + $0x1db8] sm:$0xff]
        %v1704 = vld [vmem:[%s728 + $0x1dc0] sm:$0xff]
        %v1705 = vld [vmem:[%s728 + $0x1dc8] sm:$0xff]
        %v1706 = vld [vmem:[%s728 + $0x1dd0] sm:$0xff]
        %v1707 = vld [vmem:[%s728 + $0x1dd8] sm:$0xff]
        %v1708 = vld [vmem:[%s728 + $0x1de0] sm:$0xff]
        %v1709 = vld [vmem:[%s728 + $0x1de8] sm:$0xff]
        %v1710 = vld [vmem:[%s728 + $0x1df0] sm:$0xff]
        %v1711 = vld [vmem:[%s728 + $0x1df8] sm:$0xff]
        %v1712 = vld [vmem:[%s728 + $0x1e00] sm:$0xff]
        %v1713 = vld [vmem:[%s728 + $0x1e08] sm:$0xff]
        %v1714 = vld [vmem:[%s728 + $0x1e10] sm:$0xff]
        %v1715 = vld [vmem:[%s728 + $0x1e18] sm:$0xff]
        %v1716 = vld [vmem:[%s728 + $0x1e20] sm:$0xff]
        %v1717 = vld [vmem:[%s728 + $0x1e28] sm:$0xff]
        %v1718 = vld [vmem:[%s728 + $0x1e30] sm:$0xff]
        %v1719 = vld [vmem:[%s728 + $0x1e38] sm:$0xff]
        %v1720 = vld [vmem:[%s728 + $0x1e40] sm:$0xff]
        %v1721 = vld [vmem:[%s728 + $0x1e48] sm:$0xff]
        %v1722 = vld [vmem:[%s728 + $0x1e50] sm:$0xff]
        %v1723 = vld [vmem:[%s728 + $0x1e58] sm:$0xff]
        %v1724 = vld [vmem:[%s728 + $0x1e60] sm:$0xff]
        %v1725 = vld [vmem:[%s728 + $0x1e68] sm:$0xff]
        %v1726 = vld [vmem:[%s728 + $0x1e70] sm:$0xff]
        %v1727 = vld [vmem:[%s728 + $0x1e78] sm:$0xff]
        %v1728 = vld [vmem:[%s728 + $0x1e80] sm:$0xff]
        %v1729 = vld [vmem:[%s728 + $0x1e88] sm:$0xff]
        %v1730 = vld [vmem:[%s728 + $0x1e90] sm:$0xff]
        %v1731 = vld [vmem:[%s728 + $0x1e98] sm:$0xff]
        %v1732 = vld [vmem:[%s728 + $0x1ea0] sm:$0xff]
        %v1733 = vld [vmem:[%s728 + $0x1ea8] sm:$0xff]
        %v1734 = vld [vmem:[%s728 + $0x1eb0] sm:$0xff]
        %v1735 = vld [vmem:[%s728 + $0x1eb8] sm:$0xff]
        %v1736 = vld [vmem:[%s728 + $0x1ec0] sm:$0xff]
        %v1737 = vld [vmem:[%s728 + $0x1ec8] sm:$0xff]
        %v1738 = vld [vmem:[%s728 + $0x1ed0] sm:$0xff]
        %v1739 = vld [vmem:[%s728 + $0x1ed8] sm:$0xff]
        %v1740 = vld [vmem:[%s728 + $0x1ee0] sm:$0xff]
        %v1741 = vld [vmem:[%s728 + $0x1ee8] sm:$0xff]
        %v1742 = vld [vmem:[%s728 + $0x1ef0] sm:$0xff]
        %v1743 = vld [vmem:[%s728 + $0x1ef8] sm:$0xff]
        %v1744 = vld [vmem:[%s728 + $0x1f00] sm:$0xff]
        %v1745 = vld [vmem:[%s728 + $0x1f08] sm:$0xff]
        %v1746 = vld [vmem:[%s728 + $0x1f10] sm:$0xff]
        %v1747 = vld [vmem:[%s728 + $0x1f18] sm:$0xff]
        %v1748 = vld [vmem:[%s728 + $0x1f20] sm:$0xff]
        %v1749 = vld [vmem:[%s728 + $0x1f28] sm:$0xff]
        %v1750 = vld [vmem:[%s728 + $0x1f30] sm:$0xff]
        %v1751 = vld [vmem:[%s728 + $0x1f38] sm:$0xff]
        %v1752 = vld [vmem:[%s728 + $0x1f40] sm:$0xff]
        %v1753 = vld [vmem:[%s728 + $0x1f48] sm:$0xff]
        %v1754 = vld [vmem:[%s728 + $0x1f50] sm:$0xff]
        %v1755 = vld [vmem:[%s728 + $0x1f58] sm:$0xff]
        %v1756 = vld [vmem:[%s728 + $0x1f60] sm:$0xff]
        %v1757 = vld [vmem:[%s728 + $0x1f68] sm:$0xff]
        %v1758 = vld [vmem:[%s728 + $0x1f70] sm:$0xff]
        %v1759 = vld [vmem:[%s728 + $0x1f78] sm:$0xff]
        %v1760 = vld [vmem:[%s728 + $0x1f80] sm:$0xff]
        %v1761 = vld [vmem:[%s728 + $0x1f88] sm:$0xff]
        %v1762 = vld [vmem:[%s728 + $0x1f90] sm:$0xff]
        %v1763 = vld [vmem:[%s728 + $0x1f98] sm:$0xff]
        %v1764 = vld [vmem:[%s728 + $0x1fa0] sm:$0xff]
        %v1765 = vld [vmem:[%s728 + $0x1fa8] sm:$0xff]
        %v1766 = vld [vmem:[%s728 + $0x1fb0] sm:$0xff]
        %v1767 = vld [vmem:[%s728 + $0x1fb8] sm:$0xff]
        %v1768 = vld [vmem:[%s728 + $0x1fc0] sm:$0xff]
        %v1769 = vld [vmem:[%s728 + $0x1fc8] sm:$0xff]
        %v1770 = vld [vmem:[%s728 + $0x1fd0] sm:$0xff]
        %v1771 = vld [vmem:[%s728 + $0x1fd8] sm:$0xff]
        %v1772 = vld [vmem:[%s728 + $0x1fe0] sm:$0xff]
        %v1773 = vld [vmem:[%s728 + $0x1fe8] sm:$0xff]
        %v1774 = vld [vmem:[%s728 + $0x1ff0] sm:$0xff]
        %v1775 = vld [vmem:[%s728 + $0x1ff8] sm:$0xff]
        %v1776 = vlaneseq
        %v1777 = vand.u32 %v1776, 127
        %v1778 = vadd.s32 %v1777, 128
        %v1779 = vadd.s32 %v1777, 256
        %v1780 = vadd.s32 %v1777, 384
        %v1781 = vadd.s32 %v1777, 512
        %v1782 = vadd.s32 %v1777, 640
        %v1783 = vadd.s32 %v1777, 768
        %v1784 = vadd.s32 %v1777, 896
        %v1785 = vadd.s32 %v1777, 1024
        %v1786 = vadd.s32 %v1777, 1152
        %v1787 = vadd.s32 %v1777, 1280
        %v1788 = vadd.s32 %v1777, 1408
        %v1789 = vadd.s32 %v1777, 1536
        %v1790 = vadd.s32 %v1777, 1664
        %v1791 = vadd.s32 %v1777, 1792
        %v1792 = vadd.s32 %v1777, 1920
        %s1793 = smul.u32 %s22, 2048
        %v1794 = vstv %s1793
        %v1795 = vadd.s32 %v1794, %v1777
        %v1796 = vadd.s32 %v1794, %v1778
        %v1797 = vadd.s32 %v1794, %v1779
        %v1798 = vadd.s32 %v1794, %v1780
        %v1799 = vadd.s32 %v1794, %v1781
        %v1800 = vadd.s32 %v1794, %v1782
        %v1801 = vadd.s32 %v1794, %v1783
        %v1802 = vadd.s32 %v1794, %v1784
        %v1803 = vadd.s32 %v1794, %v1785
        %v1804 = vadd.s32 %v1794, %v1786
        %v1805 = vadd.s32 %v1794, %v1787
        %v1806 = vadd.s32 %v1794, %v1788
        %v1807 = vadd.s32 %v1794, %v1789
        %v1808 = vadd.s32 %v1794, %v1790
        %v1809 = vadd.s32 %v1794, %v1791
        %v1810 = vadd.s32 %v1794, %v1792
        %vm1811 = vcmp.lt.s32.totalorder %v1795, 2112
        %vm1812 = vcmp.lt.s32.totalorder %v1796, 2112
        %vm1813 = vcmp.lt.s32.totalorder %v1797, 2112
        %vm1814 = vcmp.lt.s32.totalorder %v1798, 2112
        %vm1815 = vcmp.lt.s32.totalorder %v1799, 2112
        %vm1816 = vcmp.lt.s32.totalorder %v1800, 2112
        %vm1817 = vcmp.lt.s32.totalorder %v1801, 2112
        %vm1818 = vcmp.lt.s32.totalorder %v1802, 2112
        %vm1819 = vcmp.lt.s32.totalorder %v1803, 2112
        %vm1820 = vcmp.lt.s32.totalorder %v1804, 2112
        %vm1821 = vcmp.lt.s32.totalorder %v1805, 2112
        %vm1822 = vcmp.lt.s32.totalorder %v1806, 2112
        %vm1823 = vcmp.lt.s32.totalorder %v1807, 2112
        %vm1824 = vcmp.lt.s32.totalorder %v1808, 2112
        %vm1825 = vcmp.lt.s32.totalorder %v1809, 2112
        %vm1826 = vcmp.lt.s32.totalorder %v1810, 2112
        %v1827 = vsel %vm1811, %v752, 0.0
        %v1828 = vsel %vm1812, %v753, 0.0
        %v1829 = vsel %vm1813, %v754, 0.0
        %v1830 = vsel %vm1814, %v755, 0.0
        %v1831 = vsel %vm1815, %v756, 0.0
        %v1832 = vsel %vm1816, %v757, 0.0
        %v1833 = vsel %vm1817, %v758, 0.0
        %v1834 = vsel %vm1818, %v759, 0.0
        %v1835 = vsel %vm1819, %v760, 0.0
        %v1836 = vsel %vm1820, %v761, 0.0
        %v1837 = vsel %vm1821, %v762, 0.0
        %v1838 = vsel %vm1822, %v763, 0.0
        %v1839 = vsel %vm1823, %v764, 0.0
        %v1840 = vsel %vm1824, %v765, 0.0
        %v1841 = vsel %vm1825, %v766, 0.0
        %v1842 = vsel %vm1826, %v767, 0.0
        %v1843 = vsel %vm1811, %v768, 0.0
        %v1844 = vsel %vm1812, %v769, 0.0
        %v1845 = vsel %vm1813, %v770, 0.0
        %v1846 = vsel %vm1814, %v771, 0.0
        %v1847 = vsel %vm1815, %v772, 0.0
        %v1848 = vsel %vm1816, %v773, 0.0
        %v1849 = vsel %vm1817, %v774, 0.0
        %v1850 = vsel %vm1818, %v775, 0.0
        %v1851 = vsel %vm1819, %v776, 0.0
        %v1852 = vsel %vm1820, %v777, 0.0
        %v1853 = vsel %vm1821, %v778, 0.0
        %v1854 = vsel %vm1822, %v779, 0.0
        %v1855 = vsel %vm1823, %v780, 0.0
        %v1856 = vsel %vm1824, %v781, 0.0
        %v1857 = vsel %vm1825, %v782, 0.0
        %v1858 = vsel %vm1826, %v783, 0.0
        %v1859 = vsel %vm1811, %v784, 0.0
        %v1860 = vsel %vm1812, %v785, 0.0
        %v1861 = vsel %vm1813, %v786, 0.0
        %v1862 = vsel %vm1814, %v787, 0.0
        %v1863 = vsel %vm1815, %v788, 0.0
        %v1864 = vsel %vm1816, %v789, 0.0
        %v1865 = vsel %vm1817, %v790, 0.0
        %v1866 = vsel %vm1818, %v791, 0.0
        %v1867 = vsel %vm1819, %v792, 0.0
        %v1868 = vsel %vm1820, %v793, 0.0
        %v1869 = vsel %vm1821, %v794, 0.0
        %v1870 = vsel %vm1822, %v795, 0.0
        %v1871 = vsel %vm1823, %v796, 0.0
        %v1872 = vsel %vm1824, %v797, 0.0
        %v1873 = vsel %vm1825, %v798, 0.0
        %v1874 = vsel %vm1826, %v799, 0.0
        %v1875 = vsel %vm1811, %v800, 0.0
        %v1876 = vsel %vm1812, %v801, 0.0
        %v1877 = vsel %vm1813, %v802, 0.0
        %v1878 = vsel %vm1814, %v803, 0.0
        %v1879 = vsel %vm1815, %v804, 0.0
        %v1880 = vsel %vm1816, %v805, 0.0
        %v1881 = vsel %vm1817, %v806, 0.0
        %v1882 = vsel %vm1818, %v807, 0.0
        %v1883 = vsel %vm1819, %v808, 0.0
        %v1884 = vsel %vm1820, %v809, 0.0
        %v1885 = vsel %vm1821, %v810, 0.0
        %v1886 = vsel %vm1822, %v811, 0.0
        %v1887 = vsel %vm1823, %v812, 0.0
        %v1888 = vsel %vm1824, %v813, 0.0
        %v1889 = vsel %vm1825, %v814, 0.0
        %v1890 = vsel %vm1826, %v815, 0.0
        %v1891 = vsel %vm1811, %v816, 0.0
        %v1892 = vsel %vm1812, %v817, 0.0
        %v1893 = vsel %vm1813, %v818, 0.0
        %v1894 = vsel %vm1814, %v819, 0.0
        %v1895 = vsel %vm1815, %v820, 0.0
        %v1896 = vsel %vm1816, %v821, 0.0
        %v1897 = vsel %vm1817, %v822, 0.0
        %v1898 = vsel %vm1818, %v823, 0.0
        %v1899 = vsel %vm1819, %v824, 0.0
        %v1900 = vsel %vm1820, %v825, 0.0
        %v1901 = vsel %vm1821, %v826, 0.0
        %v1902 = vsel %vm1822, %v827, 0.0
        %v1903 = vsel %vm1823, %v828, 0.0
        %v1904 = vsel %vm1824, %v829, 0.0
        %v1905 = vsel %vm1825, %v830, 0.0
        %v1906 = vsel %vm1826, %v831, 0.0
        %v1907 = vsel %vm1811, %v832, 0.0
        %v1908 = vsel %vm1812, %v833, 0.0
        %v1909 = vsel %vm1813, %v834, 0.0
        %v1910 = vsel %vm1814, %v835, 0.0
        %v1911 = vsel %vm1815, %v836, 0.0
        %v1912 = vsel %vm1816, %v837, 0.0
        %v1913 = vsel %vm1817, %v838, 0.0
        %v1914 = vsel %vm1818, %v839, 0.0
        %v1915 = vsel %vm1819, %v840, 0.0
        %v1916 = vsel %vm1820, %v841, 0.0
        %v1917 = vsel %vm1821, %v842, 0.0
        %v1918 = vsel %vm1822, %v843, 0.0
        %v1919 = vsel %vm1823, %v844, 0.0
        %v1920 = vsel %vm1824, %v845, 0.0
        %v1921 = vsel %vm1825, %v846, 0.0
        %v1922 = vsel %vm1826, %v847, 0.0
        %v1923 = vsel %vm1811, %v848, 0.0
        %v1924 = vsel %vm1812, %v849, 0.0
        %v1925 = vsel %vm1813, %v850, 0.0
        %v1926 = vsel %vm1814, %v851, 0.0
        %v1927 = vsel %vm1815, %v852, 0.0
        %v1928 = vsel %vm1816, %v853, 0.0
        %v1929 = vsel %vm1817, %v854, 0.0
        %v1930 = vsel %vm1818, %v855, 0.0
        %v1931 = vsel %vm1819, %v856, 0.0
        %v1932 = vsel %vm1820, %v857, 0.0
        %v1933 = vsel %vm1821, %v858, 0.0
        %v1934 = vsel %vm1822, %v859, 0.0
        %v1935 = vsel %vm1823, %v860, 0.0
        %v1936 = vsel %vm1824, %v861, 0.0
        %v1937 = vsel %vm1825, %v862, 0.0
        %v1938 = vsel %vm1826, %v863, 0.0
        %v1939 = vsel %vm1811, %v864, 0.0
        %v1940 = vsel %vm1812, %v865, 0.0
        %v1941 = vsel %vm1813, %v866, 0.0
        %v1942 = vsel %vm1814, %v867, 0.0
        %v1943 = vsel %vm1815, %v868, 0.0
        %v1944 = vsel %vm1816, %v869, 0.0
        %v1945 = vsel %vm1817, %v870, 0.0
        %v1946 = vsel %vm1818, %v871, 0.0
        %v1947 = vsel %vm1819, %v872, 0.0
        %v1948 = vsel %vm1820, %v873, 0.0
        %v1949 = vsel %vm1821, %v874, 0.0
        %v1950 = vsel %vm1822, %v875, 0.0
        %v1951 = vsel %vm1823, %v876, 0.0
        %v1952 = vsel %vm1824, %v877, 0.0
        %v1953 = vsel %vm1825, %v878, 0.0
        %v1954 = vsel %vm1826, %v879, 0.0
        %v1955 = vsel %vm1811, %v880, 0.0
        %v1956 = vsel %vm1812, %v881, 0.0
        %v1957 = vsel %vm1813, %v882, 0.0
        %v1958 = vsel %vm1814, %v883, 0.0
        %v1959 = vsel %vm1815, %v884, 0.0
        %v1960 = vsel %vm1816, %v885, 0.0
        %v1961 = vsel %vm1817, %v886, 0.0
        %v1962 = vsel %vm1818, %v887, 0.0
        %v1963 = vsel %vm1819, %v888, 0.0
        %v1964 = vsel %vm1820, %v889, 0.0
        %v1965 = vsel %vm1821, %v890, 0.0
        %v1966 = vsel %vm1822, %v891, 0.0
        %v1967 = vsel %vm1823, %v892, 0.0
        %v1968 = vsel %vm1824, %v893, 0.0
        %v1969 = vsel %vm1825, %v894, 0.0
        %v1970 = vsel %vm1826, %v895, 0.0
        %v1971 = vsel %vm1811, %v896, 0.0
        %v1972 = vsel %vm1812, %v897, 0.0
        %v1973 = vsel %vm1813, %v898, 0.0
        %v1974 = vsel %vm1814, %v899, 0.0
        %v1975 = vsel %vm1815, %v900, 0.0
        %v1976 = vsel %vm1816, %v901, 0.0
        %v1977 = vsel %vm1817, %v902, 0.0
        %v1978 = vsel %vm1818, %v903, 0.0
        %v1979 = vsel %vm1819, %v904, 0.0
        %v1980 = vsel %vm1820, %v905, 0.0
        %v1981 = vsel %vm1821, %v906, 0.0
        %v1982 = vsel %vm1822, %v907, 0.0
        %v1983 = vsel %vm1823, %v908, 0.0
        %v1984 = vsel %vm1824, %v909, 0.0
        %v1985 = vsel %vm1825, %v910, 0.0
        %v1986 = vsel %vm1826, %v911, 0.0
        %v1987 = vsel %vm1811, %v912, 0.0
        %v1988 = vsel %vm1812, %v913, 0.0
        %v1989 = vsel %vm1813, %v914, 0.0
        %v1990 = vsel %vm1814, %v915, 0.0
        %v1991 = vsel %vm1815, %v916, 0.0
        %v1992 = vsel %vm1816, %v917, 0.0
        %v1993 = vsel %vm1817, %v918, 0.0
        %v1994 = vsel %vm1818, %v919, 0.0
        %v1995 = vsel %vm1819, %v920, 0.0
        %v1996 = vsel %vm1820, %v921, 0.0
        %v1997 = vsel %vm1821, %v922, 0.0
        %v1998 = vsel %vm1822, %v923, 0.0
        %v1999 = vsel %vm1823, %v924, 0.0
        %v2000 = vsel %vm1824, %v925, 0.0
        %v2001 = vsel %vm1825, %v926, 0.0
        %v2002 = vsel %vm1826, %v927, 0.0
        %v2003 = vsel %vm1811, %v928, 0.0
        %v2004 = vsel %vm1812, %v929, 0.0
        %v2005 = vsel %vm1813, %v930, 0.0
        %v2006 = vsel %vm1814, %v931, 0.0
        %v2007 = vsel %vm1815, %v932, 0.0
        %v2008 = vsel %vm1816, %v933, 0.0
        %v2009 = vsel %vm1817, %v934, 0.0
        %v2010 = vsel %vm1818, %v935, 0.0
        %v2011 = vsel %vm1819, %v936, 0.0
        %v2012 = vsel %vm1820, %v937, 0.0
        %v2013 = vsel %vm1821, %v938, 0.0
        %v2014 = vsel %vm1822, %v939, 0.0
        %v2015 = vsel %vm1823, %v940, 0.0
        %v2016 = vsel %vm1824, %v941, 0.0
        %v2017 = vsel %vm1825, %v942, 0.0
        %v2018 = vsel %vm1826, %v943, 0.0
        %v2019 = vsel %vm1811, %v944, 0.0
        %v2020 = vsel %vm1812, %v945, 0.0
        %v2021 = vsel %vm1813, %v946, 0.0
        %v2022 = vsel %vm1814, %v947, 0.0
        %v2023 = vsel %vm1815, %v948, 0.0
        %v2024 = vsel %vm1816, %v949, 0.0
        %v2025 = vsel %vm1817, %v950, 0.0
        %v2026 = vsel %vm1818, %v951, 0.0
        %v2027 = vsel %vm1819, %v952, 0.0
        %v2028 = vsel %vm1820, %v953, 0.0
        %v2029 = vsel %vm1821, %v954, 0.0
        %v2030 = vsel %vm1822, %v955, 0.0
        %v2031 = vsel %vm1823, %v956, 0.0
        %v2032 = vsel %vm1824, %v957, 0.0
        %v2033 = vsel %vm1825, %v958, 0.0
        %v2034 = vsel %vm1826, %v959, 0.0
        %v2035 = vsel %vm1811, %v960, 0.0
        %v2036 = vsel %vm1812, %v961, 0.0
        %v2037 = vsel %vm1813, %v962, 0.0
        %v2038 = vsel %vm1814, %v963, 0.0
        %v2039 = vsel %vm1815, %v964, 0.0
        %v2040 = vsel %vm1816, %v965, 0.0
        %v2041 = vsel %vm1817, %v966, 0.0
        %v2042 = vsel %vm1818, %v967, 0.0
        %v2043 = vsel %vm1819, %v968, 0.0
        %v2044 = vsel %vm1820, %v969, 0.0
        %v2045 = vsel %vm1821, %v970, 0.0
        %v2046 = vsel %vm1822, %v971, 0.0
        %v2047 = vsel %vm1823, %v972, 0.0
        %v2048 = vsel %vm1824, %v973, 0.0
        %v2049 = vsel %vm1825, %v974, 0.0
        %v2050 = vsel %vm1826, %v975, 0.0
        %v2051 = vsel %vm1811, %v976, 0.0
        %v2052 = vsel %vm1812, %v977, 0.0
        %v2053 = vsel %vm1813, %v978, 0.0
        %v2054 = vsel %vm1814, %v979, 0.0
        %v2055 = vsel %vm1815, %v980, 0.0
        %v2056 = vsel %vm1816, %v981, 0.0
        %v2057 = vsel %vm1817, %v982, 0.0
        %v2058 = vsel %vm1818, %v983, 0.0
        %v2059 = vsel %vm1819, %v984, 0.0
        %v2060 = vsel %vm1820, %v985, 0.0
        %v2061 = vsel %vm1821, %v986, 0.0
        %v2062 = vsel %vm1822, %v987, 0.0
        %v2063 = vsel %vm1823, %v988, 0.0
        %v2064 = vsel %vm1824, %v989, 0.0
        %v2065 = vsel %vm1825, %v990, 0.0
        %v2066 = vsel %vm1826, %v991, 0.0
        %v2067 = vsel %vm1811, %v992, 0.0
        %v2068 = vsel %vm1812, %v993, 0.0
        %v2069 = vsel %vm1813, %v994, 0.0
        %v2070 = vsel %vm1814, %v995, 0.0
        %v2071 = vsel %vm1815, %v996, 0.0
        %v2072 = vsel %vm1816, %v997, 0.0
        %v2073 = vsel %vm1817, %v998, 0.0
        %v2074 = vsel %vm1818, %v999, 0.0
        %v2075 = vsel %vm1819, %v1000, 0.0
        %v2076 = vsel %vm1820, %v1001, 0.0
        %v2077 = vsel %vm1821, %v1002, 0.0
        %v2078 = vsel %vm1822, %v1003, 0.0
        %v2079 = vsel %vm1823, %v1004, 0.0
        %v2080 = vsel %vm1824, %v1005, 0.0
        %v2081 = vsel %vm1825, %v1006, 0.0
        %v2082 = vsel %vm1826, %v1007, 0.0
        %v2083 = vsel %vm1811, %v1008, 0.0
        %v2084 = vsel %vm1812, %v1009, 0.0
        %v2085 = vsel %vm1813, %v1010, 0.0
        %v2086 = vsel %vm1814, %v1011, 0.0
        %v2087 = vsel %vm1815, %v1012, 0.0
        %v2088 = vsel %vm1816, %v1013, 0.0
        %v2089 = vsel %vm1817, %v1014, 0.0
        %v2090 = vsel %vm1818, %v1015, 0.0
        %v2091 = vsel %vm1819, %v1016, 0.0
        %v2092 = vsel %vm1820, %v1017, 0.0
        %v2093 = vsel %vm1821, %v1018, 0.0
        %v2094 = vsel %vm1822, %v1019, 0.0
        %v2095 = vsel %vm1823, %v1020, 0.0
        %v2096 = vsel %vm1824, %v1021, 0.0
        %v2097 = vsel %vm1825, %v1022, 0.0
        %v2098 = vsel %vm1826, %v1023, 0.0
        %v2099 = vsel %vm1811, %v1024, 0.0
        %v2100 = vsel %vm1812, %v1025, 0.0
        %v2101 = vsel %vm1813, %v1026, 0.0
        %v2102 = vsel %vm1814, %v1027, 0.0
        %v2103 = vsel %vm1815, %v1028, 0.0
        %v2104 = vsel %vm1816, %v1029, 0.0
        %v2105 = vsel %vm1817, %v1030, 0.0
        %v2106 = vsel %vm1818, %v1031, 0.0
        %v2107 = vsel %vm1819, %v1032, 0.0
        %v2108 = vsel %vm1820, %v1033, 0.0
        %v2109 = vsel %vm1821, %v1034, 0.0
        %v2110 = vsel %vm1822, %v1035, 0.0
        %v2111 = vsel %vm1823, %v1036, 0.0
        %v2112 = vsel %vm1824, %v1037, 0.0
        %v2113 = vsel %vm1825, %v1038, 0.0
        %v2114 = vsel %vm1826, %v1039, 0.0
        %v2115 = vsel %vm1811, %v1040, 0.0
        %v2116 = vsel %vm1812, %v1041, 0.0
        %v2117 = vsel %vm1813, %v1042, 0.0
        %v2118 = vsel %vm1814, %v1043, 0.0
        %v2119 = vsel %vm1815, %v1044, 0.0
        %v2120 = vsel %vm1816, %v1045, 0.0
        %v2121 = vsel %vm1817, %v1046, 0.0
        %v2122 = vsel %vm1818, %v1047, 0.0
        %v2123 = vsel %vm1819, %v1048, 0.0
        %v2124 = vsel %vm1820, %v1049, 0.0
        %v2125 = vsel %vm1821, %v1050, 0.0
        %v2126 = vsel %vm1822, %v1051, 0.0
        %v2127 = vsel %vm1823, %v1052, 0.0
        %v2128 = vsel %vm1824, %v1053, 0.0
        %v2129 = vsel %vm1825, %v1054, 0.0
        %v2130 = vsel %vm1826, %v1055, 0.0
        %v2131 = vsel %vm1811, %v1056, 0.0
        %v2132 = vsel %vm1812, %v1057, 0.0
        %v2133 = vsel %vm1813, %v1058, 0.0
        %v2134 = vsel %vm1814, %v1059, 0.0
        %v2135 = vsel %vm1815, %v1060, 0.0
        %v2136 = vsel %vm1816, %v1061, 0.0
        %v2137 = vsel %vm1817, %v1062, 0.0
        %v2138 = vsel %vm1818, %v1063, 0.0
        %v2139 = vsel %vm1819, %v1064, 0.0
        %v2140 = vsel %vm1820, %v1065, 0.0
        %v2141 = vsel %vm1821, %v1066, 0.0
        %v2142 = vsel %vm1822, %v1067, 0.0
        %v2143 = vsel %vm1823, %v1068, 0.0
        %v2144 = vsel %vm1824, %v1069, 0.0
        %v2145 = vsel %vm1825, %v1070, 0.0
        %v2146 = vsel %vm1826, %v1071, 0.0
        %v2147 = vsel %vm1811, %v1072, 0.0
        %v2148 = vsel %vm1812, %v1073, 0.0
        %v2149 = vsel %vm1813, %v1074, 0.0
        %v2150 = vsel %vm1814, %v1075, 0.0
        %v2151 = vsel %vm1815, %v1076, 0.0
        %v2152 = vsel %vm1816, %v1077, 0.0
        %v2153 = vsel %vm1817, %v1078, 0.0
        %v2154 = vsel %vm1818, %v1079, 0.0
        %v2155 = vsel %vm1819, %v1080, 0.0
        %v2156 = vsel %vm1820, %v1081, 0.0
        %v2157 = vsel %vm1821, %v1082, 0.0
        %v2158 = vsel %vm1822, %v1083, 0.0
        %v2159 = vsel %vm1823, %v1084, 0.0
        %v2160 = vsel %vm1824, %v1085, 0.0
        %v2161 = vsel %vm1825, %v1086, 0.0
        %v2162 = vsel %vm1826, %v1087, 0.0
        %v2163 = vsel %vm1811, %v1088, 0.0
        %v2164 = vsel %vm1812, %v1089, 0.0
        %v2165 = vsel %vm1813, %v1090, 0.0
        %v2166 = vsel %vm1814, %v1091, 0.0
        %v2167 = vsel %vm1815, %v1092, 0.0
        %v2168 = vsel %vm1816, %v1093, 0.0
        %v2169 = vsel %vm1817, %v1094, 0.0
        %v2170 = vsel %vm1818, %v1095, 0.0
        %v2171 = vsel %vm1819, %v1096, 0.0
        %v2172 = vsel %vm1820, %v1097, 0.0
        %v2173 = vsel %vm1821, %v1098, 0.0
        %v2174 = vsel %vm1822, %v1099, 0.0
        %v2175 = vsel %vm1823, %v1100, 0.0
        %v2176 = vsel %vm1824, %v1101, 0.0
        %v2177 = vsel %vm1825, %v1102, 0.0
        %v2178 = vsel %vm1826, %v1103, 0.0
        %v2179 = vsel %vm1811, %v1104, 0.0
        %v2180 = vsel %vm1812, %v1105, 0.0
        %v2181 = vsel %vm1813, %v1106, 0.0
        %v2182 = vsel %vm1814, %v1107, 0.0
        %v2183 = vsel %vm1815, %v1108, 0.0
        %v2184 = vsel %vm1816, %v1109, 0.0
        %v2185 = vsel %vm1817, %v1110, 0.0
        %v2186 = vsel %vm1818, %v1111, 0.0
        %v2187 = vsel %vm1819, %v1112, 0.0
        %v2188 = vsel %vm1820, %v1113, 0.0
        %v2189 = vsel %vm1821, %v1114, 0.0
        %v2190 = vsel %vm1822, %v1115, 0.0
        %v2191 = vsel %vm1823, %v1116, 0.0
        %v2192 = vsel %vm1824, %v1117, 0.0
        %v2193 = vsel %vm1825, %v1118, 0.0
        %v2194 = vsel %vm1826, %v1119, 0.0
        %v2195 = vsel %vm1811, %v1120, 0.0
        %v2196 = vsel %vm1812, %v1121, 0.0
        %v2197 = vsel %vm1813, %v1122, 0.0
        %v2198 = vsel %vm1814, %v1123, 0.0
        %v2199 = vsel %vm1815, %v1124, 0.0
        %v2200 = vsel %vm1816, %v1125, 0.0
        %v2201 = vsel %vm1817, %v1126, 0.0
        %v2202 = vsel %vm1818, %v1127, 0.0
        %v2203 = vsel %vm1819, %v1128, 0.0
        %v2204 = vsel %vm1820, %v1129, 0.0
        %v2205 = vsel %vm1821, %v1130, 0.0
        %v2206 = vsel %vm1822, %v1131, 0.0
        %v2207 = vsel %vm1823, %v1132, 0.0
        %v2208 = vsel %vm1824, %v1133, 0.0
        %v2209 = vsel %vm1825, %v1134, 0.0
        %v2210 = vsel %vm1826, %v1135, 0.0
        %v2211 = vsel %vm1811, %v1136, 0.0
        %v2212 = vsel %vm1812, %v1137, 0.0
        %v2213 = vsel %vm1813, %v1138, 0.0
        %v2214 = vsel %vm1814, %v1139, 0.0
        %v2215 = vsel %vm1815, %v1140, 0.0
        %v2216 = vsel %vm1816, %v1141, 0.0
        %v2217 = vsel %vm1817, %v1142, 0.0
        %v2218 = vsel %vm1818, %v1143, 0.0
        %v2219 = vsel %vm1819, %v1144, 0.0
        %v2220 = vsel %vm1820, %v1145, 0.0
        %v2221 = vsel %vm1821, %v1146, 0.0
        %v2222 = vsel %vm1822, %v1147, 0.0
        %v2223 = vsel %vm1823, %v1148, 0.0
        %v2224 = vsel %vm1824, %v1149, 0.0
        %v2225 = vsel %vm1825, %v1150, 0.0
        %v2226 = vsel %vm1826, %v1151, 0.0
        %v2227 = vsel %vm1811, %v1152, 0.0
        %v2228 = vsel %vm1812, %v1153, 0.0
        %v2229 = vsel %vm1813, %v1154, 0.0
        %v2230 = vsel %vm1814, %v1155, 0.0
        %v2231 = vsel %vm1815, %v1156, 0.0
        %v2232 = vsel %vm1816, %v1157, 0.0
        %v2233 = vsel %vm1817, %v1158, 0.0
        %v2234 = vsel %vm1818, %v1159, 0.0
        %v2235 = vsel %vm1819, %v1160, 0.0
        %v2236 = vsel %vm1820, %v1161, 0.0
        %v2237 = vsel %vm1821, %v1162, 0.0
        %v2238 = vsel %vm1822, %v1163, 0.0
        %v2239 = vsel %vm1823, %v1164, 0.0
        %v2240 = vsel %vm1824, %v1165, 0.0
        %v2241 = vsel %vm1825, %v1166, 0.0
        %v2242 = vsel %vm1826, %v1167, 0.0
        %v2243 = vsel %vm1811, %v1168, 0.0
        %v2244 = vsel %vm1812, %v1169, 0.0
        %v2245 = vsel %vm1813, %v1170, 0.0
        %v2246 = vsel %vm1814, %v1171, 0.0
        %v2247 = vsel %vm1815, %v1172, 0.0
        %v2248 = vsel %vm1816, %v1173, 0.0
        %v2249 = vsel %vm1817, %v1174, 0.0
        %v2250 = vsel %vm1818, %v1175, 0.0
        %v2251 = vsel %vm1819, %v1176, 0.0
        %v2252 = vsel %vm1820, %v1177, 0.0
        %v2253 = vsel %vm1821, %v1178, 0.0
        %v2254 = vsel %vm1822, %v1179, 0.0
        %v2255 = vsel %vm1823, %v1180, 0.0
        %v2256 = vsel %vm1824, %v1181, 0.0
        %v2257 = vsel %vm1825, %v1182, 0.0
        %v2258 = vsel %vm1826, %v1183, 0.0
        %v2259 = vsel %vm1811, %v1184, 0.0
        %v2260 = vsel %vm1812, %v1185, 0.0
        %v2261 = vsel %vm1813, %v1186, 0.0
        %v2262 = vsel %vm1814, %v1187, 0.0
        %v2263 = vsel %vm1815, %v1188, 0.0
        %v2264 = vsel %vm1816, %v1189, 0.0
        %v2265 = vsel %vm1817, %v1190, 0.0
        %v2266 = vsel %vm1818, %v1191, 0.0
        %v2267 = vsel %vm1819, %v1192, 0.0
        %v2268 = vsel %vm1820, %v1193, 0.0
        %v2269 = vsel %vm1821, %v1194, 0.0
        %v2270 = vsel %vm1822, %v1195, 0.0
        %v2271 = vsel %vm1823, %v1196, 0.0
        %v2272 = vsel %vm1824, %v1197, 0.0
        %v2273 = vsel %vm1825, %v1198, 0.0
        %v2274 = vsel %vm1826, %v1199, 0.0
        %v2275 = vsel %vm1811, %v1200, 0.0
        %v2276 = vsel %vm1812, %v1201, 0.0
        %v2277 = vsel %vm1813, %v1202, 0.0
        %v2278 = vsel %vm1814, %v1203, 0.0
        %v2279 = vsel %vm1815, %v1204, 0.0
        %v2280 = vsel %vm1816, %v1205, 0.0
        %v2281 = vsel %vm1817, %v1206, 0.0
        %v2282 = vsel %vm1818, %v1207, 0.0
        %v2283 = vsel %vm1819, %v1208, 0.0
        %v2284 = vsel %vm1820, %v1209, 0.0
        %v2285 = vsel %vm1821, %v1210, 0.0
        %v2286 = vsel %vm1822, %v1211, 0.0
        %v2287 = vsel %vm1823, %v1212, 0.0
        %v2288 = vsel %vm1824, %v1213, 0.0
        %v2289 = vsel %vm1825, %v1214, 0.0
        %v2290 = vsel %vm1826, %v1215, 0.0
        %v2291 = vsel %vm1811, %v1216, 0.0
        %v2292 = vsel %vm1812, %v1217, 0.0
        %v2293 = vsel %vm1813, %v1218, 0.0
        %v2294 = vsel %vm1814, %v1219, 0.0
        %v2295 = vsel %vm1815, %v1220, 0.0
        %v2296 = vsel %vm1816, %v1221, 0.0
        %v2297 = vsel %vm1817, %v1222, 0.0
        %v2298 = vsel %vm1818, %v1223, 0.0
        %v2299 = vsel %vm1819, %v1224, 0.0
        %v2300 = vsel %vm1820, %v1225, 0.0
        %v2301 = vsel %vm1821, %v1226, 0.0
        %v2302 = vsel %vm1822, %v1227, 0.0
        %v2303 = vsel %vm1823, %v1228, 0.0
        %v2304 = vsel %vm1824, %v1229, 0.0
        %v2305 = vsel %vm1825, %v1230, 0.0
        %v2306 = vsel %vm1826, %v1231, 0.0
        %v2307 = vsel %vm1811, %v1232, 0.0
        %v2308 = vsel %vm1812, %v1233, 0.0
        %v2309 = vsel %vm1813, %v1234, 0.0
        %v2310 = vsel %vm1814, %v1235, 0.0
        %v2311 = vsel %vm1815, %v1236, 0.0
        %v2312 = vsel %vm1816, %v1237, 0.0
        %v2313 = vsel %vm1817, %v1238, 0.0
        %v2314 = vsel %vm1818, %v1239, 0.0
        %v2315 = vsel %vm1819, %v1240, 0.0
        %v2316 = vsel %vm1820, %v1241, 0.0
        %v2317 = vsel %vm1821, %v1242, 0.0
        %v2318 = vsel %vm1822, %v1243, 0.0
        %v2319 = vsel %vm1823, %v1244, 0.0
        %v2320 = vsel %vm1824, %v1245, 0.0
        %v2321 = vsel %vm1825, %v1246, 0.0
        %v2322 = vsel %vm1826, %v1247, 0.0
        %v2323 = vsel %vm1811, %v1248, 0.0
        %v2324 = vsel %vm1812, %v1249, 0.0
        %v2325 = vsel %vm1813, %v1250, 0.0
        %v2326 = vsel %vm1814, %v1251, 0.0
        %v2327 = vsel %vm1815, %v1252, 0.0
        %v2328 = vsel %vm1816, %v1253, 0.0
        %v2329 = vsel %vm1817, %v1254, 0.0
        %v2330 = vsel %vm1818, %v1255, 0.0
        %v2331 = vsel %vm1819, %v1256, 0.0
        %v2332 = vsel %vm1820, %v1257, 0.0
        %v2333 = vsel %vm1821, %v1258, 0.0
        %v2334 = vsel %vm1822, %v1259, 0.0
        %v2335 = vsel %vm1823, %v1260, 0.0
        %v2336 = vsel %vm1824, %v1261, 0.0
        %v2337 = vsel %vm1825, %v1262, 0.0
        %v2338 = vsel %vm1826, %v1263, 0.0
        %v2339 = vsel %vm1811, %v1264, 0.0
        %v2340 = vsel %vm1812, %v1265, 0.0
        %v2341 = vsel %vm1813, %v1266, 0.0
        %v2342 = vsel %vm1814, %v1267, 0.0
        %v2343 = vsel %vm1815, %v1268, 0.0
        %v2344 = vsel %vm1816, %v1269, 0.0
        %v2345 = vsel %vm1817, %v1270, 0.0
        %v2346 = vsel %vm1818, %v1271, 0.0
        %v2347 = vsel %vm1819, %v1272, 0.0
        %v2348 = vsel %vm1820, %v1273, 0.0
        %v2349 = vsel %vm1821, %v1274, 0.0
        %v2350 = vsel %vm1822, %v1275, 0.0
        %v2351 = vsel %vm1823, %v1276, 0.0
        %v2352 = vsel %vm1824, %v1277, 0.0
        %v2353 = vsel %vm1825, %v1278, 0.0
        %v2354 = vsel %vm1826, %v1279, 0.0
        %v2355 = vsel %vm1811, %v1280, 0.0
        %v2356 = vsel %vm1812, %v1281, 0.0
        %v2357 = vsel %vm1813, %v1282, 0.0
        %v2358 = vsel %vm1814, %v1283, 0.0
        %v2359 = vsel %vm1815, %v1284, 0.0
        %v2360 = vsel %vm1816, %v1285, 0.0
        %v2361 = vsel %vm1817, %v1286, 0.0
        %v2362 = vsel %vm1818, %v1287, 0.0
        %v2363 = vsel %vm1819, %v1288, 0.0
        %v2364 = vsel %vm1820, %v1289, 0.0
        %v2365 = vsel %vm1821, %v1290, 0.0
        %v2366 = vsel %vm1822, %v1291, 0.0
        %v2367 = vsel %vm1823, %v1292, 0.0
        %v2368 = vsel %vm1824, %v1293, 0.0
        %v2369 = vsel %vm1825, %v1294, 0.0
        %v2370 = vsel %vm1826, %v1295, 0.0
        %v2371 = vsel %vm1811, %v1296, 0.0
        %v2372 = vsel %vm1812, %v1297, 0.0
        %v2373 = vsel %vm1813, %v1298, 0.0
        %v2374 = vsel %vm1814, %v1299, 0.0
        %v2375 = vsel %vm1815, %v1300, 0.0
        %v2376 = vsel %vm1816, %v1301, 0.0
        %v2377 = vsel %vm1817, %v1302, 0.0
        %v2378 = vsel %vm1818, %v1303, 0.0
        %v2379 = vsel %vm1819, %v1304, 0.0
        %v2380 = vsel %vm1820, %v1305, 0.0
        %v2381 = vsel %vm1821, %v1306, 0.0
        %v2382 = vsel %vm1822, %v1307, 0.0
        %v2383 = vsel %vm1823, %v1308, 0.0
        %v2384 = vsel %vm1824, %v1309, 0.0
        %v2385 = vsel %vm1825, %v1310, 0.0
        %v2386 = vsel %vm1826, %v1311, 0.0
        %v2387 = vsel %vm1811, %v1312, 0.0
        %v2388 = vsel %vm1812, %v1313, 0.0
        %v2389 = vsel %vm1813, %v1314, 0.0
        %v2390 = vsel %vm1814, %v1315, 0.0
        %v2391 = vsel %vm1815, %v1316, 0.0
        %v2392 = vsel %vm1816, %v1317, 0.0
        %v2393 = vsel %vm1817, %v1318, 0.0
        %v2394 = vsel %vm1818, %v1319, 0.0
        %v2395 = vsel %vm1819, %v1320, 0.0
        %v2396 = vsel %vm1820, %v1321, 0.0
        %v2397 = vsel %vm1821, %v1322, 0.0
        %v2398 = vsel %vm1822, %v1323, 0.0
        %v2399 = vsel %vm1823, %v1324, 0.0
        %v2400 = vsel %vm1824, %v1325, 0.0
        %v2401 = vsel %vm1825, %v1326, 0.0
        %v2402 = vsel %vm1826, %v1327, 0.0
        %v2403 = vsel %vm1811, %v1328, 0.0
        %v2404 = vsel %vm1812, %v1329, 0.0
        %v2405 = vsel %vm1813, %v1330, 0.0
        %v2406 = vsel %vm1814, %v1331, 0.0
        %v2407 = vsel %vm1815, %v1332, 0.0
        %v2408 = vsel %vm1816, %v1333, 0.0
        %v2409 = vsel %vm1817, %v1334, 0.0
        %v2410 = vsel %vm1818, %v1335, 0.0
        %v2411 = vsel %vm1819, %v1336, 0.0
        %v2412 = vsel %vm1820, %v1337, 0.0
        %v2413 = vsel %vm1821, %v1338, 0.0
        %v2414 = vsel %vm1822, %v1339, 0.0
        %v2415 = vsel %vm1823, %v1340, 0.0
        %v2416 = vsel %vm1824, %v1341, 0.0
        %v2417 = vsel %vm1825, %v1342, 0.0
        %v2418 = vsel %vm1826, %v1343, 0.0
        %v2419 = vsel %vm1811, %v1344, 0.0
        %v2420 = vsel %vm1812, %v1345, 0.0
        %v2421 = vsel %vm1813, %v1346, 0.0
        %v2422 = vsel %vm1814, %v1347, 0.0
        %v2423 = vsel %vm1815, %v1348, 0.0
        %v2424 = vsel %vm1816, %v1349, 0.0
        %v2425 = vsel %vm1817, %v1350, 0.0
        %v2426 = vsel %vm1818, %v1351, 0.0
        %v2427 = vsel %vm1819, %v1352, 0.0
        %v2428 = vsel %vm1820, %v1353, 0.0
        %v2429 = vsel %vm1821, %v1354, 0.0
        %v2430 = vsel %vm1822, %v1355, 0.0
        %v2431 = vsel %vm1823, %v1356, 0.0
        %v2432 = vsel %vm1824, %v1357, 0.0
        %v2433 = vsel %vm1825, %v1358, 0.0
        %v2434 = vsel %vm1826, %v1359, 0.0
        %v2435 = vsel %vm1811, %v1360, 0.0
        %v2436 = vsel %vm1812, %v1361, 0.0
        %v2437 = vsel %vm1813, %v1362, 0.0
        %v2438 = vsel %vm1814, %v1363, 0.0
        %v2439 = vsel %vm1815, %v1364, 0.0
        %v2440 = vsel %vm1816, %v1365, 0.0
        %v2441 = vsel %vm1817, %v1366, 0.0
        %v2442 = vsel %vm1818, %v1367, 0.0
        %v2443 = vsel %vm1819, %v1368, 0.0
        %v2444 = vsel %vm1820, %v1369, 0.0
        %v2445 = vsel %vm1821, %v1370, 0.0
        %v2446 = vsel %vm1822, %v1371, 0.0
        %v2447 = vsel %vm1823, %v1372, 0.0
        %v2448 = vsel %vm1824, %v1373, 0.0
        %v2449 = vsel %vm1825, %v1374, 0.0
        %v2450 = vsel %vm1826, %v1375, 0.0
        %v2451 = vsel %vm1811, %v1376, 0.0
        %v2452 = vsel %vm1812, %v1377, 0.0
        %v2453 = vsel %vm1813, %v1378, 0.0
        %v2454 = vsel %vm1814, %v1379, 0.0
        %v2455 = vsel %vm1815, %v1380, 0.0
        %v2456 = vsel %vm1816, %v1381, 0.0
        %v2457 = vsel %vm1817, %v1382, 0.0
        %v2458 = vsel %vm1818, %v1383, 0.0
        %v2459 = vsel %vm1819, %v1384, 0.0
        %v2460 = vsel %vm1820, %v1385, 0.0
        %v2461 = vsel %vm1821, %v1386, 0.0
        %v2462 = vsel %vm1822, %v1387, 0.0
        %v2463 = vsel %vm1823, %v1388, 0.0
        %v2464 = vsel %vm1824, %v1389, 0.0
        %v2465 = vsel %vm1825, %v1390, 0.0
        %v2466 = vsel %vm1826, %v1391, 0.0
        %v2467 = vsel %vm1811, %v1392, 0.0
        %v2468 = vsel %vm1812, %v1393, 0.0
        %v2469 = vsel %vm1813, %v1394, 0.0
        %v2470 = vsel %vm1814, %v1395, 0.0
        %v2471 = vsel %vm1815, %v1396, 0.0
        %v2472 = vsel %vm1816, %v1397, 0.0
        %v2473 = vsel %vm1817, %v1398, 0.0
        %v2474 = vsel %vm1818, %v1399, 0.0
        %v2475 = vsel %vm1819, %v1400, 0.0
        %v2476 = vsel %vm1820, %v1401, 0.0
        %v2477 = vsel %vm1821, %v1402, 0.0
        %v2478 = vsel %vm1822, %v1403, 0.0
        %v2479 = vsel %vm1823, %v1404, 0.0
        %v2480 = vsel %vm1824, %v1405, 0.0
        %v2481 = vsel %vm1825, %v1406, 0.0
        %v2482 = vsel %vm1826, %v1407, 0.0
        %v2483 = vsel %vm1811, %v1408, 0.0
        %v2484 = vsel %vm1812, %v1409, 0.0
        %v2485 = vsel %vm1813, %v1410, 0.0
        %v2486 = vsel %vm1814, %v1411, 0.0
        %v2487 = vsel %vm1815, %v1412, 0.0
        %v2488 = vsel %vm1816, %v1413, 0.0
        %v2489 = vsel %vm1817, %v1414, 0.0
        %v2490 = vsel %vm1818, %v1415, 0.0
        %v2491 = vsel %vm1819, %v1416, 0.0
        %v2492 = vsel %vm1820, %v1417, 0.0
        %v2493 = vsel %vm1821, %v1418, 0.0
        %v2494 = vsel %vm1822, %v1419, 0.0
        %v2495 = vsel %vm1823, %v1420, 0.0
        %v2496 = vsel %vm1824, %v1421, 0.0
        %v2497 = vsel %vm1825, %v1422, 0.0
        %v2498 = vsel %vm1826, %v1423, 0.0
        %v2499 = vsel %vm1811, %v1424, 0.0
        %v2500 = vsel %vm1812, %v1425, 0.0
        %v2501 = vsel %vm1813, %v1426, 0.0
        %v2502 = vsel %vm1814, %v1427, 0.0
        %v2503 = vsel %vm1815, %v1428, 0.0
        %v2504 = vsel %vm1816, %v1429, 0.0
        %v2505 = vsel %vm1817, %v1430, 0.0
        %v2506 = vsel %vm1818, %v1431, 0.0
        %v2507 = vsel %vm1819, %v1432, 0.0
        %v2508 = vsel %vm1820, %v1433, 0.0
        %v2509 = vsel %vm1821, %v1434, 0.0
        %v2510 = vsel %vm1822, %v1435, 0.0
        %v2511 = vsel %vm1823, %v1436, 0.0
        %v2512 = vsel %vm1824, %v1437, 0.0
        %v2513 = vsel %vm1825, %v1438, 0.0
        %v2514 = vsel %vm1826, %v1439, 0.0
        %v2515 = vsel %vm1811, %v1440, 0.0
        %v2516 = vsel %vm1812, %v1441, 0.0
        %v2517 = vsel %vm1813, %v1442, 0.0
        %v2518 = vsel %vm1814, %v1443, 0.0
        %v2519 = vsel %vm1815, %v1444, 0.0
        %v2520 = vsel %vm1816, %v1445, 0.0
        %v2521 = vsel %vm1817, %v1446, 0.0
        %v2522 = vsel %vm1818, %v1447, 0.0
        %v2523 = vsel %vm1819, %v1448, 0.0
        %v2524 = vsel %vm1820, %v1449, 0.0
        %v2525 = vsel %vm1821, %v1450, 0.0
        %v2526 = vsel %vm1822, %v1451, 0.0
        %v2527 = vsel %vm1823, %v1452, 0.0
        %v2528 = vsel %vm1824, %v1453, 0.0
        %v2529 = vsel %vm1825, %v1454, 0.0
        %v2530 = vsel %vm1826, %v1455, 0.0
        %v2531 = vsel %vm1811, %v1456, 0.0
        %v2532 = vsel %vm1812, %v1457, 0.0
        %v2533 = vsel %vm1813, %v1458, 0.0
        %v2534 = vsel %vm1814, %v1459, 0.0
        %v2535 = vsel %vm1815, %v1460, 0.0
        %v2536 = vsel %vm1816, %v1461, 0.0
        %v2537 = vsel %vm1817, %v1462, 0.0
        %v2538 = vsel %vm1818, %v1463, 0.0
        %v2539 = vsel %vm1819, %v1464, 0.0
        %v2540 = vsel %vm1820, %v1465, 0.0
        %v2541 = vsel %vm1821, %v1466, 0.0
        %v2542 = vsel %vm1822, %v1467, 0.0
        %v2543 = vsel %vm1823, %v1468, 0.0
        %v2544 = vsel %vm1824, %v1469, 0.0
        %v2545 = vsel %vm1825, %v1470, 0.0
        %v2546 = vsel %vm1826, %v1471, 0.0
        %v2547 = vsel %vm1811, %v1472, 0.0
        %v2548 = vsel %vm1812, %v1473, 0.0
        %v2549 = vsel %vm1813, %v1474, 0.0
        %v2550 = vsel %vm1814, %v1475, 0.0
        %v2551 = vsel %vm1815, %v1476, 0.0
        %v2552 = vsel %vm1816, %v1477, 0.0
        %v2553 = vsel %vm1817, %v1478, 0.0
        %v2554 = vsel %vm1818, %v1479, 0.0
        %v2555 = vsel %vm1819, %v1480, 0.0
        %v2556 = vsel %vm1820, %v1481, 0.0
        %v2557 = vsel %vm1821, %v1482, 0.0
        %v2558 = vsel %vm1822, %v1483, 0.0
        %v2559 = vsel %vm1823, %v1484, 0.0
        %v2560 = vsel %vm1824, %v1485, 0.0
        %v2561 = vsel %vm1825, %v1486, 0.0
        %v2562 = vsel %vm1826, %v1487, 0.0
        %v2563 = vsel %vm1811, %v1488, 0.0
        %v2564 = vsel %vm1812, %v1489, 0.0
        %v2565 = vsel %vm1813, %v1490, 0.0
        %v2566 = vsel %vm1814, %v1491, 0.0
        %v2567 = vsel %vm1815, %v1492, 0.0
        %v2568 = vsel %vm1816, %v1493, 0.0
        %v2569 = vsel %vm1817, %v1494, 0.0
        %v2570 = vsel %vm1818, %v1495, 0.0
        %v2571 = vsel %vm1819, %v1496, 0.0
        %v2572 = vsel %vm1820, %v1497, 0.0
        %v2573 = vsel %vm1821, %v1498, 0.0
        %v2574 = vsel %vm1822, %v1499, 0.0
        %v2575 = vsel %vm1823, %v1500, 0.0
        %v2576 = vsel %vm1824, %v1501, 0.0
        %v2577 = vsel %vm1825, %v1502, 0.0
        %v2578 = vsel %vm1826, %v1503, 0.0
        %v2579 = vsel %vm1811, %v1504, 0.0
        %v2580 = vsel %vm1812, %v1505, 0.0
        %v2581 = vsel %vm1813, %v1506, 0.0
        %v2582 = vsel %vm1814, %v1507, 0.0
        %v2583 = vsel %vm1815, %v1508, 0.0
        %v2584 = vsel %vm1816, %v1509, 0.0
        %v2585 = vsel %vm1817, %v1510, 0.0
        %v2586 = vsel %vm1818, %v1511, 0.0
        %v2587 = vsel %vm1819, %v1512, 0.0
        %v2588 = vsel %vm1820, %v1513, 0.0
        %v2589 = vsel %vm1821, %v1514, 0.0
        %v2590 = vsel %vm1822, %v1515, 0.0
        %v2591 = vsel %vm1823, %v1516, 0.0
        %v2592 = vsel %vm1824, %v1517, 0.0
        %v2593 = vsel %vm1825, %v1518, 0.0
        %v2594 = vsel %vm1826, %v1519, 0.0
        %v2595 = vsel %vm1811, %v1520, 0.0
        %v2596 = vsel %vm1812, %v1521, 0.0
        %v2597 = vsel %vm1813, %v1522, 0.0
        %v2598 = vsel %vm1814, %v1523, 0.0
        %v2599 = vsel %vm1815, %v1524, 0.0
        %v2600 = vsel %vm1816, %v1525, 0.0
        %v2601 = vsel %vm1817, %v1526, 0.0
        %v2602 = vsel %vm1818, %v1527, 0.0
        %v2603 = vsel %vm1819, %v1528, 0.0
        %v2604 = vsel %vm1820, %v1529, 0.0
        %v2605 = vsel %vm1821, %v1530, 0.0
        %v2606 = vsel %vm1822, %v1531, 0.0
        %v2607 = vsel %vm1823, %v1532, 0.0
        %v2608 = vsel %vm1824, %v1533, 0.0
        %v2609 = vsel %vm1825, %v1534, 0.0
        %v2610 = vsel %vm1826, %v1535, 0.0
        %v2611 = vsel %vm1811, %v1536, 0.0
        %v2612 = vsel %vm1812, %v1537, 0.0
        %v2613 = vsel %vm1813, %v1538, 0.0
        %v2614 = vsel %vm1814, %v1539, 0.0
        %v2615 = vsel %vm1815, %v1540, 0.0
        %v2616 = vsel %vm1816, %v1541, 0.0
        %v2617 = vsel %vm1817, %v1542, 0.0
        %v2618 = vsel %vm1818, %v1543, 0.0
        %v2619 = vsel %vm1819, %v1544, 0.0
        %v2620 = vsel %vm1820, %v1545, 0.0
        %v2621 = vsel %vm1821, %v1546, 0.0
        %v2622 = vsel %vm1822, %v1547, 0.0
        %v2623 = vsel %vm1823, %v1548, 0.0
        %v2624 = vsel %vm1824, %v1549, 0.0
        %v2625 = vsel %vm1825, %v1550, 0.0
        %v2626 = vsel %vm1826, %v1551, 0.0
        %v2627 = vsel %vm1811, %v1552, 0.0
        %v2628 = vsel %vm1812, %v1553, 0.0
        %v2629 = vsel %vm1813, %v1554, 0.0
        %v2630 = vsel %vm1814, %v1555, 0.0
        %v2631 = vsel %vm1815, %v1556, 0.0
        %v2632 = vsel %vm1816, %v1557, 0.0
        %v2633 = vsel %vm1817, %v1558, 0.0
        %v2634 = vsel %vm1818, %v1559, 0.0
        %v2635 = vsel %vm1819, %v1560, 0.0
        %v2636 = vsel %vm1820, %v1561, 0.0
        %v2637 = vsel %vm1821, %v1562, 0.0
        %v2638 = vsel %vm1822, %v1563, 0.0
        %v2639 = vsel %vm1823, %v1564, 0.0
        %v2640 = vsel %vm1824, %v1565, 0.0
        %v2641 = vsel %vm1825, %v1566, 0.0
        %v2642 = vsel %vm1826, %v1567, 0.0
        %v2643 = vsel %vm1811, %v1568, 0.0
        %v2644 = vsel %vm1812, %v1569, 0.0
        %v2645 = vsel %vm1813, %v1570, 0.0
        %v2646 = vsel %vm1814, %v1571, 0.0
        %v2647 = vsel %vm1815, %v1572, 0.0
        %v2648 = vsel %vm1816, %v1573, 0.0
        %v2649 = vsel %vm1817, %v1574, 0.0
        %v2650 = vsel %vm1818, %v1575, 0.0
        %v2651 = vsel %vm1819, %v1576, 0.0
        %v2652 = vsel %vm1820, %v1577, 0.0
        %v2653 = vsel %vm1821, %v1578, 0.0
        %v2654 = vsel %vm1822, %v1579, 0.0
        %v2655 = vsel %vm1823, %v1580, 0.0
        %v2656 = vsel %vm1824, %v1581, 0.0
        %v2657 = vsel %vm1825, %v1582, 0.0
        %v2658 = vsel %vm1826, %v1583, 0.0
        %v2659 = vsel %vm1811, %v1584, 0.0
        %v2660 = vsel %vm1812, %v1585, 0.0
        %v2661 = vsel %vm1813, %v1586, 0.0
        %v2662 = vsel %vm1814, %v1587, 0.0
        %v2663 = vsel %vm1815, %v1588, 0.0
        %v2664 = vsel %vm1816, %v1589, 0.0
        %v2665 = vsel %vm1817, %v1590, 0.0
        %v2666 = vsel %vm1818, %v1591, 0.0
        %v2667 = vsel %vm1819, %v1592, 0.0
        %v2668 = vsel %vm1820, %v1593, 0.0
        %v2669 = vsel %vm1821, %v1594, 0.0
        %v2670 = vsel %vm1822, %v1595, 0.0
        %v2671 = vsel %vm1823, %v1596, 0.0
        %v2672 = vsel %vm1824, %v1597, 0.0
        %v2673 = vsel %vm1825, %v1598, 0.0
        %v2674 = vsel %vm1826, %v1599, 0.0
        %v2675 = vsel %vm1811, %v1600, 0.0
        %v2676 = vsel %vm1812, %v1601, 0.0
        %v2677 = vsel %vm1813, %v1602, 0.0
        %v2678 = vsel %vm1814, %v1603, 0.0
        %v2679 = vsel %vm1815, %v1604, 0.0
        %v2680 = vsel %vm1816, %v1605, 0.0
        %v2681 = vsel %vm1817, %v1606, 0.0
        %v2682 = vsel %vm1818, %v1607, 0.0
        %v2683 = vsel %vm1819, %v1608, 0.0
        %v2684 = vsel %vm1820, %v1609, 0.0
        %v2685 = vsel %vm1821, %v1610, 0.0
        %v2686 = vsel %vm1822, %v1611, 0.0
        %v2687 = vsel %vm1823, %v1612, 0.0
        %v2688 = vsel %vm1824, %v1613, 0.0
        %v2689 = vsel %vm1825, %v1614, 0.0
        %v2690 = vsel %vm1826, %v1615, 0.0
        %v2691 = vsel %vm1811, %v1616, 0.0
        %v2692 = vsel %vm1812, %v1617, 0.0
        %v2693 = vsel %vm1813, %v1618, 0.0
        %v2694 = vsel %vm1814, %v1619, 0.0
        %v2695 = vsel %vm1815, %v1620, 0.0
        %v2696 = vsel %vm1816, %v1621, 0.0
        %v2697 = vsel %vm1817, %v1622, 0.0
        %v2698 = vsel %vm1818, %v1623, 0.0
        %v2699 = vsel %vm1819, %v1624, 0.0
        %v2700 = vsel %vm1820, %v1625, 0.0
        %v2701 = vsel %vm1821, %v1626, 0.0
        %v2702 = vsel %vm1822, %v1627, 0.0
        %v2703 = vsel %vm1823, %v1628, 0.0
        %v2704 = vsel %vm1824, %v1629, 0.0
        %v2705 = vsel %vm1825, %v1630, 0.0
        %v2706 = vsel %vm1826, %v1631, 0.0
        %v2707 = vsel %vm1811, %v1632, 0.0
        %v2708 = vsel %vm1812, %v1633, 0.0
        %v2709 = vsel %vm1813, %v1634, 0.0
        %v2710 = vsel %vm1814, %v1635, 0.0
        %v2711 = vsel %vm1815, %v1636, 0.0
        %v2712 = vsel %vm1816, %v1637, 0.0
        %v2713 = vsel %vm1817, %v1638, 0.0
        %v2714 = vsel %vm1818, %v1639, 0.0
        %v2715 = vsel %vm1819, %v1640, 0.0
        %v2716 = vsel %vm1820, %v1641, 0.0
        %v2717 = vsel %vm1821, %v1642, 0.0
        %v2718 = vsel %vm1822, %v1643, 0.0
        %v2719 = vsel %vm1823, %v1644, 0.0
        %v2720 = vsel %vm1824, %v1645, 0.0
        %v2721 = vsel %vm1825, %v1646, 0.0
        %v2722 = vsel %vm1826, %v1647, 0.0
        %v2723 = vsel %vm1811, %v1648, 0.0
        %v2724 = vsel %vm1812, %v1649, 0.0
        %v2725 = vsel %vm1813, %v1650, 0.0
        %v2726 = vsel %vm1814, %v1651, 0.0
        %v2727 = vsel %vm1815, %v1652, 0.0
        %v2728 = vsel %vm1816, %v1653, 0.0
        %v2729 = vsel %vm1817, %v1654, 0.0
        %v2730 = vsel %vm1818, %v1655, 0.0
        %v2731 = vsel %vm1819, %v1656, 0.0
        %v2732 = vsel %vm1820, %v1657, 0.0
        %v2733 = vsel %vm1821, %v1658, 0.0
        %v2734 = vsel %vm1822, %v1659, 0.0
        %v2735 = vsel %vm1823, %v1660, 0.0
        %v2736 = vsel %vm1824, %v1661, 0.0
        %v2737 = vsel %vm1825, %v1662, 0.0
        %v2738 = vsel %vm1826, %v1663, 0.0
        %v2739 = vsel %vm1811, %v1664, 0.0
        %v2740 = vsel %vm1812, %v1665, 0.0
        %v2741 = vsel %vm1813, %v1666, 0.0
        %v2742 = vsel %vm1814, %v1667, 0.0
        %v2743 = vsel %vm1815, %v1668, 0.0
        %v2744 = vsel %vm1816, %v1669, 0.0
        %v2745 = vsel %vm1817, %v1670, 0.0
        %v2746 = vsel %vm1818, %v1671, 0.0
        %v2747 = vsel %vm1819, %v1672, 0.0
        %v2748 = vsel %vm1820, %v1673, 0.0
        %v2749 = vsel %vm1821, %v1674, 0.0
        %v2750 = vsel %vm1822, %v1675, 0.0
        %v2751 = vsel %vm1823, %v1676, 0.0
        %v2752 = vsel %vm1824, %v1677, 0.0
        %v2753 = vsel %vm1825, %v1678, 0.0
        %v2754 = vsel %vm1826, %v1679, 0.0
        %v2755 = vsel %vm1811, %v1680, 0.0
        %v2756 = vsel %vm1812, %v1681, 0.0
        %v2757 = vsel %vm1813, %v1682, 0.0
        %v2758 = vsel %vm1814, %v1683, 0.0
        %v2759 = vsel %vm1815, %v1684, 0.0
        %v2760 = vsel %vm1816, %v1685, 0.0
        %v2761 = vsel %vm1817, %v1686, 0.0
        %v2762 = vsel %vm1818, %v1687, 0.0
        %v2763 = vsel %vm1819, %v1688, 0.0
        %v2764 = vsel %vm1820, %v1689, 0.0
        %v2765 = vsel %vm1821, %v1690, 0.0
        %v2766 = vsel %vm1822, %v1691, 0.0
        %v2767 = vsel %vm1823, %v1692, 0.0
        %v2768 = vsel %vm1824, %v1693, 0.0
        %v2769 = vsel %vm1825, %v1694, 0.0
        %v2770 = vsel %vm1826, %v1695, 0.0
        %v2771 = vsel %vm1811, %v1696, 0.0
        %v2772 = vsel %vm1812, %v1697, 0.0
        %v2773 = vsel %vm1813, %v1698, 0.0
        %v2774 = vsel %vm1814, %v1699, 0.0
        %v2775 = vsel %vm1815, %v1700, 0.0
        %v2776 = vsel %vm1816, %v1701, 0.0
        %v2777 = vsel %vm1817, %v1702, 0.0
        %v2778 = vsel %vm1818, %v1703, 0.0
        %v2779 = vsel %vm1819, %v1704, 0.0
        %v2780 = vsel %vm1820, %v1705, 0.0
        %v2781 = vsel %vm1821, %v1706, 0.0
        %v2782 = vsel %vm1822, %v1707, 0.0
        %v2783 = vsel %vm1823, %v1708, 0.0
        %v2784 = vsel %vm1824, %v1709, 0.0
        %v2785 = vsel %vm1825, %v1710, 0.0
        %v2786 = vsel %vm1826, %v1711, 0.0
        %v2787 = vsel %vm1811, %v1712, 0.0
        %v2788 = vsel %vm1812, %v1713, 0.0
        %v2789 = vsel %vm1813, %v1714, 0.0
        %v2790 = vsel %vm1814, %v1715, 0.0
        %v2791 = vsel %vm1815, %v1716, 0.0
        %v2792 = vsel %vm1816, %v1717, 0.0
        %v2793 = vsel %vm1817, %v1718, 0.0
        %v2794 = vsel %vm1818, %v1719, 0.0
        %v2795 = vsel %vm1819, %v1720, 0.0
        %v2796 = vsel %vm1820, %v1721, 0.0
        %v2797 = vsel %vm1821, %v1722, 0.0
        %v2798 = vsel %vm1822, %v1723, 0.0
        %v2799 = vsel %vm1823, %v1724, 0.0
        %v2800 = vsel %vm1824, %v1725, 0.0
        %v2801 = vsel %vm1825, %v1726, 0.0
        %v2802 = vsel %vm1826, %v1727, 0.0
        %v2803 = vsel %vm1811, %v1728, 0.0
        %v2804 = vsel %vm1812, %v1729, 0.0
        %v2805 = vsel %vm1813, %v1730, 0.0
        %v2806 = vsel %vm1814, %v1731, 0.0
        %v2807 = vsel %vm1815, %v1732, 0.0
        %v2808 = vsel %vm1816, %v1733, 0.0
        %v2809 = vsel %vm1817, %v1734, 0.0
        %v2810 = vsel %vm1818, %v1735, 0.0
        %v2811 = vsel %vm1819, %v1736, 0.0
        %v2812 = vsel %vm1820, %v1737, 0.0
        %v2813 = vsel %vm1821, %v1738, 0.0
        %v2814 = vsel %vm1822, %v1739, 0.0
        %v2815 = vsel %vm1823, %v1740, 0.0
        %v2816 = vsel %vm1824, %v1741, 0.0
        %v2817 = vsel %vm1825, %v1742, 0.0
        %v2818 = vsel %vm1826, %v1743, 0.0
        %v2819 = vsel %vm1811, %v1744, 0.0
        %v2820 = vsel %vm1812, %v1745, 0.0
        %v2821 = vsel %vm1813, %v1746, 0.0
        %v2822 = vsel %vm1814, %v1747, 0.0
        %v2823 = vsel %vm1815, %v1748, 0.0
        %v2824 = vsel %vm1816, %v1749, 0.0
        %v2825 = vsel %vm1817, %v1750, 0.0
        %v2826 = vsel %vm1818, %v1751, 0.0
        %v2827 = vsel %vm1819, %v1752, 0.0
        %v2828 = vsel %vm1820, %v1753, 0.0
        %v2829 = vsel %vm1821, %v1754, 0.0
        %v2830 = vsel %vm1822, %v1755, 0.0
        %v2831 = vsel %vm1823, %v1756, 0.0
        %v2832 = vsel %vm1824, %v1757, 0.0
        %v2833 = vsel %vm1825, %v1758, 0.0
        %v2834 = vsel %vm1826, %v1759, 0.0
        %v2835 = vsel %vm1811, %v1760, 0.0
        %v2836 = vsel %vm1812, %v1761, 0.0
        %v2837 = vsel %vm1813, %v1762, 0.0
        %v2838 = vsel %vm1814, %v1763, 0.0
        %v2839 = vsel %vm1815, %v1764, 0.0
        %v2840 = vsel %vm1816, %v1765, 0.0
        %v2841 = vsel %vm1817, %v1766, 0.0
        %v2842 = vsel %vm1818, %v1767, 0.0
        %v2843 = vsel %vm1819, %v1768, 0.0
        %v2844 = vsel %vm1820, %v1769, 0.0
        %v2845 = vsel %vm1821, %v1770, 0.0
        %v2846 = vsel %vm1822, %v1771, 0.0
        %v2847 = vsel %vm1823, %v1772, 0.0
        %v2848 = vsel %vm1824, %v1773, 0.0
        %v2849 = vsel %vm1825, %v1774, 0.0
        %v2850 = vsel %vm1826, %v1775, 0.0
        %v2851 = vadd.f32 %v1827, %v1828
        %v2852 = vadd.f32 %v2851, %v1829
        %v2853 = vadd.f32 %v2852, %v1830
        %v2854 = vadd.f32 %v2853, %v1831
        %v2855 = vadd.f32 %v2854, %v1832
        %v2856 = vadd.f32 %v2855, %v1833
        %v2857 = vadd.f32 %v2856, %v1834
        %v2858 = vadd.f32 %v2857, %v1835
        %v2859 = vadd.f32 %v2858, %v1836
        %v2860 = vadd.f32 %v2859, %v1837
        %v2861 = vadd.f32 %v2860, %v1838
        %v2862 = vadd.f32 %v2861, %v1839
        %v2863 = vadd.f32 %v2862, %v1840
        %v2864 = vadd.f32 %v2863, %v1841
        %v2865 = vadd.f32 %v2864, %v1842
        %2866 = vadd.xlane.f32.xlu0 %v2865
        %v2867 = vpop.xlane.xlu0 %2866
        %v2868 = vadd.f32 %v1843, %v1844
        %v2869 = vadd.f32 %v2868, %v1845
        %v2870 = vadd.f32 %v2869, %v1846
        %v2871 = vadd.f32 %v2870, %v1847
        %v2872 = vadd.f32 %v2871, %v1848
        %v2873 = vadd.f32 %v2872, %v1849
        %v2874 = vadd.f32 %v2873, %v1850
        %v2875 = vadd.f32 %v2874, %v1851
        %v2876 = vadd.f32 %v2875, %v1852
        %v2877 = vadd.f32 %v2876, %v1853
        %v2878 = vadd.f32 %v2877, %v1854
        %v2879 = vadd.f32 %v2878, %v1855
        %v2880 = vadd.f32 %v2879, %v1856
        %v2881 = vadd.f32 %v2880, %v1857
        %v2882 = vadd.f32 %v2881, %v1858
        %2883 = vadd.xlane.f32.xlu0 %v2882
        %v2884 = vpop.xlane.xlu0 %2883
        %v2885 = vadd.f32 %v1859, %v1860
        %v2886 = vadd.f32 %v2885, %v1861
        %v2887 = vadd.f32 %v2886, %v1862
        %v2888 = vadd.f32 %v2887, %v1863
        %v2889 = vadd.f32 %v2888, %v1864
        %v2890 = vadd.f32 %v2889, %v1865
        %v2891 = vadd.f32 %v2890, %v1866
        %v2892 = vadd.f32 %v2891, %v1867
        %v2893 = vadd.f32 %v2892, %v1868
        %v2894 = vadd.f32 %v2893, %v1869
        %v2895 = vadd.f32 %v2894, %v1870
        %v2896 = vadd.f32 %v2895, %v1871
        %v2897 = vadd.f32 %v2896, %v1872
        %v2898 = vadd.f32 %v2897, %v1873
        %v2899 = vadd.f32 %v2898, %v1874
        %2900 = vadd.xlane.f32.xlu0 %v2899
        %v2901 = vpop.xlane.xlu0 %2900
        %v2902 = vadd.f32 %v1875, %v1876
        %v2903 = vadd.f32 %v2902, %v1877
        %v2904 = vadd.f32 %v2903, %v1878
        %v2905 = vadd.f32 %v2904, %v1879
        %v2906 = vadd.f32 %v2905, %v1880
        %v2907 = vadd.f32 %v2906, %v1881
        %v2908 = vadd.f32 %v2907, %v1882
        %v2909 = vadd.f32 %v2908, %v1883
        %v2910 = vadd.f32 %v2909, %v1884
        %v2911 = vadd.f32 %v2910, %v1885
        %v2912 = vadd.f32 %v2911, %v1886
        %v2913 = vadd.f32 %v2912, %v1887
        %v2914 = vadd.f32 %v2913, %v1888
        %v2915 = vadd.f32 %v2914, %v1889
        %v2916 = vadd.f32 %v2915, %v1890
        %2917 = vadd.xlane.f32.xlu0 %v2916
        %v2918 = vpop.xlane.xlu0 %2917
        %v2919 = vadd.f32 %v1891, %v1892
        %v2920 = vadd.f32 %v2919, %v1893
        %v2921 = vadd.f32 %v2920, %v1894
        %v2922 = vadd.f32 %v2921, %v1895
        %v2923 = vadd.f32 %v2922, %v1896
        %v2924 = vadd.f32 %v2923, %v1897
        %v2925 = vadd.f32 %v2924, %v1898
        %v2926 = vadd.f32 %v2925, %v1899
        %v2927 = vadd.f32 %v2926, %v1900
        %v2928 = vadd.f32 %v2927, %v1901
        %v2929 = vadd.f32 %v2928, %v1902
        %v2930 = vadd.f32 %v2929, %v1903
        %v2931 = vadd.f32 %v2930, %v1904
        %v2932 = vadd.f32 %v2931, %v1905
        %v2933 = vadd.f32 %v2932, %v1906
        %2934 = vadd.xlane.f32.xlu0 %v2933
        %v2935 = vpop.xlane.xlu0 %2934
        %v2936 = vadd.f32 %v1907, %v1908
        %v2937 = vadd.f32 %v2936, %v1909
        %v2938 = vadd.f32 %v2937, %v1910
        %v2939 = vadd.f32 %v2938, %v1911
        %v2940 = vadd.f32 %v2939, %v1912
        %v2941 = vadd.f32 %v2940, %v1913
        %v2942 = vadd.f32 %v2941, %v1914
        %v2943 = vadd.f32 %v2942, %v1915
        %v2944 = vadd.f32 %v2943, %v1916
        %v2945 = vadd.f32 %v2944, %v1917
        %v2946 = vadd.f32 %v2945, %v1918
        %v2947 = vadd.f32 %v2946, %v1919
        %v2948 = vadd.f32 %v2947, %v1920
        %v2949 = vadd.f32 %v2948, %v1921
        %v2950 = vadd.f32 %v2949, %v1922
        %2951 = vadd.xlane.f32.xlu0 %v2950
        %v2952 = vpop.xlane.xlu0 %2951
        %v2953 = vadd.f32 %v1923, %v1924
        %v2954 = vadd.f32 %v2953, %v1925
        %v2955 = vadd.f32 %v2954, %v1926
        %v2956 = vadd.f32 %v2955, %v1927
        %v2957 = vadd.f32 %v2956, %v1928
        %v2958 = vadd.f32 %v2957, %v1929
        %v2959 = vadd.f32 %v2958, %v1930
        %v2960 = vadd.f32 %v2959, %v1931
        %v2961 = vadd.f32 %v2960, %v1932
        %v2962 = vadd.f32 %v2961, %v1933
        %v2963 = vadd.f32 %v2962, %v1934
        %v2964 = vadd.f32 %v2963, %v1935
        %v2965 = vadd.f32 %v2964, %v1936
        %v2966 = vadd.f32 %v2965, %v1937
        %v2967 = vadd.f32 %v2966, %v1938
        %2968 = vadd.xlane.f32.xlu0 %v2967
        %v2969 = vpop.xlane.xlu0 %2968
        %v2970 = vadd.f32 %v1939, %v1940
        %v2971 = vadd.f32 %v2970, %v1941
        %v2972 = vadd.f32 %v2971, %v1942
        %v2973 = vadd.f32 %v2972, %v1943
        %v2974 = vadd.f32 %v2973, %v1944
        %v2975 = vadd.f32 %v2974, %v1945
        %v2976 = vadd.f32 %v2975, %v1946
        %v2977 = vadd.f32 %v2976, %v1947
        %v2978 = vadd.f32 %v2977, %v1948
        %v2979 = vadd.f32 %v2978, %v1949
        %v2980 = vadd.f32 %v2979, %v1950
        %v2981 = vadd.f32 %v2980, %v1951
        %v2982 = vadd.f32 %v2981, %v1952
        %v2983 = vadd.f32 %v2982, %v1953
        %v2984 = vadd.f32 %v2983, %v1954
        %2985 = vadd.xlane.f32.xlu0 %v2984
        %v2986 = vpop.xlane.xlu0 %2985
        %v2987 = vadd.f32 %v1955, %v1956
        %v2988 = vadd.f32 %v2987, %v1957
        %v2989 = vadd.f32 %v2988, %v1958
        %v2990 = vadd.f32 %v2989, %v1959
        %v2991 = vadd.f32 %v2990, %v1960
        %v2992 = vadd.f32 %v2991, %v1961
        %v2993 = vadd.f32 %v2992, %v1962
        %v2994 = vadd.f32 %v2993, %v1963
        %v2995 = vadd.f32 %v2994, %v1964
        %v2996 = vadd.f32 %v2995, %v1965
        %v2997 = vadd.f32 %v2996, %v1966
        %v2998 = vadd.f32 %v2997, %v1967
        %v2999 = vadd.f32 %v2998, %v1968
        %v3000 = vadd.f32 %v2999, %v1969
        %v3001 = vadd.f32 %v3000, %v1970
        %3002 = vadd.xlane.f32.xlu0 %v3001
        %v3003 = vpop.xlane.xlu0 %3002
        %v3004 = vadd.f32 %v1971, %v1972
        %v3005 = vadd.f32 %v3004, %v1973
        %v3006 = vadd.f32 %v3005, %v1974
        %v3007 = vadd.f32 %v3006, %v1975
        %v3008 = vadd.f32 %v3007, %v1976
        %v3009 = vadd.f32 %v3008, %v1977
        %v3010 = vadd.f32 %v3009, %v1978
        %v3011 = vadd.f32 %v3010, %v1979
        %v3012 = vadd.f32 %v3011, %v1980
        %v3013 = vadd.f32 %v3012, %v1981
        %v3014 = vadd.f32 %v3013, %v1982
        %v3015 = vadd.f32 %v3014, %v1983
        %v3016 = vadd.f32 %v3015, %v1984
        %v3017 = vadd.f32 %v3016, %v1985
        %v3018 = vadd.f32 %v3017, %v1986
        %3019 = vadd.xlane.f32.xlu0 %v3018
        %v3020 = vpop.xlane.xlu0 %3019
        %v3021 = vadd.f32 %v1987, %v1988
        %v3022 = vadd.f32 %v3021, %v1989
        %v3023 = vadd.f32 %v3022, %v1990
        %v3024 = vadd.f32 %v3023, %v1991
        %v3025 = vadd.f32 %v3024, %v1992
        %v3026 = vadd.f32 %v3025, %v1993
        %v3027 = vadd.f32 %v3026, %v1994
        %v3028 = vadd.f32 %v3027, %v1995
        %v3029 = vadd.f32 %v3028, %v1996
        %v3030 = vadd.f32 %v3029, %v1997
        %v3031 = vadd.f32 %v3030, %v1998
        %v3032 = vadd.f32 %v3031, %v1999
        %v3033 = vadd.f32 %v3032, %v2000
        %v3034 = vadd.f32 %v3033, %v2001
        %v3035 = vadd.f32 %v3034, %v2002
        %3036 = vadd.xlane.f32.xlu0 %v3035
        %v3037 = vpop.xlane.xlu0 %3036
        %v3038 = vadd.f32 %v2003, %v2004
        %v3039 = vadd.f32 %v3038, %v2005
        %v3040 = vadd.f32 %v3039, %v2006
        %v3041 = vadd.f32 %v3040, %v2007
        %v3042 = vadd.f32 %v3041, %v2008
        %v3043 = vadd.f32 %v3042, %v2009
        %v3044 = vadd.f32 %v3043, %v2010
        %v3045 = vadd.f32 %v3044, %v2011
        %v3046 = vadd.f32 %v3045, %v2012
        %v3047 = vadd.f32 %v3046, %v2013
        %v3048 = vadd.f32 %v3047, %v2014
        %v3049 = vadd.f32 %v3048, %v2015
        %v3050 = vadd.f32 %v3049, %v2016
        %v3051 = vadd.f32 %v3050, %v2017
        %v3052 = vadd.f32 %v3051, %v2018
        %3053 = vadd.xlane.f32.xlu0 %v3052
        %v3054 = vpop.xlane.xlu0 %3053
        %v3055 = vadd.f32 %v2019, %v2020
        %v3056 = vadd.f32 %v3055, %v2021
        %v3057 = vadd.f32 %v3056, %v2022
        %v3058 = vadd.f32 %v3057, %v2023
        %v3059 = vadd.f32 %v3058, %v2024
        %v3060 = vadd.f32 %v3059, %v2025
        %v3061 = vadd.f32 %v3060, %v2026
        %v3062 = vadd.f32 %v3061, %v2027
        %v3063 = vadd.f32 %v3062, %v2028
        %v3064 = vadd.f32 %v3063, %v2029
        %v3065 = vadd.f32 %v3064, %v2030
        %v3066 = vadd.f32 %v3065, %v2031
        %v3067 = vadd.f32 %v3066, %v2032
        %v3068 = vadd.f32 %v3067, %v2033
        %v3069 = vadd.f32 %v3068, %v2034
        %3070 = vadd.xlane.f32.xlu0 %v3069
        %v3071 = vpop.xlane.xlu0 %3070
        %v3072 = vadd.f32 %v2035, %v2036
        %v3073 = vadd.f32 %v3072, %v2037
        %v3074 = vadd.f32 %v3073, %v2038
        %v3075 = vadd.f32 %v3074, %v2039
        %v3076 = vadd.f32 %v3075, %v2040
        %v3077 = vadd.f32 %v3076, %v2041
        %v3078 = vadd.f32 %v3077, %v2042
        %v3079 = vadd.f32 %v3078, %v2043
        %v3080 = vadd.f32 %v3079, %v2044
        %v3081 = vadd.f32 %v3080, %v2045
        %v3082 = vadd.f32 %v3081, %v2046
        %v3083 = vadd.f32 %v3082, %v2047
        %v3084 = vadd.f32 %v3083, %v2048
        %v3085 = vadd.f32 %v3084, %v2049
        %v3086 = vadd.f32 %v3085, %v2050
        %3087 = vadd.xlane.f32.xlu0 %v3086
        %v3088 = vpop.xlane.xlu0 %3087
        %v3089 = vadd.f32 %v2051, %v2052
        %v3090 = vadd.f32 %v3089, %v2053
        %v3091 = vadd.f32 %v3090, %v2054
        %v3092 = vadd.f32 %v3091, %v2055
        %v3093 = vadd.f32 %v3092, %v2056
        %v3094 = vadd.f32 %v3093, %v2057
        %v3095 = vadd.f32 %v3094, %v2058
        %v3096 = vadd.f32 %v3095, %v2059
        %v3097 = vadd.f32 %v3096, %v2060
        %v3098 = vadd.f32 %v3097, %v2061
        %v3099 = vadd.f32 %v3098, %v2062
        %v3100 = vadd.f32 %v3099, %v2063
        %v3101 = vadd.f32 %v3100, %v2064
        %v3102 = vadd.f32 %v3101, %v2065
        %v3103 = vadd.f32 %v3102, %v2066
        %3104 = vadd.xlane.f32.xlu0 %v3103
        %v3105 = vpop.xlane.xlu0 %3104
        %v3106 = vadd.f32 %v2067, %v2068
        %v3107 = vadd.f32 %v3106, %v2069
        %v3108 = vadd.f32 %v3107, %v2070
        %v3109 = vadd.f32 %v3108, %v2071
        %v3110 = vadd.f32 %v3109, %v2072
        %v3111 = vadd.f32 %v3110, %v2073
        %v3112 = vadd.f32 %v3111, %v2074
        %v3113 = vadd.f32 %v3112, %v2075
        %v3114 = vadd.f32 %v3113, %v2076
        %v3115 = vadd.f32 %v3114, %v2077
        %v3116 = vadd.f32 %v3115, %v2078
        %v3117 = vadd.f32 %v3116, %v2079
        %v3118 = vadd.f32 %v3117, %v2080
        %v3119 = vadd.f32 %v3118, %v2081
        %v3120 = vadd.f32 %v3119, %v2082
        %3121 = vadd.xlane.f32.xlu0 %v3120
        %v3122 = vpop.xlane.xlu0 %3121
        %v3123 = vadd.f32 %v2083, %v2084
        %v3124 = vadd.f32 %v3123, %v2085
        %v3125 = vadd.f32 %v3124, %v2086
        %v3126 = vadd.f32 %v3125, %v2087
        %v3127 = vadd.f32 %v3126, %v2088
        %v3128 = vadd.f32 %v3127, %v2089
        %v3129 = vadd.f32 %v3128, %v2090
        %v3130 = vadd.f32 %v3129, %v2091
        %v3131 = vadd.f32 %v3130, %v2092
        %v3132 = vadd.f32 %v3131, %v2093
        %v3133 = vadd.f32 %v3132, %v2094
        %v3134 = vadd.f32 %v3133, %v2095
        %v3135 = vadd.f32 %v3134, %v2096
        %v3136 = vadd.f32 %v3135, %v2097
        %v3137 = vadd.f32 %v3136, %v2098
        %3138 = vadd.xlane.f32.xlu0 %v3137
        %v3139 = vpop.xlane.xlu0 %3138
        %v3140 = vadd.f32 %v2099, %v2100
        %v3141 = vadd.f32 %v3140, %v2101
        %v3142 = vadd.f32 %v3141, %v2102
        %v3143 = vadd.f32 %v3142, %v2103
        %v3144 = vadd.f32 %v3143, %v2104
        %v3145 = vadd.f32 %v3144, %v2105
        %v3146 = vadd.f32 %v3145, %v2106
        %v3147 = vadd.f32 %v3146, %v2107
        %v3148 = vadd.f32 %v3147, %v2108
        %v3149 = vadd.f32 %v3148, %v2109
        %v3150 = vadd.f32 %v3149, %v2110
        %v3151 = vadd.f32 %v3150, %v2111
        %v3152 = vadd.f32 %v3151, %v2112
        %v3153 = vadd.f32 %v3152, %v2113
        %v3154 = vadd.f32 %v3153, %v2114
        %3155 = vadd.xlane.f32.xlu0 %v3154
        %v3156 = vpop.xlane.xlu0 %3155
        %v3157 = vadd.f32 %v2115, %v2116
        %v3158 = vadd.f32 %v3157, %v2117
        %v3159 = vadd.f32 %v3158, %v2118
        %v3160 = vadd.f32 %v3159, %v2119
        %v3161 = vadd.f32 %v3160, %v2120
        %v3162 = vadd.f32 %v3161, %v2121
        %v3163 = vadd.f32 %v3162, %v2122
        %v3164 = vadd.f32 %v3163, %v2123
        %v3165 = vadd.f32 %v3164, %v2124
        %v3166 = vadd.f32 %v3165, %v2125
        %v3167 = vadd.f32 %v3166, %v2126
        %v3168 = vadd.f32 %v3167, %v2127
        %v3169 = vadd.f32 %v3168, %v2128
        %v3170 = vadd.f32 %v3169, %v2129
        %v3171 = vadd.f32 %v3170, %v2130
        %3172 = vadd.xlane.f32.xlu0 %v3171
        %v3173 = vpop.xlane.xlu0 %3172
        %v3174 = vadd.f32 %v2131, %v2132
        %v3175 = vadd.f32 %v3174, %v2133
        %v3176 = vadd.f32 %v3175, %v2134
        %v3177 = vadd.f32 %v3176, %v2135
        %v3178 = vadd.f32 %v3177, %v2136
        %v3179 = vadd.f32 %v3178, %v2137
        %v3180 = vadd.f32 %v3179, %v2138
        %v3181 = vadd.f32 %v3180, %v2139
        %v3182 = vadd.f32 %v3181, %v2140
        %v3183 = vadd.f32 %v3182, %v2141
        %v3184 = vadd.f32 %v3183, %v2142
        %v3185 = vadd.f32 %v3184, %v2143
        %v3186 = vadd.f32 %v3185, %v2144
        %v3187 = vadd.f32 %v3186, %v2145
        %v3188 = vadd.f32 %v3187, %v2146
        %3189 = vadd.xlane.f32.xlu0 %v3188
        %v3190 = vpop.xlane.xlu0 %3189
        %v3191 = vadd.f32 %v2147, %v2148
        %v3192 = vadd.f32 %v3191, %v2149
        %v3193 = vadd.f32 %v3192, %v2150
        %v3194 = vadd.f32 %v3193, %v2151
        %v3195 = vadd.f32 %v3194, %v2152
        %v3196 = vadd.f32 %v3195, %v2153
        %v3197 = vadd.f32 %v3196, %v2154
        %v3198 = vadd.f32 %v3197, %v2155
        %v3199 = vadd.f32 %v3198, %v2156
        %v3200 = vadd.f32 %v3199, %v2157
        %v3201 = vadd.f32 %v3200, %v2158
        %v3202 = vadd.f32 %v3201, %v2159
        %v3203 = vadd.f32 %v3202, %v2160
        %v3204 = vadd.f32 %v3203, %v2161
        %v3205 = vadd.f32 %v3204, %v2162
        %3206 = vadd.xlane.f32.xlu0 %v3205
        %v3207 = vpop.xlane.xlu0 %3206
        %v3208 = vadd.f32 %v2163, %v2164
        %v3209 = vadd.f32 %v3208, %v2165
        %v3210 = vadd.f32 %v3209, %v2166
        %v3211 = vadd.f32 %v3210, %v2167
        %v3212 = vadd.f32 %v3211, %v2168
        %v3213 = vadd.f32 %v3212, %v2169
        %v3214 = vadd.f32 %v3213, %v2170
        %v3215 = vadd.f32 %v3214, %v2171
        %v3216 = vadd.f32 %v3215, %v2172
        %v3217 = vadd.f32 %v3216, %v2173
        %v3218 = vadd.f32 %v3217, %v2174
        %v3219 = vadd.f32 %v3218, %v2175
        %v3220 = vadd.f32 %v3219, %v2176
        %v3221 = vadd.f32 %v3220, %v2177
        %v3222 = vadd.f32 %v3221, %v2178
        %3223 = vadd.xlane.f32.xlu0 %v3222
        %v3224 = vpop.xlane.xlu0 %3223
        %v3225 = vadd.f32 %v2179, %v2180
        %v3226 = vadd.f32 %v3225, %v2181
        %v3227 = vadd.f32 %v3226, %v2182
        %v3228 = vadd.f32 %v3227, %v2183
        %v3229 = vadd.f32 %v3228, %v2184
        %v3230 = vadd.f32 %v3229, %v2185
        %v3231 = vadd.f32 %v3230, %v2186
        %v3232 = vadd.f32 %v3231, %v2187
        %v3233 = vadd.f32 %v3232, %v2188
        %v3234 = vadd.f32 %v3233, %v2189
        %v3235 = vadd.f32 %v3234, %v2190
        %v3236 = vadd.f32 %v3235, %v2191
        %v3237 = vadd.f32 %v3236, %v2192
        %v3238 = vadd.f32 %v3237, %v2193
        %v3239 = vadd.f32 %v3238, %v2194
        %3240 = vadd.xlane.f32.xlu0 %v3239
        %v3241 = vpop.xlane.xlu0 %3240
        %v3242 = vadd.f32 %v2195, %v2196
        %v3243 = vadd.f32 %v3242, %v2197
        %v3244 = vadd.f32 %v3243, %v2198
        %v3245 = vadd.f32 %v3244, %v2199
        %v3246 = vadd.f32 %v3245, %v2200
        %v3247 = vadd.f32 %v3246, %v2201
        %v3248 = vadd.f32 %v3247, %v2202
        %v3249 = vadd.f32 %v3248, %v2203
        %v3250 = vadd.f32 %v3249, %v2204
        %v3251 = vadd.f32 %v3250, %v2205
        %v3252 = vadd.f32 %v3251, %v2206
        %v3253 = vadd.f32 %v3252, %v2207
        %v3254 = vadd.f32 %v3253, %v2208
        %v3255 = vadd.f32 %v3254, %v2209
        %v3256 = vadd.f32 %v3255, %v2210
        %3257 = vadd.xlane.f32.xlu0 %v3256
        %v3258 = vpop.xlane.xlu0 %3257
        %v3259 = vadd.f32 %v2211, %v2212
        %v3260 = vadd.f32 %v3259, %v2213
        %v3261 = vadd.f32 %v3260, %v2214
        %v3262 = vadd.f32 %v3261, %v2215
        %v3263 = vadd.f32 %v3262, %v2216
        %v3264 = vadd.f32 %v3263, %v2217
        %v3265 = vadd.f32 %v3264, %v2218
        %v3266 = vadd.f32 %v3265, %v2219
        %v3267 = vadd.f32 %v3266, %v2220
        %v3268 = vadd.f32 %v3267, %v2221
        %v3269 = vadd.f32 %v3268, %v2222
        %v3270 = vadd.f32 %v3269, %v2223
        %v3271 = vadd.f32 %v3270, %v2224
        %v3272 = vadd.f32 %v3271, %v2225
        %v3273 = vadd.f32 %v3272, %v2226
        %3274 = vadd.xlane.f32.xlu0 %v3273
        %v3275 = vpop.xlane.xlu0 %3274
        %v3276 = vadd.f32 %v2227, %v2228
        %v3277 = vadd.f32 %v3276, %v2229
        %v3278 = vadd.f32 %v3277, %v2230
        %v3279 = vadd.f32 %v3278, %v2231
        %v3280 = vadd.f32 %v3279, %v2232
        %v3281 = vadd.f32 %v3280, %v2233
        %v3282 = vadd.f32 %v3281, %v2234
        %v3283 = vadd.f32 %v3282, %v2235
        %v3284 = vadd.f32 %v3283, %v2236
        %v3285 = vadd.f32 %v3284, %v2237
        %v3286 = vadd.f32 %v3285, %v2238
        %v3287 = vadd.f32 %v3286, %v2239
        %v3288 = vadd.f32 %v3287, %v2240
        %v3289 = vadd.f32 %v3288, %v2241
        %v3290 = vadd.f32 %v3289, %v2242
        %3291 = vadd.xlane.f32.xlu0 %v3290
        %v3292 = vpop.xlane.xlu0 %3291
        %v3293 = vadd.f32 %v2243, %v2244
        %v3294 = vadd.f32 %v3293, %v2245
        %v3295 = vadd.f32 %v3294, %v2246
        %v3296 = vadd.f32 %v3295, %v2247
        %v3297 = vadd.f32 %v3296, %v2248
        %v3298 = vadd.f32 %v3297, %v2249
        %v3299 = vadd.f32 %v3298, %v2250
        %v3300 = vadd.f32 %v3299, %v2251
        %v3301 = vadd.f32 %v3300, %v2252
        %v3302 = vadd.f32 %v3301, %v2253
        %v3303 = vadd.f32 %v3302, %v2254
        %v3304 = vadd.f32 %v3303, %v2255
        %v3305 = vadd.f32 %v3304, %v2256
        %v3306 = vadd.f32 %v3305, %v2257
        %v3307 = vadd.f32 %v3306, %v2258
        %3308 = vadd.xlane.f32.xlu0 %v3307
        %v3309 = vpop.xlane.xlu0 %3308
        %v3310 = vadd.f32 %v2259, %v2260
        %v3311 = vadd.f32 %v3310, %v2261
        %v3312 = vadd.f32 %v3311, %v2262
        %v3313 = vadd.f32 %v3312, %v2263
        %v3314 = vadd.f32 %v3313, %v2264
        %v3315 = vadd.f32 %v3314, %v2265
        %v3316 = vadd.f32 %v3315, %v2266
        %v3317 = vadd.f32 %v3316, %v2267
        %v3318 = vadd.f32 %v3317, %v2268
        %v3319 = vadd.f32 %v3318, %v2269
        %v3320 = vadd.f32 %v3319, %v2270
        %v3321 = vadd.f32 %v3320, %v2271
        %v3322 = vadd.f32 %v3321, %v2272
        %v3323 = vadd.f32 %v3322, %v2273
        %v3324 = vadd.f32 %v3323, %v2274
        %3325 = vadd.xlane.f32.xlu0 %v3324
        %v3326 = vpop.xlane.xlu0 %3325
        %v3327 = vadd.f32 %v2275, %v2276
        %v3328 = vadd.f32 %v3327, %v2277
        %v3329 = vadd.f32 %v3328, %v2278
        %v3330 = vadd.f32 %v3329, %v2279
        %v3331 = vadd.f32 %v3330, %v2280
        %v3332 = vadd.f32 %v3331, %v2281
        %v3333 = vadd.f32 %v3332, %v2282
        %v3334 = vadd.f32 %v3333, %v2283
        %v3335 = vadd.f32 %v3334, %v2284
        %v3336 = vadd.f32 %v3335, %v2285
        %v3337 = vadd.f32 %v3336, %v2286
        %v3338 = vadd.f32 %v3337, %v2287
        %v3339 = vadd.f32 %v3338, %v2288
        %v3340 = vadd.f32 %v3339, %v2289
        %v3341 = vadd.f32 %v3340, %v2290
        %3342 = vadd.xlane.f32.xlu0 %v3341
        %v3343 = vpop.xlane.xlu0 %3342
        %v3344 = vadd.f32 %v2291, %v2292
        %v3345 = vadd.f32 %v3344, %v2293
        %v3346 = vadd.f32 %v3345, %v2294
        %v3347 = vadd.f32 %v3346, %v2295
        %v3348 = vadd.f32 %v3347, %v2296
        %v3349 = vadd.f32 %v3348, %v2297
        %v3350 = vadd.f32 %v3349, %v2298
        %v3351 = vadd.f32 %v3350, %v2299
        %v3352 = vadd.f32 %v3351, %v2300
        %v3353 = vadd.f32 %v3352, %v2301
        %v3354 = vadd.f32 %v3353, %v2302
        %v3355 = vadd.f32 %v3354, %v2303
        %v3356 = vadd.f32 %v3355, %v2304
        %v3357 = vadd.f32 %v3356, %v2305
        %v3358 = vadd.f32 %v3357, %v2306
        %3359 = vadd.xlane.f32.xlu0 %v3358
        %v3360 = vpop.xlane.xlu0 %3359
        %v3361 = vadd.f32 %v2307, %v2308
        %v3362 = vadd.f32 %v3361, %v2309
        %v3363 = vadd.f32 %v3362, %v2310
        %v3364 = vadd.f32 %v3363, %v2311
        %v3365 = vadd.f32 %v3364, %v2312
        %v3366 = vadd.f32 %v3365, %v2313
        %v3367 = vadd.f32 %v3366, %v2314
        %v3368 = vadd.f32 %v3367, %v2315
        %v3369 = vadd.f32 %v3368, %v2316
        %v3370 = vadd.f32 %v3369, %v2317
        %v3371 = vadd.f32 %v3370, %v2318
        %v3372 = vadd.f32 %v3371, %v2319
        %v3373 = vadd.f32 %v3372, %v2320
        %v3374 = vadd.f32 %v3373, %v2321
        %v3375 = vadd.f32 %v3374, %v2322
        %3376 = vadd.xlane.f32.xlu0 %v3375
        %v3377 = vpop.xlane.xlu0 %3376
        %v3378 = vadd.f32 %v2323, %v2324
        %v3379 = vadd.f32 %v3378, %v2325
        %v3380 = vadd.f32 %v3379, %v2326
        %v3381 = vadd.f32 %v3380, %v2327
        %v3382 = vadd.f32 %v3381, %v2328
        %v3383 = vadd.f32 %v3382, %v2329
        %v3384 = vadd.f32 %v3383, %v2330
        %v3385 = vadd.f32 %v3384, %v2331
        %v3386 = vadd.f32 %v3385, %v2332
        %v3387 = vadd.f32 %v3386, %v2333
        %v3388 = vadd.f32 %v3387, %v2334
        %v3389 = vadd.f32 %v3388, %v2335
        %v3390 = vadd.f32 %v3389, %v2336
        %v3391 = vadd.f32 %v3390, %v2337
        %v3392 = vadd.f32 %v3391, %v2338
        %3393 = vadd.xlane.f32.xlu0 %v3392
        %v3394 = vpop.xlane.xlu0 %3393
        %v3395 = vadd.f32 %v2339, %v2340
        %v3396 = vadd.f32 %v3395, %v2341
        %v3397 = vadd.f32 %v3396, %v2342
        %v3398 = vadd.f32 %v3397, %v2343
        %v3399 = vadd.f32 %v3398, %v2344
        %v3400 = vadd.f32 %v3399, %v2345
        %v3401 = vadd.f32 %v3400, %v2346
        %v3402 = vadd.f32 %v3401, %v2347
        %v3403 = vadd.f32 %v3402, %v2348
        %v3404 = vadd.f32 %v3403, %v2349
        %v3405 = vadd.f32 %v3404, %v2350
        %v3406 = vadd.f32 %v3405, %v2351
        %v3407 = vadd.f32 %v3406, %v2352
        %v3408 = vadd.f32 %v3407, %v2353
        %v3409 = vadd.f32 %v3408, %v2354
        %3410 = vadd.xlane.f32.xlu0 %v3409
        %v3411 = vpop.xlane.xlu0 %3410
        %v3412 = vadd.f32 %v2355, %v2356
        %v3413 = vadd.f32 %v3412, %v2357
        %v3414 = vadd.f32 %v3413, %v2358
        %v3415 = vadd.f32 %v3414, %v2359
        %v3416 = vadd.f32 %v3415, %v2360
        %v3417 = vadd.f32 %v3416, %v2361
        %v3418 = vadd.f32 %v3417, %v2362
        %v3419 = vadd.f32 %v3418, %v2363
        %v3420 = vadd.f32 %v3419, %v2364
        %v3421 = vadd.f32 %v3420, %v2365
        %v3422 = vadd.f32 %v3421, %v2366
        %v3423 = vadd.f32 %v3422, %v2367
        %v3424 = vadd.f32 %v3423, %v2368
        %v3425 = vadd.f32 %v3424, %v2369
        %v3426 = vadd.f32 %v3425, %v2370
        %3427 = vadd.xlane.f32.xlu0 %v3426
        %v3428 = vpop.xlane.xlu0 %3427
        %v3429 = vadd.f32 %v2371, %v2372
        %v3430 = vadd.f32 %v3429, %v2373
        %v3431 = vadd.f32 %v3430, %v2374
        %v3432 = vadd.f32 %v3431, %v2375
        %v3433 = vadd.f32 %v3432, %v2376
        %v3434 = vadd.f32 %v3433, %v2377
        %v3435 = vadd.f32 %v3434, %v2378
        %v3436 = vadd.f32 %v3435, %v2379
        %v3437 = vadd.f32 %v3436, %v2380
        %v3438 = vadd.f32 %v3437, %v2381
        %v3439 = vadd.f32 %v3438, %v2382
        %v3440 = vadd.f32 %v3439, %v2383
        %v3441 = vadd.f32 %v3440, %v2384
        %v3442 = vadd.f32 %v3441, %v2385
        %v3443 = vadd.f32 %v3442, %v2386
        %3444 = vadd.xlane.f32.xlu0 %v3443
        %v3445 = vpop.xlane.xlu0 %3444
        %v3446 = vadd.f32 %v2387, %v2388
        %v3447 = vadd.f32 %v3446, %v2389
        %v3448 = vadd.f32 %v3447, %v2390
        %v3449 = vadd.f32 %v3448, %v2391
        %v3450 = vadd.f32 %v3449, %v2392
        %v3451 = vadd.f32 %v3450, %v2393
        %v3452 = vadd.f32 %v3451, %v2394
        %v3453 = vadd.f32 %v3452, %v2395
        %v3454 = vadd.f32 %v3453, %v2396
        %v3455 = vadd.f32 %v3454, %v2397
        %v3456 = vadd.f32 %v3455, %v2398
        %v3457 = vadd.f32 %v3456, %v2399
        %v3458 = vadd.f32 %v3457, %v2400
        %v3459 = vadd.f32 %v3458, %v2401
        %v3460 = vadd.f32 %v3459, %v2402
        %3461 = vadd.xlane.f32.xlu0 %v3460
        %v3462 = vpop.xlane.xlu0 %3461
        %v3463 = vadd.f32 %v2403, %v2404
        %v3464 = vadd.f32 %v3463, %v2405
        %v3465 = vadd.f32 %v3464, %v2406
        %v3466 = vadd.f32 %v3465, %v2407
        %v3467 = vadd.f32 %v3466, %v2408
        %v3468 = vadd.f32 %v3467, %v2409
        %v3469 = vadd.f32 %v3468, %v2410
        %v3470 = vadd.f32 %v3469, %v2411
        %v3471 = vadd.f32 %v3470, %v2412
        %v3472 = vadd.f32 %v3471, %v2413
        %v3473 = vadd.f32 %v3472, %v2414
        %v3474 = vadd.f32 %v3473, %v2415
        %v3475 = vadd.f32 %v3474, %v2416
        %v3476 = vadd.f32 %v3475, %v2417
        %v3477 = vadd.f32 %v3476, %v2418
        %3478 = vadd.xlane.f32.xlu0 %v3477
        %v3479 = vpop.xlane.xlu0 %3478
        %v3480 = vadd.f32 %v2419, %v2420
        %v3481 = vadd.f32 %v3480, %v2421
        %v3482 = vadd.f32 %v3481, %v2422
        %v3483 = vadd.f32 %v3482, %v2423
        %v3484 = vadd.f32 %v3483, %v2424
        %v3485 = vadd.f32 %v3484, %v2425
        %v3486 = vadd.f32 %v3485, %v2426
        %v3487 = vadd.f32 %v3486, %v2427
        %v3488 = vadd.f32 %v3487, %v2428
        %v3489 = vadd.f32 %v3488, %v2429
        %v3490 = vadd.f32 %v3489, %v2430
        %v3491 = vadd.f32 %v3490, %v2431
        %v3492 = vadd.f32 %v3491, %v2432
        %v3493 = vadd.f32 %v3492, %v2433
        %v3494 = vadd.f32 %v3493, %v2434
        %3495 = vadd.xlane.f32.xlu0 %v3494
        %v3496 = vpop.xlane.xlu0 %3495
        %v3497 = vadd.f32 %v2435, %v2436
        %v3498 = vadd.f32 %v3497, %v2437
        %v3499 = vadd.f32 %v3498, %v2438
        %v3500 = vadd.f32 %v3499, %v2439
        %v3501 = vadd.f32 %v3500, %v2440
        %v3502 = vadd.f32 %v3501, %v2441
        %v3503 = vadd.f32 %v3502, %v2442
        %v3504 = vadd.f32 %v3503, %v2443
        %v3505 = vadd.f32 %v3504, %v2444
        %v3506 = vadd.f32 %v3505, %v2445
        %v3507 = vadd.f32 %v3506, %v2446
        %v3508 = vadd.f32 %v3507, %v2447
        %v3509 = vadd.f32 %v3508, %v2448
        %v3510 = vadd.f32 %v3509, %v2449
        %v3511 = vadd.f32 %v3510, %v2450
        %3512 = vadd.xlane.f32.xlu0 %v3511
        %v3513 = vpop.xlane.xlu0 %3512
        %v3514 = vadd.f32 %v2451, %v2452
        %v3515 = vadd.f32 %v3514, %v2453
        %v3516 = vadd.f32 %v3515, %v2454
        %v3517 = vadd.f32 %v3516, %v2455
        %v3518 = vadd.f32 %v3517, %v2456
        %v3519 = vadd.f32 %v3518, %v2457
        %v3520 = vadd.f32 %v3519, %v2458
        %v3521 = vadd.f32 %v3520, %v2459
        %v3522 = vadd.f32 %v3521, %v2460
        %v3523 = vadd.f32 %v3522, %v2461
        %v3524 = vadd.f32 %v3523, %v2462
        %v3525 = vadd.f32 %v3524, %v2463
        %v3526 = vadd.f32 %v3525, %v2464
        %v3527 = vadd.f32 %v3526, %v2465
        %v3528 = vadd.f32 %v3527, %v2466
        %3529 = vadd.xlane.f32.xlu0 %v3528
        %v3530 = vpop.xlane.xlu0 %3529
        %v3531 = vadd.f32 %v2467, %v2468
        %v3532 = vadd.f32 %v3531, %v2469
        %v3533 = vadd.f32 %v3532, %v2470
        %v3534 = vadd.f32 %v3533, %v2471
        %v3535 = vadd.f32 %v3534, %v2472
        %v3536 = vadd.f32 %v3535, %v2473
        %v3537 = vadd.f32 %v3536, %v2474
        %v3538 = vadd.f32 %v3537, %v2475
        %v3539 = vadd.f32 %v3538, %v2476
        %v3540 = vadd.f32 %v3539, %v2477
        %v3541 = vadd.f32 %v3540, %v2478
        %v3542 = vadd.f32 %v3541, %v2479
        %v3543 = vadd.f32 %v3542, %v2480
        %v3544 = vadd.f32 %v3543, %v2481
        %v3545 = vadd.f32 %v3544, %v2482
        %3546 = vadd.xlane.f32.xlu0 %v3545
        %v3547 = vpop.xlane.xlu0 %3546
        %v3548 = vadd.f32 %v2483, %v2484
        %v3549 = vadd.f32 %v3548, %v2485
        %v3550 = vadd.f32 %v3549, %v2486
        %v3551 = vadd.f32 %v3550, %v2487
        %v3552 = vadd.f32 %v3551, %v2488
        %v3553 = vadd.f32 %v3552, %v2489
        %v3554 = vadd.f32 %v3553, %v2490
        %v3555 = vadd.f32 %v3554, %v2491
        %v3556 = vadd.f32 %v3555, %v2492
        %v3557 = vadd.f32 %v3556, %v2493
        %v3558 = vadd.f32 %v3557, %v2494
        %v3559 = vadd.f32 %v3558, %v2495
        %v3560 = vadd.f32 %v3559, %v2496
        %v3561 = vadd.f32 %v3560, %v2497
        %v3562 = vadd.f32 %v3561, %v2498
        %3563 = vadd.xlane.f32.xlu0 %v3562
        %v3564 = vpop.xlane.xlu0 %3563
        %v3565 = vadd.f32 %v2499, %v2500
        %v3566 = vadd.f32 %v3565, %v2501
        %v3567 = vadd.f32 %v3566, %v2502
        %v3568 = vadd.f32 %v3567, %v2503
        %v3569 = vadd.f32 %v3568, %v2504
        %v3570 = vadd.f32 %v3569, %v2505
        %v3571 = vadd.f32 %v3570, %v2506
        %v3572 = vadd.f32 %v3571, %v2507
        %v3573 = vadd.f32 %v3572, %v2508
        %v3574 = vadd.f32 %v3573, %v2509
        %v3575 = vadd.f32 %v3574, %v2510
        %v3576 = vadd.f32 %v3575, %v2511
        %v3577 = vadd.f32 %v3576, %v2512
        %v3578 = vadd.f32 %v3577, %v2513
        %v3579 = vadd.f32 %v3578, %v2514
        %3580 = vadd.xlane.f32.xlu0 %v3579
        %v3581 = vpop.xlane.xlu0 %3580
        %v3582 = vadd.f32 %v2515, %v2516
        %v3583 = vadd.f32 %v3582, %v2517
        %v3584 = vadd.f32 %v3583, %v2518
        %v3585 = vadd.f32 %v3584, %v2519
        %v3586 = vadd.f32 %v3585, %v2520
        %v3587 = vadd.f32 %v3586, %v2521
        %v3588 = vadd.f32 %v3587, %v2522
        %v3589 = vadd.f32 %v3588, %v2523
        %v3590 = vadd.f32 %v3589, %v2524
        %v3591 = vadd.f32 %v3590, %v2525
        %v3592 = vadd.f32 %v3591, %v2526
        %v3593 = vadd.f32 %v3592, %v2527
        %v3594 = vadd.f32 %v3593, %v2528
        %v3595 = vadd.f32 %v3594, %v2529
        %v3596 = vadd.f32 %v3595, %v2530
        %3597 = vadd.xlane.f32.xlu0 %v3596
        %v3598 = vpop.xlane.xlu0 %3597
        %v3599 = vadd.f32 %v2531, %v2532
        %v3600 = vadd.f32 %v3599, %v2533
        %v3601 = vadd.f32 %v3600, %v2534
        %v3602 = vadd.f32 %v3601, %v2535
        %v3603 = vadd.f32 %v3602, %v2536
        %v3604 = vadd.f32 %v3603, %v2537
        %v3605 = vadd.f32 %v3604, %v2538
        %v3606 = vadd.f32 %v3605, %v2539
        %v3607 = vadd.f32 %v3606, %v2540
        %v3608 = vadd.f32 %v3607, %v2541
        %v3609 = vadd.f32 %v3608, %v2542
        %v3610 = vadd.f32 %v3609, %v2543
        %v3611 = vadd.f32 %v3610, %v2544
        %v3612 = vadd.f32 %v3611, %v2545
        %v3613 = vadd.f32 %v3612, %v2546
        %3614 = vadd.xlane.f32.xlu0 %v3613
        %v3615 = vpop.xlane.xlu0 %3614
        %v3616 = vadd.f32 %v2547, %v2548
        %v3617 = vadd.f32 %v3616, %v2549
        %v3618 = vadd.f32 %v3617, %v2550
        %v3619 = vadd.f32 %v3618, %v2551
        %v3620 = vadd.f32 %v3619, %v2552
        %v3621 = vadd.f32 %v3620, %v2553
        %v3622 = vadd.f32 %v3621, %v2554
        %v3623 = vadd.f32 %v3622, %v2555
        %v3624 = vadd.f32 %v3623, %v2556
        %v3625 = vadd.f32 %v3624, %v2557
        %v3626 = vadd.f32 %v3625, %v2558
        %v3627 = vadd.f32 %v3626, %v2559
        %v3628 = vadd.f32 %v3627, %v2560
        %v3629 = vadd.f32 %v3628, %v2561
        %v3630 = vadd.f32 %v3629, %v2562
        %3631 = vadd.xlane.f32.xlu0 %v3630
        %v3632 = vpop.xlane.xlu0 %3631
        %v3633 = vadd.f32 %v2563, %v2564
        %v3634 = vadd.f32 %v3633, %v2565
        %v3635 = vadd.f32 %v3634, %v2566
        %v3636 = vadd.f32 %v3635, %v2567
        %v3637 = vadd.f32 %v3636, %v2568
        %v3638 = vadd.f32 %v3637, %v2569
        %v3639 = vadd.f32 %v3638, %v2570
        %v3640 = vadd.f32 %v3639, %v2571
        %v3641 = vadd.f32 %v3640, %v2572
        %v3642 = vadd.f32 %v3641, %v2573
        %v3643 = vadd.f32 %v3642, %v2574
        %v3644 = vadd.f32 %v3643, %v2575
        %v3645 = vadd.f32 %v3644, %v2576
        %v3646 = vadd.f32 %v3645, %v2577
        %v3647 = vadd.f32 %v3646, %v2578
        %3648 = vadd.xlane.f32.xlu0 %v3647
        %v3649 = vpop.xlane.xlu0 %3648
        %v3650 = vadd.f32 %v2579, %v2580
        %v3651 = vadd.f32 %v3650, %v2581
        %v3652 = vadd.f32 %v3651, %v2582
        %v3653 = vadd.f32 %v3652, %v2583
        %v3654 = vadd.f32 %v3653, %v2584
        %v3655 = vadd.f32 %v3654, %v2585
        %v3656 = vadd.f32 %v3655, %v2586
        %v3657 = vadd.f32 %v3656, %v2587
        %v3658 = vadd.f32 %v3657, %v2588
        %v3659 = vadd.f32 %v3658, %v2589
        %v3660 = vadd.f32 %v3659, %v2590
        %v3661 = vadd.f32 %v3660, %v2591
        %v3662 = vadd.f32 %v3661, %v2592
        %v3663 = vadd.f32 %v3662, %v2593
        %v3664 = vadd.f32 %v3663, %v2594
        %3665 = vadd.xlane.f32.xlu0 %v3664
        %v3666 = vpop.xlane.xlu0 %3665
        %v3667 = vadd.f32 %v2595, %v2596
        %v3668 = vadd.f32 %v3667, %v2597
        %v3669 = vadd.f32 %v3668, %v2598
        %v3670 = vadd.f32 %v3669, %v2599
        %v3671 = vadd.f32 %v3670, %v2600
        %v3672 = vadd.f32 %v3671, %v2601
        %v3673 = vadd.f32 %v3672, %v2602
        %v3674 = vadd.f32 %v3673, %v2603
        %v3675 = vadd.f32 %v3674, %v2604
        %v3676 = vadd.f32 %v3675, %v2605
        %v3677 = vadd.f32 %v3676, %v2606
        %v3678 = vadd.f32 %v3677, %v2607
        %v3679 = vadd.f32 %v3678, %v2608
        %v3680 = vadd.f32 %v3679, %v2609
        %v3681 = vadd.f32 %v3680, %v2610
        %3682 = vadd.xlane.f32.xlu0 %v3681
        %v3683 = vpop.xlane.xlu0 %3682
        %v3684 = vadd.f32 %v2611, %v2612
        %v3685 = vadd.f32 %v3684, %v2613
        %v3686 = vadd.f32 %v3685, %v2614
        %v3687 = vadd.f32 %v3686, %v2615
        %v3688 = vadd.f32 %v3687, %v2616
        %v3689 = vadd.f32 %v3688, %v2617
        %v3690 = vadd.f32 %v3689, %v2618
        %v3691 = vadd.f32 %v3690, %v2619
        %v3692 = vadd.f32 %v3691, %v2620
        %v3693 = vadd.f32 %v3692, %v2621
        %v3694 = vadd.f32 %v3693, %v2622
        %v3695 = vadd.f32 %v3694, %v2623
        %v3696 = vadd.f32 %v3695, %v2624
        %v3697 = vadd.f32 %v3696, %v2625
        %v3698 = vadd.f32 %v3697, %v2626
        %3699 = vadd.xlane.f32.xlu0 %v3698
        %v3700 = vpop.xlane.xlu0 %3699
        %v3701 = vadd.f32 %v2627, %v2628
        %v3702 = vadd.f32 %v3701, %v2629
        %v3703 = vadd.f32 %v3702, %v2630
        %v3704 = vadd.f32 %v3703, %v2631
        %v3705 = vadd.f32 %v3704, %v2632
        %v3706 = vadd.f32 %v3705, %v2633
        %v3707 = vadd.f32 %v3706, %v2634
        %v3708 = vadd.f32 %v3707, %v2635
        %v3709 = vadd.f32 %v3708, %v2636
        %v3710 = vadd.f32 %v3709, %v2637
        %v3711 = vadd.f32 %v3710, %v2638
        %v3712 = vadd.f32 %v3711, %v2639
        %v3713 = vadd.f32 %v3712, %v2640
        %v3714 = vadd.f32 %v3713, %v2641
        %v3715 = vadd.f32 %v3714, %v2642
        %3716 = vadd.xlane.f32.xlu0 %v3715
        %v3717 = vpop.xlane.xlu0 %3716
        %v3718 = vadd.f32 %v2643, %v2644
        %v3719 = vadd.f32 %v3718, %v2645
        %v3720 = vadd.f32 %v3719, %v2646
        %v3721 = vadd.f32 %v3720, %v2647
        %v3722 = vadd.f32 %v3721, %v2648
        %v3723 = vadd.f32 %v3722, %v2649
        %v3724 = vadd.f32 %v3723, %v2650
        %v3725 = vadd.f32 %v3724, %v2651
        %v3726 = vadd.f32 %v3725, %v2652
        %v3727 = vadd.f32 %v3726, %v2653
        %v3728 = vadd.f32 %v3727, %v2654
        %v3729 = vadd.f32 %v3728, %v2655
        %v3730 = vadd.f32 %v3729, %v2656
        %v3731 = vadd.f32 %v3730, %v2657
        %v3732 = vadd.f32 %v3731, %v2658
        %3733 = vadd.xlane.f32.xlu0 %v3732
        %v3734 = vpop.xlane.xlu0 %3733
        %v3735 = vadd.f32 %v2659, %v2660
        %v3736 = vadd.f32 %v3735, %v2661
        %v3737 = vadd.f32 %v3736, %v2662
        %v3738 = vadd.f32 %v3737, %v2663
        %v3739 = vadd.f32 %v3738, %v2664
        %v3740 = vadd.f32 %v3739, %v2665
        %v3741 = vadd.f32 %v3740, %v2666
        %v3742 = vadd.f32 %v3741, %v2667
        %v3743 = vadd.f32 %v3742, %v2668
        %v3744 = vadd.f32 %v3743, %v2669
        %v3745 = vadd.f32 %v3744, %v2670
        %v3746 = vadd.f32 %v3745, %v2671
        %v3747 = vadd.f32 %v3746, %v2672
        %v3748 = vadd.f32 %v3747, %v2673
        %v3749 = vadd.f32 %v3748, %v2674
        %3750 = vadd.xlane.f32.xlu0 %v3749
        %v3751 = vpop.xlane.xlu0 %3750
        %v3752 = vadd.f32 %v2675, %v2676
        %v3753 = vadd.f32 %v3752, %v2677
        %v3754 = vadd.f32 %v3753, %v2678
        %v3755 = vadd.f32 %v3754, %v2679
        %v3756 = vadd.f32 %v3755, %v2680
        %v3757 = vadd.f32 %v3756, %v2681
        %v3758 = vadd.f32 %v3757, %v2682
        %v3759 = vadd.f32 %v3758, %v2683
        %v3760 = vadd.f32 %v3759, %v2684
        %v3761 = vadd.f32 %v3760, %v2685
        %v3762 = vadd.f32 %v3761, %v2686
        %v3763 = vadd.f32 %v3762, %v2687
        %v3764 = vadd.f32 %v3763, %v2688
        %v3765 = vadd.f32 %v3764, %v2689
        %v3766 = vadd.f32 %v3765, %v2690
        %3767 = vadd.xlane.f32.xlu0 %v3766
        %v3768 = vpop.xlane.xlu0 %3767
        %v3769 = vadd.f32 %v2691, %v2692
        %v3770 = vadd.f32 %v3769, %v2693
        %v3771 = vadd.f32 %v3770, %v2694
        %v3772 = vadd.f32 %v3771, %v2695
        %v3773 = vadd.f32 %v3772, %v2696
        %v3774 = vadd.f32 %v3773, %v2697
        %v3775 = vadd.f32 %v3774, %v2698
        %v3776 = vadd.f32 %v3775, %v2699
        %v3777 = vadd.f32 %v3776, %v2700
        %v3778 = vadd.f32 %v3777, %v2701
        %v3779 = vadd.f32 %v3778, %v2702
        %v3780 = vadd.f32 %v3779, %v2703
        %v3781 = vadd.f32 %v3780, %v2704
        %v3782 = vadd.f32 %v3781, %v2705
        %v3783 = vadd.f32 %v3782, %v2706
        %3784 = vadd.xlane.f32.xlu0 %v3783
        %v3785 = vpop.xlane.xlu0 %3784
        %v3786 = vadd.f32 %v2707, %v2708
        %v3787 = vadd.f32 %v3786, %v2709
        %v3788 = vadd.f32 %v3787, %v2710
        %v3789 = vadd.f32 %v3788, %v2711
        %v3790 = vadd.f32 %v3789, %v2712
        %v3791 = vadd.f32 %v3790, %v2713
        %v3792 = vadd.f32 %v3791, %v2714
        %v3793 = vadd.f32 %v3792, %v2715
        %v3794 = vadd.f32 %v3793, %v2716
        %v3795 = vadd.f32 %v3794, %v2717
        %v3796 = vadd.f32 %v3795, %v2718
        %v3797 = vadd.f32 %v3796, %v2719
        %v3798 = vadd.f32 %v3797, %v2720
        %v3799 = vadd.f32 %v3798, %v2721
        %v3800 = vadd.f32 %v3799, %v2722
        %3801 = vadd.xlane.f32.xlu0 %v3800
        %v3802 = vpop.xlane.xlu0 %3801
        %v3803 = vadd.f32 %v2723, %v2724
        %v3804 = vadd.f32 %v3803, %v2725
        %v3805 = vadd.f32 %v3804, %v2726
        %v3806 = vadd.f32 %v3805, %v2727
        %v3807 = vadd.f32 %v3806, %v2728
        %v3808 = vadd.f32 %v3807, %v2729
        %v3809 = vadd.f32 %v3808, %v2730
        %v3810 = vadd.f32 %v3809, %v2731
        %v3811 = vadd.f32 %v3810, %v2732
        %v3812 = vadd.f32 %v3811, %v2733
        %v3813 = vadd.f32 %v3812, %v2734
        %v3814 = vadd.f32 %v3813, %v2735
        %v3815 = vadd.f32 %v3814, %v2736
        %v3816 = vadd.f32 %v3815, %v2737
        %v3817 = vadd.f32 %v3816, %v2738
        %3818 = vadd.xlane.f32.xlu0 %v3817
        %v3819 = vpop.xlane.xlu0 %3818
        %v3820 = vadd.f32 %v2739, %v2740
        %v3821 = vadd.f32 %v3820, %v2741
        %v3822 = vadd.f32 %v3821, %v2742
        %v3823 = vadd.f32 %v3822, %v2743
        %v3824 = vadd.f32 %v3823, %v2744
        %v3825 = vadd.f32 %v3824, %v2745
        %v3826 = vadd.f32 %v3825, %v2746
        %v3827 = vadd.f32 %v3826, %v2747
        %v3828 = vadd.f32 %v3827, %v2748
        %v3829 = vadd.f32 %v3828, %v2749
        %v3830 = vadd.f32 %v3829, %v2750
        %v3831 = vadd.f32 %v3830, %v2751
        %v3832 = vadd.f32 %v3831, %v2752
        %v3833 = vadd.f32 %v3832, %v2753
        %v3834 = vadd.f32 %v3833, %v2754
        %3835 = vadd.xlane.f32.xlu0 %v3834
        %v3836 = vpop.xlane.xlu0 %3835
        %v3837 = vadd.f32 %v2755, %v2756
        %v3838 = vadd.f32 %v3837, %v2757
        %v3839 = vadd.f32 %v3838, %v2758
        %v3840 = vadd.f32 %v3839, %v2759
        %v3841 = vadd.f32 %v3840, %v2760
        %v3842 = vadd.f32 %v3841, %v2761
        %v3843 = vadd.f32 %v3842, %v2762
        %v3844 = vadd.f32 %v3843, %v2763
        %v3845 = vadd.f32 %v3844, %v2764
        %v3846 = vadd.f32 %v3845, %v2765
        %v3847 = vadd.f32 %v3846, %v2766
        %v3848 = vadd.f32 %v3847, %v2767
        %v3849 = vadd.f32 %v3848, %v2768
        %v3850 = vadd.f32 %v3849, %v2769
        %v3851 = vadd.f32 %v3850, %v2770
        %3852 = vadd.xlane.f32.xlu0 %v3851
        %v3853 = vpop.xlane.xlu0 %3852
        %v3854 = vadd.f32 %v2771, %v2772
        %v3855 = vadd.f32 %v3854, %v2773
        %v3856 = vadd.f32 %v3855, %v2774
        %v3857 = vadd.f32 %v3856, %v2775
        %v3858 = vadd.f32 %v3857, %v2776
        %v3859 = vadd.f32 %v3858, %v2777
        %v3860 = vadd.f32 %v3859, %v2778
        %v3861 = vadd.f32 %v3860, %v2779
        %v3862 = vadd.f32 %v3861, %v2780
        %v3863 = vadd.f32 %v3862, %v2781
        %v3864 = vadd.f32 %v3863, %v2782
        %v3865 = vadd.f32 %v3864, %v2783
        %v3866 = vadd.f32 %v3865, %v2784
        %v3867 = vadd.f32 %v3866, %v2785
        %v3868 = vadd.f32 %v3867, %v2786
        %3869 = vadd.xlane.f32.xlu0 %v3868
        %v3870 = vpop.xlane.xlu0 %3869
        %v3871 = vadd.f32 %v2787, %v2788
        %v3872 = vadd.f32 %v3871, %v2789
        %v3873 = vadd.f32 %v3872, %v2790
        %v3874 = vadd.f32 %v3873, %v2791
        %v3875 = vadd.f32 %v3874, %v2792
        %v3876 = vadd.f32 %v3875, %v2793
        %v3877 = vadd.f32 %v3876, %v2794
        %v3878 = vadd.f32 %v3877, %v2795
        %v3879 = vadd.f32 %v3878, %v2796
        %v3880 = vadd.f32 %v3879, %v2797
        %v3881 = vadd.f32 %v3880, %v2798
        %v3882 = vadd.f32 %v3881, %v2799
        %v3883 = vadd.f32 %v3882, %v2800
        %v3884 = vadd.f32 %v3883, %v2801
        %v3885 = vadd.f32 %v3884, %v2802
        %3886 = vadd.xlane.f32.xlu0 %v3885
        %v3887 = vpop.xlane.xlu0 %3886
        %v3888 = vadd.f32 %v2803, %v2804
        %v3889 = vadd.f32 %v3888, %v2805
        %v3890 = vadd.f32 %v3889, %v2806
        %v3891 = vadd.f32 %v3890, %v2807
        %v3892 = vadd.f32 %v3891, %v2808
        %v3893 = vadd.f32 %v3892, %v2809
        %v3894 = vadd.f32 %v3893, %v2810
        %v3895 = vadd.f32 %v3894, %v2811
        %v3896 = vadd.f32 %v3895, %v2812
        %v3897 = vadd.f32 %v3896, %v2813
        %v3898 = vadd.f32 %v3897, %v2814
        %v3899 = vadd.f32 %v3898, %v2815
        %v3900 = vadd.f32 %v3899, %v2816
        %v3901 = vadd.f32 %v3900, %v2817
        %v3902 = vadd.f32 %v3901, %v2818
        %3903 = vadd.xlane.f32.xlu0 %v3902
        %v3904 = vpop.xlane.xlu0 %3903
        %v3905 = vadd.f32 %v2819, %v2820
        %v3906 = vadd.f32 %v3905, %v2821
        %v3907 = vadd.f32 %v3906, %v2822
        %v3908 = vadd.f32 %v3907, %v2823
        %v3909 = vadd.f32 %v3908, %v2824
        %v3910 = vadd.f32 %v3909, %v2825
        %v3911 = vadd.f32 %v3910, %v2826
        %v3912 = vadd.f32 %v3911, %v2827
        %v3913 = vadd.f32 %v3912, %v2828
        %v3914 = vadd.f32 %v3913, %v2829
        %v3915 = vadd.f32 %v3914, %v2830
        %v3916 = vadd.f32 %v3915, %v2831
        %v3917 = vadd.f32 %v3916, %v2832
        %v3918 = vadd.f32 %v3917, %v2833
        %v3919 = vadd.f32 %v3918, %v2834
        %3920 = vadd.xlane.f32.xlu0 %v3919
        %v3921 = vpop.xlane.xlu0 %3920
        %v3922 = vadd.f32 %v2835, %v2836
        %v3923 = vadd.f32 %v3922, %v2837
        %v3924 = vadd.f32 %v3923, %v2838
        %v3925 = vadd.f32 %v3924, %v2839
        %v3926 = vadd.f32 %v3925, %v2840
        %v3927 = vadd.f32 %v3926, %v2841
        %v3928 = vadd.f32 %v3927, %v2842
        %v3929 = vadd.f32 %v3928, %v2843
        %v3930 = vadd.f32 %v3929, %v2844
        %v3931 = vadd.f32 %v3930, %v2845
        %v3932 = vadd.f32 %v3931, %v2846
        %v3933 = vadd.f32 %v3932, %v2847
        %v3934 = vadd.f32 %v3933, %v2848
        %v3935 = vadd.f32 %v3934, %v2849
        %v3936 = vadd.f32 %v3935, %v2850
        %3937 = vadd.xlane.f32.xlu0 %v3936
        %v3938 = vpop.xlane.xlu0 %3937
        %p3939 = scmp.eq.s32.totalorder %s22, 0
        // Predicated region
        $region77: #{tpu_custom_call.1} parent=71 // pred_check
          %p3940 = pneg %p3939
        $region78: #{tpu_custom_call.1} parent=71 // pred_check_branch
          %3942 = sbr.rel (%p3940) target = $region80
        $region79: #{tpu_custom_call.1} parent=71 // pred_region
          %3943 = vst [vmem:[#allocation2] sm:$0xf] 0.0
        $region80: #{tpu_custom_call.1} parent=71 // pred_fallthru
          _
        %v3944 = vld [vmem:[#allocation2] sm:$0xf]
        %v4009 = vperm.slane %v2867, %v1777
        %v4010 = vadd.s32 %v1777, 4294967288
        %v4011 = vperm.slane %v2884, %v4010
        %vm4012 = vcmask 130112
        %v4013 = vsel %vm4012, %v4011, %v4009
        %v4014 = vadd.s32 %v1777, 4294967280
        %v4015 = vperm.slane %v2901, %v4014
        %vm4016 = vcmask 195712
        %v4017 = vsel %vm4016, %v4015, %v4013
        %v4018 = vadd.s32 %v1777, 4294967272
        %v4019 = vperm.slane %v2918, %v4018
        %vm4020 = vcmask 261312
        %v4021 = vsel %vm4020, %v4019, %v4017
        %v4022 = vadd.s32 %v1777, 4294967264
        %v4023 = vperm.slane %v2935, %v4022
        %vm4024 = vcmask 326912
        %v4025 = vsel %vm4024, %v4023, %v4021
        %v4026 = vadd.s32 %v1777, 4294967256
        %v4027 = vperm.slane %v2952, %v4026
        %vm4028 = vcmask 392512
        %v4029 = vsel %vm4028, %v4027, %v4025
        %v4030 = vadd.s32 %v1777, 4294967248
        %v4031 = vperm.slane %v2969, %v4030
        %vm4032 = vcmask 458112
        %v4033 = vsel %vm4032, %v4031, %v4029
        %v4034 = vadd.s32 %v1777, 4294967240
        %v4035 = vperm.slane %v2986, %v4034
        %vm4036 = vcmask 523712
        %v4037 = vsel %vm4036, %v4035, %v4033
        %v4038 = vadd.s32 %v1777, 4294967232
        %v4039 = vperm.slane %v3003, %v4038
        %vm4040 = vcmask 589312
        %v4041 = vsel %vm4040, %v4039, %v4037
        %v4042 = vadd.s32 %v1777, 4294967224
        %v4043 = vperm.slane %v3020, %v4042
        %vm4044 = vcmask 654912
        %v4045 = vsel %vm4044, %v4043, %v4041
        %v4046 = vadd.s32 %v1777, 4294967216
        %v4047 = vperm.slane %v3037, %v4046
        %vm4048 = vcmask 720512
        %v4049 = vsel %vm4048, %v4047, %v4045
        %v4050 = vadd.s32 %v1777, 4294967208
        %v4051 = vperm.slane %v3054, %v4050
        %vm4052 = vcmask 786112
        %v4053 = vsel %vm4052, %v4051, %v4049
        %v4054 = vadd.s32 %v1777, 4294967200
        %v4055 = vperm.slane %v3071, %v4054
        %vm4056 = vcmask 851712
        %v4057 = vsel %vm4056, %v4055, %v4053
        %v4058 = vadd.s32 %v1777, 4294967192
        %v4059 = vperm.slane %v3088, %v4058
        %vm4060 = vcmask 917312
        %v4061 = vsel %vm4060, %v4059, %v4057
        %v4062 = vadd.s32 %v1777, 4294967184
        %v4063 = vperm.slane %v3105, %v4062
        %vm4064 = vcmask 982912
        %v4065 = vsel %vm4064, %v4063, %v4061
        %v4066 = vadd.s32 %v1777, 4294967176
        %v4067 = vperm.slane %v3122, %v4066
        %vm4068 = vcmask 1048512
        %v4069 = vsel %vm4068, %v4067, %v4065
        %v4070 = vperm.slane %v3139, %v1777
        %v4071 = vperm.slane %v3156, %v4010
        %v4072 = vsel %vm4012, %v4071, %v4070
        %v4073 = vperm.slane %v3173, %v4014
        %v4074 = vsel %vm4016, %v4073, %v4072
        %v4075 = vperm.slane %v3190, %v4018
        %v4076 = vsel %vm4020, %v4075, %v4074
        %v4077 = vperm.slane %v3207, %v4022
        %v4078 = vsel %vm4024, %v4077, %v4076
        %v4079 = vperm.slane %v3224, %v4026
        %v4080 = vsel %vm4028, %v4079, %v4078
        %v4081 = vperm.slane %v3241, %v4030
        %v4082 = vsel %vm4032, %v4081, %v4080
        %v4083 = vperm.slane %v3258, %v4034
        %v4084 = vsel %vm4036, %v4083, %v4082
        %v4085 = vperm.slane %v3275, %v4038
        %v4086 = vsel %vm4040, %v4085, %v4084
        %v4087 = vperm.slane %v3292, %v4042
        %v4088 = vsel %vm4044, %v4087, %v4086
        %v4089 = vperm.slane %v3309, %v4046
        %v4090 = vsel %vm4048, %v4089, %v4088
        %v4091 = vperm.slane %v3326, %v4050
        %v4092 = vsel %vm4052, %v4091, %v4090
        %v4093 = vperm.slane %v3343, %v4054
        %v4094 = vsel %vm4056, %v4093, %v4092
        %v4095 = vperm.slane %v3360, %v4058
        %v4096 = vsel %vm4060, %v4095, %v4094
        %v4097 = vperm.slane %v3377, %v4062
        %v4098 = vsel %vm4064, %v4097, %v4096
        %v4099 = vperm.slane %v3394, %v4066
        %v4100 = vsel %vm4068, %v4099, %v4098
        %v4101 = vperm.slane %v3411, %v1777
        %v4102 = vperm.slane %v3428, %v4010
        %v4103 = vsel %vm4012, %v4102, %v4101
        %v4104 = vperm.slane %v3445, %v4014
        %v4105 = vsel %vm4016, %v4104, %v4103
        %v4106 = vperm.slane %v3462, %v4018
        %v4107 = vsel %vm4020, %v4106, %v4105
        %v4108 = vperm.slane %v3479, %v4022
        %v4109 = vsel %vm4024, %v4108, %v4107
        %v4110 = vperm.slane %v3496, %v4026
        %v4111 = vsel %vm4028, %v4110, %v4109
        %v4112 = vperm.slane %v3513, %v4030
        %v4113 = vsel %vm4032, %v4112, %v4111
        %v4114 = vperm.slane %v3530, %v4034
        %v4115 = vsel %vm4036, %v4114, %v4113
        %v4116 = vperm.slane %v3547, %v4038
        %v4117 = vsel %vm4040, %v4116, %v4115
        %v4118 = vperm.slane %v3564, %v4042
        %v4119 = vsel %vm4044, %v4118, %v4117
        %v4120 = vperm.slane %v3581, %v4046
        %v4121 = vsel %vm4048, %v4120, %v4119
        %v4122 = vperm.slane %v3598, %v4050
        %v4123 = vsel %vm4052, %v4122, %v4121
        %v4124 = vperm.slane %v3615, %v4054
        %v4125 = vsel %vm4056, %v4124, %v4123
        %v4126 = vperm.slane %v3632, %v4058
        %v4127 = vsel %vm4060, %v4126, %v4125
        %v4128 = vperm.slane %v3649, %v4062
        %v4129 = vsel %vm4064, %v4128, %v4127
        %v4130 = vperm.slane %v3666, %v4066
        %v4131 = vsel %vm4068, %v4130, %v4129
        %v4132 = vperm.slane %v3683, %v1777
        %v4133 = vperm.slane %v3700, %v4010
        %v4134 = vsel %vm4012, %v4133, %v4132
        %v4135 = vperm.slane %v3717, %v4014
        %v4136 = vsel %vm4016, %v4135, %v4134
        %v4137 = vperm.slane %v3734, %v4018
        %v4138 = vsel %vm4020, %v4137, %v4136
        %v4139 = vperm.slane %v3751, %v4022
        %v4140 = vsel %vm4024, %v4139, %v4138
        %v4141 = vperm.slane %v3768, %v4026
        %v4142 = vsel %vm4028, %v4141, %v4140
        %v4143 = vperm.slane %v3785, %v4030
        %v4144 = vsel %vm4032, %v4143, %v4142
        %v4145 = vperm.slane %v3802, %v4034
        %v4146 = vsel %vm4036, %v4145, %v4144
        %v4147 = vperm.slane %v3819, %v4038
        %v4148 = vsel %vm4040, %v4147, %v4146
        %v4149 = vperm.slane %v3836, %v4042
        %v4150 = vsel %vm4044, %v4149, %v4148
        %v4151 = vperm.slane %v3853, %v4046
        %v4152 = vsel %vm4048, %v4151, %v4150
        %v4153 = vperm.slane %v3870, %v4050
        %v4154 = vsel %vm4052, %v4153, %v4152
        %v4155 = vperm.slane %v3887, %v4054
        %v4156 = vsel %vm4056, %v4155, %v4154
        %v4157 = vperm.slane %v3904, %v4058
        %v4158 = vsel %vm4060, %v4157, %v4156
        %v4159 = vperm.slane %v3921, %v4062
        %v4160 = vsel %vm4064, %v4159, %v4158
        %v4161 = vperm.slane %v3938, %v4066
        %v4162 = vsel %vm4068, %v4161, %v4160
        %vm4163 = vcmask 1041409
        %v4164 = vsel %vm4163, %v4100, %v4069
        %vm4165 = vcmask 1042434
        %v4166 = vsel %vm4165, %v4131, %v4164
        %vm4167 = vcmask 1043459
        %v4168 = vsel %vm4167, %v4162, %v4166
        %v4170 = vadd.f32 %v3944, %v4168
        %4171 = vst [vmem:[#allocation2] sm:$0xf] %v4170
        %p4172 = scmp.eq.s32.totalorder %s22, 1
        // Predicated region
        $region81: #{tpu_custom_call.1} parent=71 // pred_check
          %p4173 = pneg %p4172
        $region82: #{tpu_custom_call.1} parent=71 // pred_check_branch
          %4175 = sbr.rel (%p4173) target = $region84
        $region83: #{tpu_custom_call.1} parent=71 // pred_region
          %v4176 = vld [vmem:[#allocation2] sm:$0xf]
          %v4177 = vmul.f32 %v4176, 0.00047348486
          %4178 = vst [vmem:[%s744] sm:$0xf] %v4177
        $region84: #{tpu_custom_call.1} parent=71 // pred_fallthru
          _
        %s4179 = sand.u32 %s74, 1
        %s4180 = scalar_lea.sflag [#allocation5], %s4179
        %s4181 = sand.u32 %s74, 1
        %s4182 = smul.addr %s4181, 4
        %s4183 = scalar_lea.vmem [#allocation4], %s4182
        // Predicated region
        $region85: #{tpu_custom_call.1} parent=71 // pred_check
          %p4184 = pneg %p84
        $region86: #{tpu_custom_call.1} parent=71 // pred_check_branch
          %4186 = sbr.rel (%p4184) target = $region88
        $region87: #{tpu_custom_call.1} parent=71 // pred_region
          %4188 = vsyncadd %s4180, 0
          %s4189 = smul.addr %s20, 2
          %s4190 = sadd.s32 %s21, %s4189
          %s4191 = smul.addr %s4190, 4
          %s4192 = scalar_lea.hbm %s1, %s4191
          %s4194 = sshll.u32 %s4183, 4
          %s4195 = int_to_ptr.vmem [resolvable:$true] %s4194
          %s4196 = sshll.u32 %s4192, 4
          %s4197 = int_to_ptr.hbm [resolvable:$true] %s4196
          %4199 = dma.vmem_to_hbm [thread:$0]  %s4195, 64, %s4197, %s4180
        $region88: #{tpu_custom_call.1} parent=71 // pred_fallthru
          _
      $region72: #{tpu_custom_call.1} parent=5 // pred_fallthru
        _
      %p4200 = scmp.le.s32.totalorder 2, %s10
      // Predicated region
      $region89: #{tpu_custom_call.1} parent=5 // pred_check
        %p4201 = pneg %p4200
      $region90: #{tpu_custom_call.1} parent=5 // pred_check_branch
        %4203 = sbr.rel (%p4201) target = $region92
      $region91: #{tpu_custom_call.1} parent=5 // pred_region
        %s4204 = ssub.s32 %s10, 2
        // Predicated region
        $region93: #{tpu_custom_call.1} parent=91 // pred_check
          %p4205 = pneg %p90
        $region94: #{tpu_custom_call.1} parent=91 // pred_check_branch
          %4207 = sbr.rel (%p4205) target = $region96
        $region95: #{tpu_custom_call.1} parent=91 // pred_region
          %s4208 = sand.u32 %s75, 1
          %s4209 = scalar_lea.sflag [#allocation5], %s4208
          %s4210 = sand.u32 %s75, 1
          %s4211 = smul.addr %s4210, 4
          %s4212 = scalar_lea.vmem [#allocation4], %s4211
          %4214 = dma.done %s4209, 64
        $region96: #{tpu_custom_call.1} parent=91 // pred_fallthru
          _
      $region92: #{tpu_custom_call.1} parent=5 // pred_fallthru
        _
    $region6: #{tpu_custom_call.1} parent=1 // loop_footer
      %s14 = sadd.s32 1, %s10
    $region7: #{tpu_custom_call.1} parent=1 // loop_footer_branch
      %9 = sbr.rel target = $region3
    $region8: #{tpu_custom_call.1} parent=1 // loop_exit
      _
    %4215 = vsyncpa [#allocation5], 1
    %s4216 = scalar_lea.sflag [#allocation5], 1
    %4217 = vsyncpa %s4216, 1

</llo_original>
